<compile_context>
chip_gen: v5e
topology: v5e:2x2
jax: 0.10.0
libtpu: 0.0.40
codegen_flags: <defaults>
</compile_context>

<pallas_src>
import jax
import jax.numpy as jnp
from jax.experimental import pallas as pl
from jax.experimental.pallas import tpu as pltpu

CONV_SIZE_1 = 13
CONV_SIZE_2 = 5
N_CLASSES = 10
LANES = 128                      # channel/lane padding target
_VMEM_LIMIT_BYTES = 32 * 1024 * 1024


def _round_up(n, m):
    return (n + m - 1) // m * m


# ----------------------------------------------------------------------------
# Pallas kernels
# ----------------------------------------------------------------------------
def _conv_pool_kernel(x0_ref, x1_ref, x2_ref, x3_ref, w_ref, b_ref, o_ref):
    """Fused conv-as-GEMM + bias + ReLU + 2x2 max-pool.

    x{0..3}: [TP, Kp] bf16 im2col patches for the four pool phases; rows are
             pooled output locations in (b, ph, pw) order.
    w:       [Kp, 128] bf16 (real Cout in the first lanes, rest zero).
    b:       [1, 128]  f32.
    o:       [TP, 128] bf16 pooled activations (lane-dense stores).
    """
    w = w_ref[...]

    def g(x_ref):
        return jnp.dot(x_ref[...], w, preferred_element_type=jnp.float32)

    m = jnp.maximum(jnp.maximum(g(x0_ref), g(x1_ref)),
                    jnp.maximum(g(x2_ref), g(x3_ref)))
    # max(g_i) + b == max(g_i + b); relu(max(.)) == max(relu(.))  (monotone)
    y = jnp.maximum(m + b_ref[...], 0.0)          # f32 epilogue
    o_ref[...] = y.astype(o_ref.dtype)


def _fc_fused_kernel(x_ref, w1_ref, b1_ref, w2_ref, b2_ref, w3_ref, b3_ref,
                     o_ref):
    """fc1+ReLU -> fc2+ReLU -> fc3, chained inside one VMEM-resident kernel."""
    h = jnp.dot(x_ref[...], w1_ref[...], preferred_element_type=jnp.float32)
    h = jnp.maximum(h + b1_ref[...], 0.0)
    h = jnp.dot(h.astype(w2_ref.dtype), w2_ref[...],
                preferred_element_type=jnp.float32)
    h = jnp.maximum(h + b2_ref[...], 0.0)
    h = jnp.dot(h.astype(w3_ref.dtype), w3_ref[...],
                preferred_element_type=jnp.float32)
    o_ref[...] = (h + b3_ref[...]).astype(o_ref.dtype)


# ----------------------------------------------------------------------------
# Wrappers around pallas_call
# ----------------------------------------------------------------------------
def _pick_pool_tile(m_pool, cap=128):
    """Largest multiple of 8 dividing m_pool and <= cap; else the full extent."""
    best = m_pool
    for t in range(8, min(cap, m_pool) + 1, 8):
        if m_pool % t == 0:
            best = t
    return best


def _phase_patches(x_nhwc, k, pad):
    """im2col split into the four 2x2-pool phases (plain-JAX glue, bf16).

    Returns four [B*(OH//2)*(OW//2), k*k*C] matrices, columns in (ky, kx, cin)
    order (matching the weight flatten in _prep_conv), rows in (b, ph, pw).
    """
    B, H, W, C = x_nhwc.shape
    xp = jnp.pad(x_nhwc, ((0, 0), (pad, pad), (pad, pad), (0, 0)))
    OH = H + 2 * pad - k + 1
    OW = W + 2 * pad - k + 1
    assert OH % 2 == 0 and OW % 2 == 0, "maxpool(2,2) needs even conv output"
    cols = [xp[:, ky:ky + OH, kx:kx + OW, :]
            for ky in range(k) for kx in range(k)]
    p = jnp.stack(cols, axis=3).reshape(B, OH, OW, k * k * C)
    phases = [
        p[:, dy::2, dx::2, :].reshape(B * (OH // 2) * (OW // 2), k * k * C)
        for dy in (0, 1) for dx in (0, 1)
    ]
    return phases, OH // 2, OW // 2


def conv_relu_pool(x_nhwc, w_pad, b_pad, *, k, pad):
    """maxpool2x2(relu(conv2d(x, w, b, stride=1, padding=pad))).

    Returns ([B*PH*PW, 128] bf16, PH, PW); rows in (b, ph, pw) order, real
    output channels in the first lanes, padded lanes are exactly zero.
    """
    x_nhwc = x_nhwc.astype(jnp.bfloat16)
    phases, PH, PW = _phase_patches(x_nhwc, k, pad)
    kp = w_pad.shape[0]
    kr = phases[0].shape[1]
    phases = [jnp.pad(ph, ((0, 0), (0, kp - kr))) for ph in phases]
    m_pool = phases[0].shape[0]
    tp = _pick_pool_tile(m_pool)

    phase_spec = pl.BlockSpec((tp, kp), lambda i: (i, 0))
    out = pl.pallas_call(
        _conv_pool_kernel,
        out_shape=jax.ShapeDtypeStruct((m_pool, LANES), jnp.bfloat16),
        grid=(m_pool // tp,),
        in_specs=[phase_spec] * 4 + [
            pl.BlockSpec((kp, LANES), lambda i: (0, 0)),
            pl.BlockSpec((1, LANES), lambda i: (0, 0)),
        ],
        out_specs=pl.BlockSpec((tp, LANES), lambda i: (i, 0)),
        compiler_params=pltpu.CompilerParams(
            dimension_semantics=("parallel",),
            vmem_limit_bytes=_VMEM_LIMIT_BYTES),
    )(*phases, w_pad, b_pad)
    return out, PH, PW


def fc_head(feat, fcp):
    """feat: [B, Kfc] bf16 -> [B, 128] f32 logits (first N_CLASSES lanes real)."""
    B, kfc = feat.shape
    bm = 256 if B % 256 == 0 else (128 if B % 128 == 0 else B)
    return pl.pallas_call(
        _fc_fused_kernel,
        out_shape=jax.ShapeDtypeStruct((B, LANES), jnp.float32),
        grid=(B // bm,),
        in_specs=[
            pl.BlockSpec((bm, kfc), lambda i: (i, 0)),
            pl.BlockSpec((kfc, LANES), lambda i: (0, 0)),
            pl.BlockSpec((1, LANES), lambda i: (0, 0)),
            pl.BlockSpec((LANES, LANES), lambda i: (0, 0)),
            pl.BlockSpec((1, LANES), lambda i: (0, 0)),
            pl.BlockSpec((LANES, LANES), lambda i: (0, 0)),
            pl.BlockSpec((1, LANES), lambda i: (0, 0)),
        ],
        out_specs=pl.BlockSpec((bm, LANES), lambda i: (i, 0)),
        compiler_params=pltpu.CompilerParams(
            dimension_semantics=("parallel",),
            vmem_limit_bytes=_VMEM_LIMIT_BYTES),
    )(feat, fcp["w1"], fcp["b1"], fcp["w2"], fcp["b2"], fcp["w3"], fcp["b3"])


# ----------------------------------------------------------------------------
# Parameter init (PyTorch-default-style uniform(-1/sqrt(fan_in))) and one-time
# preparation (padding, bf16 cast, flatten-order permutation)
# ----------------------------------------------------------------------------
def _uniform(key, shape, fan_in):
    bound = 1.0 / jnp.sqrt(jnp.float32(fan_in))
    return jax.random.uniform(key, shape, jnp.float32, -bound, bound)


def init_params(key):
    ks = jax.random.split(key, 10)
    p = {}
    p["conv1_w"] = _uniform(ks[0], (6, 3, CONV_SIZE_1, CONV_SIZE_1), 3 * CONV_SIZE_1 ** 2)
    p["conv1_b"] = _uniform(ks[1], (6,), 3 * CONV_SIZE_1 ** 2)
    p["conv2_w"] = _uniform(ks[2], (16, 6, CONV_SIZE_2, CONV_SIZE_2), 6 * CONV_SIZE_2 ** 2)
    p["conv2_b"] = _uniform(ks[3], (16,), 6 * CONV_SIZE_2 ** 2)
    fin1 = 16 * (CONV_SIZE_2 + 1) * (CONV_SIZE_2 + 1)
    p["fc1_w"] = _uniform(ks[4], (120, fin1), fin1)
    p["fc1_b"] = _uniform(ks[5], (120,), fin1)
    p["fc2_w"] = _uniform(ks[6], (84, 120), 120)
    p["fc2_b"] = _uniform(ks[7], (84,), 120)
    p["fc3_w"] = _uniform(ks[8], (N_CLASSES, 84), 84)
    p["fc3_b"] = _uniform(ks[9], (N_CLASSES,), 84)
    return p


def _prep_conv(w, b):
    """torch [Cout,Cin,K,K] -> ([Kp,128] bf16 with rows in (ky,kx,cin) order,
    [1,128] f32 bias); Kp = round_up(K*K*Cin, 128), Cout padded to 128 lanes."""
    cout, cin, k, _ = w.shape
    kr = k * k * cin
    kp = _round_up(kr, LANES)
    wf = jnp.transpose(w, (2, 3, 1, 0)).reshape(kr, cout)
    w_pad = jnp.zeros((kp, LANES), jnp.float32).at[:kr, :cout].set(wf)
    b_pad = jnp.zeros((1, LANES), jnp.float32).at[0, :cout].set(b)
    return w_pad.astype(jnp.bfloat16), b_pad


def prepare_params(p):
    pp = {}
    pp["c1_w"], pp["c1_b"] = _prep_conv(p["conv1_w"], p["conv1_b"])
    pp["c2_w"], pp["c2_b"] = _prep_conv(p["conv2_w"], p["conv2_b"])

    # fc1: fold torch's (c, h, w) flatten order into a column permutation of
    # the weights, with the channel axis zero-padded to 128 lanes, so the
    # lane-padded NHWC activations feed fc1 directly (no activation transpose).
    ph = pw = CONV_SIZE_2 + 1            # 6 x 6 after the second pool
    c2 = 16
    w1 = p["fc1_w"].reshape(120, c2, ph, pw).transpose(0, 2, 3, 1)   # [120,h,w,c]
    w1p = jnp.zeros((120, ph, pw, LANES), jnp.float32).at[..., :c2].set(w1)
    w1p = w1p.reshape(120, ph * pw * LANES).T                        # [Kfc, 120]
    kfc = ph * pw * LANES
    pp["fc"] = {
        "w1": jnp.zeros((kfc, LANES), jnp.float32).at[:, :120].set(w1p).astype(jnp.bfloat16),
        "b1": jnp.zeros((1, LANES), jnp.float32).at[0, :120].set(p["fc1_b"]),
        "w2": jnp.zeros((LANES, LANES), jnp.float32).at[:120, :84].set(p["fc2_w"].T).astype(jnp.bfloat16),
        "b2": jnp.zeros((1, LANES), jnp.float32).at[0, :84].set(p["fc2_b"]),
        "w3": jnp.zeros((LANES, LANES), jnp.float32).at[:84, :N_CLASSES].set(p["fc3_w"].T).astype(jnp.bfloat16),
        "b3": jnp.zeros((1, LANES), jnp.float32).at[0, :N_CLASSES].set(p["fc3_b"]),
    }
    return pp


# ----------------------------------------------------------------------------
# Forward pass (matches Net.forward)
# ----------------------------------------------------------------------------
@jax.jit
def net_forward(prepped, x_nchw):
    # x: [B, 3, 32, 32] (NCHW, like PyTorch); 32x32 is required by fc1 (16*6*6).
    B = x_nchw.shape[0]
    x = jnp.transpose(x_nchw, (0, 2, 3, 1))                          # NHWC, once

    h, ph1, pw1 = conv_relu_pool(x, prepped["c1_w"], prepped["c1_b"],
                                 k=CONV_SIZE_1, pad=6)               # [B*16*16,128]
    h = h.reshape(B, ph1, pw1, LANES)[..., :6]                       # real channels

    h, ph2, pw2 = conv_relu_pool(h, prepped["c2_w"], prepped["c2_b"],
                                 k=CONV_SIZE_2, pad=0)               # [B*6*6,128]

    feat = h.reshape(B, ph2 * pw2 * LANES)                           # lane-padded flatten
    logits = fc_head(feat, prepped["fc"])                            # [B,128] f32
    return logits[:, :N_CLASSES]


if __name__ == "__main__":
    key = jax.random.PRNGKey(0)
    pkey, xkey = jax.random.split(key)
    params = init_params(pkey)
    prepped = prepare_params(params)
    x = jax.random.normal(xkey, (2, 3, 32, 32), jnp.float32)

    logits = jax.block_until_ready(net_forward(prepped, x))

    assert logits.shape == (2, N_CLASSES), logits.shape
    assert bool(jnp.all(jnp.isfinite(logits)))
    print("KERNEL_OK")
</pallas_src>

<mosaic_0001>
module attributes {stable_mosaic.version = 11 : i64} {
  func.func @_conv_pool_kernel(%arg0: i32, %arg1: memref<128x512xbf16, #tpu.memory_space<vmem>>, %arg2: memref<128x512xbf16, #tpu.memory_space<vmem>>, %arg3: memref<128x512xbf16, #tpu.memory_space<vmem>>, %arg4: memref<128x512xbf16, #tpu.memory_space<vmem>>, %arg5: memref<512x128xbf16, #tpu.memory_space<vmem>>, %arg6: memref<1x128xf32, #tpu.memory_space<vmem>>, %arg7: memref<128x128xbf16, #tpu.memory_space<vmem>>) attributes {dimension_semantics = [#tpu.dimension_semantics<parallel>], iteration_bounds = array<i64: 4>, scalar_prefetch = 0 : i64, scratch_operands = 0 : i64, tpu.core_type = #tpu.core_type<tc>, window_params = [{transform_indices = @transform_0, window_bounds = array<i64: 128, 512>}, {transform_indices = @transform_1, window_bounds = array<i64: 128, 512>}, {transform_indices = @transform_2, window_bounds = array<i64: 128, 512>}, {transform_indices = @transform_3, window_bounds = array<i64: 128, 512>}, {pipeline_mode = #tpu.pipeline_mode<synchronous>, transform_indices = @transform_4, window_bounds = array<i64: 512, 128>}, {pipeline_mode = #tpu.pipeline_mode<synchronous>, transform_indices = @transform_5, window_bounds = array<i64: 1, 128>}, {transform_indices = @transform_6, window_bounds = array<i64: 128, 128>}]} {
    %c0 = arith.constant 0 : index
    %c0_0 = arith.constant 0 : index
    %0 = vector.load %arg5[%c0, %c0_0] : memref<512x128xbf16, #tpu.memory_space<vmem>>, vector<512x128xbf16>
    %c0_1 = arith.constant 0 : index
    %c0_2 = arith.constant 0 : index
    %1 = vector.load %arg1[%c0_1, %c0_2] : memref<128x512xbf16, #tpu.memory_space<vmem>>, vector<128x512xbf16>
    %cst = arith.constant dense<0.000000e+00> : vector<128x128xf32>
    %2 = tpu.matmul %1, %0, %cst {dimension_numbers = #tpu.dot_dimension_numbers<[1], [0], [0], [1], [0, 0, 1, 1], [], []>} : vector<128x512xbf16>, vector<512x128xbf16>, vector<128x128xf32> -> vector<128x128xf32>
    %c0_3 = arith.constant 0 : index
    %c0_4 = arith.constant 0 : index
    %3 = vector.load %arg2[%c0_3, %c0_4] : memref<128x512xbf16, #tpu.memory_space<vmem>>, vector<128x512xbf16>
    %cst_5 = arith.constant dense<0.000000e+00> : vector<128x128xf32>
    %4 = tpu.matmul %3, %0, %cst_5 {dimension_numbers = #tpu.dot_dimension_numbers<[1], [0], [0], [1], [0, 0, 1, 1], [], []>} : vector<128x512xbf16>, vector<512x128xbf16>, vector<128x128xf32> -> vector<128x128xf32>
    %5 = arith.maximumf %2, %4 : vector<128x128xf32>
    %c0_6 = arith.constant 0 : index
    %c0_7 = arith.constant 0 : index
    %6 = vector.load %arg3[%c0_6, %c0_7] : memref<128x512xbf16, #tpu.memory_space<vmem>>, vector<128x512xbf16>
    %cst_8 = arith.constant dense<0.000000e+00> : vector<128x128xf32>
    %7 = tpu.matmul %6, %0, %cst_8 {dimension_numbers = #tpu.dot_dimension_numbers<[1], [0], [0], [1], [0, 0, 1, 1], [], []>} : vector<128x512xbf16>, vector<512x128xbf16>, vector<128x128xf32> -> vector<128x128xf32>
    %c0_9 = arith.constant 0 : index
    %c0_10 = arith.constant 0 : index
    %8 = vector.load %arg4[%c0_9, %c0_10] : memref<128x512xbf16, #tpu.memory_space<vmem>>, vector<128x512xbf16>
    %cst_11 = arith.constant dense<0.000000e+00> : vector<128x128xf32>
    %9 = tpu.matmul %8, %0, %cst_11 {dimension_numbers = #tpu.dot_dimension_numbers<[1], [0], [0], [1], [0, 0, 1, 1], [], []>} : vector<128x512xbf16>, vector<512x128xbf16>, vector<128x128xf32> -> vector<128x128xf32>
    %10 = arith.maximumf %7, %9 : vector<128x128xf32>
    %11 = arith.maximumf %5, %10 : vector<128x128xf32>
    %c0_12 = arith.constant 0 : index
    %c0_13 = arith.constant 0 : index
    %12 = vector.load %arg6[%c0_12, %c0_13] : memref<1x128xf32, #tpu.memory_space<vmem>>, vector<1x128xf32>
    %13 = vector.broadcast %12 : vector<1x128xf32> to vector<128x128xf32>
    %14 = arith.addf %11, %13 : vector<128x128xf32>
    %cst_14 = arith.constant 0.000000e+00 : f32
    %15 = vector.broadcast %cst_14 : f32 to vector<128x128xf32>
    %16 = arith.maximumf %14, %15 : vector<128x128xf32>
    %17 = arith.truncf %16 : vector<128x128xf32> to vector<128x128xbf16>
    %c0_15 = arith.constant 0 : index
    %c0_16 = arith.constant 0 : index
    %18 = vector.load %arg7[%c0_15, %c0_16] : memref<128x128xbf16, #tpu.memory_space<vmem>>, vector<128x128xbf16>
    tpu.vector_store %arg7[%c0_15, %c0_16], %17 {strides = array<i32>} : memref<128x128xbf16, #tpu.memory_space<vmem>>, vector<128x128xbf16>,
    return
  }
  func.func @transform_0(%arg0: i32) -> (i32, i32) {
    %c0_i32 = arith.constant 0 : i32
    %c0_i32_0 = arith.constant 0 : i32
    return %arg0, %c0_i32 : i32, i32
  }
  func.func @transform_1(%arg0: i32) -> (i32, i32) {
    %c0_i32 = arith.constant 0 : i32
    %c0_i32_0 = arith.constant 0 : i32
    return %arg0, %c0_i32 : i32, i32
  }
  func.func @transform_2(%arg0: i32) -> (i32, i32) {
    %c0_i32 = arith.constant 0 : i32
    %c0_i32_0 = arith.constant 0 : i32
    return %arg0, %c0_i32 : i32, i32
  }
  func.func @transform_3(%arg0: i32) -> (i32, i32) {
    %c0_i32 = arith.constant 0 : i32
    %c0_i32_0 = arith.constant 0 : i32
    return %arg0, %c0_i32 : i32, i32
  }
  func.func @transform_4(%arg0: i32) -> (i32, i32) {
    %c0_i32 = arith.constant 0 : i32
    %c0_i32_0 = arith.constant 0 : i32
    %c0_i32_1 = arith.constant 0 : i32
    return %c0_i32, %c0_i32_0 : i32, i32
  }
  func.func @transform_5(%arg0: i32) -> (i32, i32) {
    %c0_i32 = arith.constant 0 : i32
    %c0_i32_0 = arith.constant 0 : i32
    %c0_i32_1 = arith.constant 0 : i32
    return %c0_i32, %c0_i32_0 : i32, i32
  }
  func.func @transform_6(%arg0: i32) -> (i32, i32) {
    %c0_i32 = arith.constant 0 : i32
    %c0_i32_0 = arith.constant 0 : i32
    return %arg0, %c0_i32 : i32, i32
  }
}

module attributes {stable_mosaic.version = 11 : i64} {
  func.func @_conv_pool_kernel(%arg0: i32, %arg1: memref<72x256xbf16, #tpu.memory_space<vmem>>, %arg2: memref<72x256xbf16, #tpu.memory_space<vmem>>, %arg3: memref<72x256xbf16, #tpu.memory_space<vmem>>, %arg4: memref<72x256xbf16, #tpu.memory_space<vmem>>, %arg5: memref<256x128xbf16, #tpu.memory_space<vmem>>, %arg6: memref<1x128xf32, #tpu.memory_space<vmem>>, %arg7: memref<72x128xbf16, #tpu.memory_space<vmem>>) attributes {dimension_semantics = [#tpu.dimension_semantics<parallel>], iteration_bounds = array<i64: 1>, scalar_prefetch = 0 : i64, scratch_operands = 0 : i64, tpu.core_type = #tpu.core_type<tc>, window_params = [{transform_indices = @transform_0, window_bounds = array<i64: 72, 256>}, {transform_indices = @transform_1, window_bounds = array<i64: 72, 256>}, {transform_indices = @transform_2, window_bounds = array<i64: 72, 256>}, {transform_indices = @transform_3, window_bounds = array<i64: 72, 256>}, {pipeline_mode = #tpu.pipeline_mode<synchronous>, transform_indices = @transform_4, window_bounds = array<i64: 256, 128>}, {pipeline_mode = #tpu.pipeline_mode<synchronous>, transform_indices = @transform_5, window_bounds = array<i64: 1, 128>}, {transform_indices = @transform_6, window_bounds = array<i64: 72, 128>}]} {
    %c0 = arith.constant 0 : index
    %c0_0 = arith.constant 0 : index
    %0 = vector.load %arg5[%c0, %c0_0] : memref<256x128xbf16, #tpu.memory_space<vmem>>, vector<256x128xbf16>
    %c0_1 = arith.constant 0 : index
    %c0_2 = arith.constant 0 : index
    %1 = vector.load %arg1[%c0_1, %c0_2] : memref<72x256xbf16, #tpu.memory_space<vmem>>, vector<72x256xbf16>
    %cst = arith.constant dense<0.000000e+00> : vector<72x128xf32>
    %2 = tpu.matmul %1, %0, %cst {dimension_numbers = #tpu.dot_dimension_numbers<[1], [0], [0], [1], [0, 0, 1, 1], [], []>} : vector<72x256xbf16>, vector<256x128xbf16>, vector<72x128xf32> -> vector<72x128xf32>
    %c0_3 = arith.constant 0 : index
    %c0_4 = arith.constant 0 : index
    %3 = vector.load %arg2[%c0_3, %c0_4] : memref<72x256xbf16, #tpu.memory_space<vmem>>, vector<72x256xbf16>
    %cst_5 = arith.constant dense<0.000000e+00> : vector<72x128xf32>
    %4 = tpu.matmul %3, %0, %cst_5 {dimension_numbers = #tpu.dot_dimension_numbers<[1], [0], [0], [1], [0, 0, 1, 1], [], []>} : vector<72x256xbf16>, vector<256x128xbf16>, vector<72x128xf32> -> vector<72x128xf32>
    %5 = arith.maximumf %2, %4 : vector<72x128xf32>
    %c0_6 = arith.constant 0 : index
    %c0_7 = arith.constant 0 : index
    %6 = vector.load %arg3[%c0_6, %c0_7] : memref<72x256xbf16, #tpu.memory_space<vmem>>, vector<72x256xbf16>
    %cst_8 = arith.constant dense<0.000000e+00> : vector<72x128xf32>
    %7 = tpu.matmul %6, %0, %cst_8 {dimension_numbers = #tpu.dot_dimension_numbers<[1], [0], [0], [1], [0, 0, 1, 1], [], []>} : vector<72x256xbf16>, vector<256x128xbf16>, vector<72x128xf32> -> vector<72x128xf32>
    %c0_9 = arith.constant 0 : index
    %c0_10 = arith.constant 0 : index
    %8 = vector.load %arg4[%c0_9, %c0_10] : memref<72x256xbf16, #tpu.memory_space<vmem>>, vector<72x256xbf16>
    %cst_11 = arith.constant dense<0.000000e+00> : vector<72x128xf32>
    %9 = tpu.matmul %8, %0, %cst_11 {dimension_numbers = #tpu.dot_dimension_numbers<[1], [0], [0], [1], [0, 0, 1, 1], [], []>} : vector<72x256xbf16>, vector<256x128xbf16>, vector<72x128xf32> -> vector<72x128xf32>
    %10 = arith.maximumf %7, %9 : vector<72x128xf32>
    %11 = arith.maximumf %5, %10 : vector<72x128xf32>
    %c0_12 = arith.constant 0 : index
    %c0_13 = arith.constant 0 : index
    %12 = vector.load %arg6[%c0_12, %c0_13] : memref<1x128xf32, #tpu.memory_space<vmem>>, vector<1x128xf32>
    %13 = vector.broadcast %12 : vector<1x128xf32> to vector<72x128xf32>
    %14 = arith.addf %11, %13 : vector<72x128xf32>
    %cst_14 = arith.constant 0.000000e+00 : f32
    %15 = vector.broadcast %cst_14 : f32 to vector<72x128xf32>
    %16 = arith.maximumf %14, %15 : vector<72x128xf32>
    %17 = arith.truncf %16 : vector<72x128xf32> to vector<72x128xbf16>
    %c0_15 = arith.constant 0 : index
    %c0_16 = arith.constant 0 : index
    %18 = vector.load %arg7[%c0_15, %c0_16] : memref<72x128xbf16, #tpu.memory_space<vmem>>, vector<72x128xbf16>
    tpu.vector_store %arg7[%c0_15, %c0_16], %17 {strides = array<i32>} : memref<72x128xbf16, #tpu.memory_space<vmem>>, vector<72x128xbf16>,
    return
  }
  func.func @transform_0(%arg0: i32) -> (i32, i32) {
    %c0_i32 = arith.constant 0 : i32
    %c0_i32_0 = arith.constant 0 : i32
    return %arg0, %c0_i32 : i32, i32
  }
  func.func @transform_1(%arg0: i32) -> (i32, i32) {
    %c0_i32 = arith.constant 0 : i32
    %c0_i32_0 = arith.constant 0 : i32
    return %arg0, %c0_i32 : i32, i32
  }
  func.func @transform_2(%arg0: i32) -> (i32, i32) {
    %c0_i32 = arith.constant 0 : i32
    %c0_i32_0 = arith.constant 0 : i32
    return %arg0, %c0_i32 : i32, i32
  }
  func.func @transform_3(%arg0: i32) -> (i32, i32) {
    %c0_i32 = arith.constant 0 : i32
    %c0_i32_0 = arith.constant 0 : i32
    return %arg0, %c0_i32 : i32, i32
  }
  func.func @transform_4(%arg0: i32) -> (i32, i32) {
    %c0_i32 = arith.constant 0 : i32
    %c0_i32_0 = arith.constant 0 : i32
    %c0_i32_1 = arith.constant 0 : i32
    return %c0_i32, %c0_i32_0 : i32, i32
  }
  func.func @transform_5(%arg0: i32) -> (i32, i32) {
    %c0_i32 = arith.constant 0 : i32
    %c0_i32_0 = arith.constant 0 : i32
    %c0_i32_1 = arith.constant 0 : i32
    return %c0_i32, %c0_i32_0 : i32, i32
  }
  func.func @transform_6(%arg0: i32) -> (i32, i32) {
    %c0_i32 = arith.constant 0 : i32
    %c0_i32_0 = arith.constant 0 : i32
    return %arg0, %c0_i32 : i32, i32
  }
}

module attributes {stable_mosaic.version = 11 : i64} {
  func.func @_fc_fused_kernel(%arg0: i32, %arg1: memref<2x4608xbf16, #tpu.memory_space<vmem>>, %arg2: memref<4608x128xbf16, #tpu.memory_space<vmem>>, %arg3: memref<1x128xf32, #tpu.memory_space<vmem>>, %arg4: memref<128x128xbf16, #tpu.memory_space<vmem>>, %arg5: memref<1x128xf32, #tpu.memory_space<vmem>>, %arg6: memref<128x128xbf16, #tpu.memory_space<vmem>>, %arg7: memref<1x128xf32, #tpu.memory_space<vmem>>, %arg8: memref<2x128xf32, #tpu.memory_space<vmem>>) attributes {dimension_semantics = [#tpu.dimension_semantics<parallel>], iteration_bounds = array<i64: 1>, scalar_prefetch = 0 : i64, scratch_operands = 0 : i64, tpu.core_type = #tpu.core_type<tc>, window_params = [{transform_indices = @transform_0, window_bounds = array<i64: 2, 4608>}, {pipeline_mode = #tpu.pipeline_mode<synchronous>, transform_indices = @transform_1, window_bounds = array<i64: 4608, 128>}, {pipeline_mode = #tpu.pipeline_mode<synchronous>, transform_indices = @transform_2, window_bounds = array<i64: 1, 128>}, {pipeline_mode = #tpu.pipeline_mode<synchronous>, transform_indices = @transform_3, window_bounds = array<i64: 128, 128>}, {pipeline_mode = #tpu.pipeline_mode<synchronous>, transform_indices = @transform_4, window_bounds = array<i64: 1, 128>}, {pipeline_mode = #tpu.pipeline_mode<synchronous>, transform_indices = @transform_5, window_bounds = array<i64: 128, 128>}, {pipeline_mode = #tpu.pipeline_mode<synchronous>, transform_indices = @transform_6, window_bounds = array<i64: 1, 128>}, {transform_indices = @transform_7, window_bounds = array<i64: 2, 128>}]} {
    %c0 = arith.constant 0 : index
    %c0_0 = arith.constant 0 : index
    %0 = vector.load %arg1[%c0, %c0_0] : memref<2x4608xbf16, #tpu.memory_space<vmem>>, vector<2x4608xbf16>
    %c0_1 = arith.constant 0 : index
    %c0_2 = arith.constant 0 : index
    %1 = vector.load %arg2[%c0_1, %c0_2] : memref<4608x128xbf16, #tpu.memory_space<vmem>>, vector<4608x128xbf16>
    %cst = arith.constant dense<0.000000e+00> : vector<2x128xf32>
    %2 = tpu.matmul %0, %1, %cst {dimension_numbers = #tpu.dot_dimension_numbers<[1], [0], [0], [1], [0, 0, 1, 1], [], []>} : vector<2x4608xbf16>, vector<4608x128xbf16>, vector<2x128xf32> -> vector<2x128xf32>
    %c0_3 = arith.constant 0 : index
    %c0_4 = arith.constant 0 : index
    %3 = vector.load %arg3[%c0_3, %c0_4] : memref<1x128xf32, #tpu.memory_space<vmem>>, vector<1x128xf32>
    %4 = vector.broadcast %3 : vector<1x128xf32> to vector<2x128xf32>
    %5 = arith.addf %2, %4 : vector<2x128xf32>
    %cst_5 = arith.constant 0.000000e+00 : f32
    %6 = vector.broadcast %cst_5 : f32 to vector<2x128xf32>
    %7 = arith.maximumf %5, %6 : vector<2x128xf32>
    %8 = arith.truncf %7 : vector<2x128xf32> to vector<2x128xbf16>
    %c0_6 = arith.constant 0 : index
    %c0_7 = arith.constant 0 : index
    %9 = vector.load %arg4[%c0_6, %c0_7] : memref<128x128xbf16, #tpu.memory_space<vmem>>, vector<128x128xbf16>
    %cst_8 = arith.constant dense<0.000000e+00> : vector<2x128xf32>
    %10 = tpu.matmul %8, %9, %cst_8 {dimension_numbers = #tpu.dot_dimension_numbers<[1], [0], [0], [1], [0, 0, 1, 1], [], []>} : vector<2x128xbf16>, vector<128x128xbf16>, vector<2x128xf32> -> vector<2x128xf32>
    %c0_9 = arith.constant 0 : index
    %c0_10 = arith.constant 0 : index
    %11 = vector.load %arg5[%c0_9, %c0_10] : memref<1x128xf32, #tpu.memory_space<vmem>>, vector<1x128xf32>
    %12 = vector.broadcast %11 : vector<1x128xf32> to vector<2x128xf32>
    %13 = arith.addf %10, %12 : vector<2x128xf32>
    %cst_11 = arith.constant 0.000000e+00 : f32
    %14 = vector.broadcast %cst_11 : f32 to vector<2x128xf32>
    %15 = arith.maximumf %13, %14 : vector<2x128xf32>
    %16 = arith.truncf %15 : vector<2x128xf32> to vector<2x128xbf16>
    %c0_12 = arith.constant 0 : index
    %c0_13 = arith.constant 0 : index
    %17 = vector.load %arg6[%c0_12, %c0_13] : memref<128x128xbf16, #tpu.memory_space<vmem>>, vector<128x128xbf16>
    %cst_14 = arith.constant dense<0.000000e+00> : vector<2x128xf32>
    %18 = tpu.matmul %16, %17, %cst_14 {dimension_numbers = #tpu.dot_dimension_numbers<[1], [0], [0], [1], [0, 0, 1, 1], [], []>} : vector<2x128xbf16>, vector<128x128xbf16>, vector<2x128xf32> -> vector<2x128xf32>
    %c0_15 = arith.constant 0 : index
    %c0_16 = arith.constant 0 : index
    %19 = vector.load %arg7[%c0_15, %c0_16] : memref<1x128xf32, #tpu.memory_space<vmem>>, vector<1x128xf32>
    %20 = vector.broadcast %19 : vector<1x128xf32> to vector<2x128xf32>
    %21 = arith.addf %18, %20 : vector<2x128xf32>
    %c0_17 = arith.constant 0 : index
    %c0_18 = arith.constant 0 : index
    %22 = vector.load %arg8[%c0_17, %c0_18] : memref<2x128xf32, #tpu.memory_space<vmem>>, vector<2x128xf32>
    tpu.vector_store %arg8[%c0_17, %c0_18], %21 {strides = array<i32>} : memref<2x128xf32, #tpu.memory_space<vmem>>, vector<2x128xf32>,
    return
  }
  func.func @transform_0(%arg0: i32) -> (i32, i32) {
    %c0_i32 = arith.constant 0 : i32
    %c0_i32_0 = arith.constant 0 : i32
    return %arg0, %c0_i32 : i32, i32
  }
  func.func @transform_1(%arg0: i32) -> (i32, i32) {
    %c0_i32 = arith.constant 0 : i32
    %c0_i32_0 = arith.constant 0 : i32
    %c0_i32_1 = arith.constant 0 : i32
    return %c0_i32, %c0_i32_0 : i32, i32
  }
  func.func @transform_2(%arg0: i32) -> (i32, i32) {
    %c0_i32 = arith.constant 0 : i32
    %c0_i32_0 = arith.constant 0 : i32
    %c0_i32_1 = arith.constant 0 : i32
    return %c0_i32, %c0_i32_0 : i32, i32
  }
  func.func @transform_3(%arg0: i32) -> (i32, i32) {
    %c0_i32 = arith.constant 0 : i32
    %c0_i32_0 = arith.constant 0 : i32
    %c0_i32_1 = arith.constant 0 : i32
    return %c0_i32, %c0_i32_0 : i32, i32
  }
  func.func @transform_4(%arg0: i32) -> (i32, i32) {
    %c0_i32 = arith.constant 0 : i32
    %c0_i32_0 = arith.constant 0 : i32
    %c0_i32_1 = arith.constant 0 : i32
    return %c0_i32, %c0_i32_0 : i32, i32
  }
  func.func @transform_5(%arg0: i32) -> (i32, i32) {
    %c0_i32 = arith.constant 0 : i32
    %c0_i32_0 = arith.constant 0 : i32
    %c0_i32_1 = arith.constant 0 : i32
    return %c0_i32, %c0_i32_0 : i32, i32
  }
  func.func @transform_6(%arg0: i32) -> (i32, i32) {
    %c0_i32 = arith.constant 0 : i32
    %c0_i32_0 = arith.constant 0 : i32
    %c0_i32_1 = arith.constant 0 : i32
    return %c0_i32, %c0_i32_0 : i32, i32
  }
  func.func @transform_7(%arg0: i32) -> (i32, i32) {
    %c0_i32 = arith.constant 0 : i32
    %c0_i32_0 = arith.constant 0 : i32
    return %arg0, %c0_i32 : i32, i32
  }
}

</mosaic_0001>

<llo_original>
// kernel: net_forward.3
$region0: #{net_forward.3}
  #allocation0 [shape = 'u32[]', space=smem, size = 0x4, offset = 0x4, fixed_abs, tag = 'smem constant byte address 0x4 - core index']
  #allocation1 [shape = 'u32[72,128]{1,0:T(1,128)}', space=vmem, size = 0x9000, scoped, tag = 'internal scratch']
  %s0 = inlined_call_operand.vmem [shape: bf16[512,512], index: 0, kind: input, shape index: {}]
  %s1 = inlined_call_operand.vmem [shape: bf16[512,512], index: 1, kind: input, shape index: {}]
  %s2 = inlined_call_operand.vmem [shape: bf16[512,512], index: 2, kind: input, shape index: {}]
  %s3 = inlined_call_operand.vmem [shape: bf16[512,512], index: 3, kind: input, shape index: {}]
  %s4 = inlined_call_operand.vmem [shape: bf16[512,128], index: 4, kind: input, shape index: {}]
  %s5 = inlined_call_operand.vmem [shape: f32[1,128], index: 5, kind: input, shape index: {}]
  %s6 = inlined_call_operand.vmem [shape: bf16[512,128], index: 6, kind: output, shape index: {}]
  %s7 = sld [smem:[#allocation0]]
  $region57: #{net_forward.3} parent=0
    _
  %s9 = ssub.s32 1, %s7
  %s10 = scalar_select 0, %s9, %s7
  loop: start=0, step=1, limit=6
  $region2: #{net_forward.3} parent=0 // loop_pre_header
    _
  $region3: #{net_forward.3} parent=0 // loop_header
    %s12 = sphi 0, %s16
    %p13 = scmp.ge.s32.totalorder %s12, 6
    %s22 = sphi 0, %s24
    %s25 = sphi 0, %s22
    %s26 = sphi 0, %s25
    %s42 = sphi 0, %s26
    %s48 = sphi 0, %s50
    %s51 = sphi 0, %s48
    %s52 = sphi 0, %s51
    %s68 = sphi 0, %s52
    %s74 = sphi 0, %s76
    %s77 = sphi 0, %s74
    %s78 = sphi 0, %s77
    %s94 = sphi 0, %s78
    %s100 = sphi 0, %s102
    %s103 = sphi 0, %s100
    %s104 = sphi 0, %s103
    %s120 = sphi 0, %s104
    %s124 = sphi 0, %s124
    %s126 = sphi 0, %s124
    %s127 = sphi 0, %s126
    %s141 = sphi 0, %s127
    %s145 = sphi 0, %s145
    %s147 = sphi 0, %s145
    %s148 = sphi 0, %s147
    %s162 = sphi 0, %s148
    %s168 = sphi 0, %s170
    %s171 = sphi 0, %s168
    %s172 = sphi 0, %s171
    %s188 = sphi 0, %s172
  $region4: #{net_forward.3} parent=0 // loop_header_branch
    %15 = sbr.rel (%p13) target = $region8
  $region5: #{net_forward.3} parent=0 // loop_body
    %s17 = ssub.s32 %s12, 1
    %s18 = ssub.s32 %s12, 2
    %s19 = sadd.s32 %s12, 1
    %s20 = ssub.s32 %s12, %s19
    %p21 = scmp.eq.s32.totalorder %s20, 0
    %s23 = sadd.s32 %s22, 1
    %s24 = scalar_select %p21, %s22, %s23
    %p27 = pneg %p21
    %p28 = scmp.eq.s32.totalorder %s12, 3
    %p29 = por %p27, %p28
    %p30 = scmp.ne.s32.totalorder %s22, %s25
    %p31 = scmp.eq.s32.totalorder %s12, 0
    %p32 = por %p30, %p31
    %p33 = scmp.ne.s32.totalorder %s22, %s25
    %p34 = scmp.eq.s32.totalorder %s17, 3
    %p35 = por %p33, %p34
    %p36 = scmp.ne.s32.totalorder %s25, %s26
    %p37 = scmp.eq.s32.totalorder %s17, 0
    %p38 = por %p36, %p37
    %p39 = scmp.ne.s32.totalorder %s25, %s26
    %p40 = scmp.eq.s32.totalorder %s18, 3
    %p41 = por %p39, %p40
    %p43 = scmp.ne.s32.totalorder %s26, %s42
    %p44 = scmp.eq.s32.totalorder %s18, 0
    %p45 = por %p43, %p44
    %s46 = ssub.s32 %s12, %s19
    %p47 = scmp.eq.s32.totalorder %s46, 0
    %s49 = sadd.s32 %s48, 1
    %s50 = scalar_select %p47, %s48, %s49
    %p53 = pneg %p47
    %p54 = scmp.eq.s32.totalorder %s12, 3
    %p55 = por %p53, %p54
    %p56 = scmp.ne.s32.totalorder %s48, %s51
    %p57 = scmp.eq.s32.totalorder %s12, 0
    %p58 = por %p56, %p57
    %p59 = scmp.ne.s32.totalorder %s48, %s51
    %p60 = scmp.eq.s32.totalorder %s17, 3
    %p61 = por %p59, %p60
    %p62 = scmp.ne.s32.totalorder %s51, %s52
    %p63 = scmp.eq.s32.totalorder %s17, 0
    %p64 = por %p62, %p63
    %p65 = scmp.ne.s32.totalorder %s51, %s52
    %p66 = scmp.eq.s32.totalorder %s18, 3
    %p67 = por %p65, %p66
    %p69 = scmp.ne.s32.totalorder %s52, %s68
    %p70 = scmp.eq.s32.totalorder %s18, 0
    %p71 = por %p69, %p70
    %s72 = ssub.s32 %s12, %s19
    %p73 = scmp.eq.s32.totalorder %s72, 0
    %s75 = sadd.s32 %s74, 1
    %s76 = scalar_select %p73, %s74, %s75
    %p79 = pneg %p73
    %p80 = scmp.eq.s32.totalorder %s12, 3
    %p81 = por %p79, %p80
    %p82 = scmp.ne.s32.totalorder %s74, %s77
    %p83 = scmp.eq.s32.totalorder %s12, 0
    %p84 = por %p82, %p83
    %p85 = scmp.ne.s32.totalorder %s74, %s77
    %p86 = scmp.eq.s32.totalorder %s17, 3
    %p87 = por %p85, %p86
    %p88 = scmp.ne.s32.totalorder %s77, %s78
    %p89 = scmp.eq.s32.totalorder %s17, 0
    %p90 = por %p88, %p89
    %p91 = scmp.ne.s32.totalorder %s77, %s78
    %p92 = scmp.eq.s32.totalorder %s18, 3
    %p93 = por %p91, %p92
    %p95 = scmp.ne.s32.totalorder %s78, %s94
    %p96 = scmp.eq.s32.totalorder %s18, 0
    %p97 = por %p95, %p96
    %s98 = ssub.s32 %s12, %s19
    %p99 = scmp.eq.s32.totalorder %s98, 0
    %s101 = sadd.s32 %s100, 1
    %s102 = scalar_select %p99, %s100, %s101
    %p105 = pneg %p99
    %p106 = scmp.eq.s32.totalorder %s12, 3
    %p107 = por %p105, %p106
    %p108 = scmp.ne.s32.totalorder %s100, %s103
    %p109 = scmp.eq.s32.totalorder %s12, 0
    %p110 = por %p108, %p109
    %p111 = scmp.ne.s32.totalorder %s100, %s103
    %p112 = scmp.eq.s32.totalorder %s17, 3
    %p113 = por %p111, %p112
    %p114 = scmp.ne.s32.totalorder %s103, %s104
    %p115 = scmp.eq.s32.totalorder %s17, 0
    %p116 = por %p114, %p115
    %p117 = scmp.ne.s32.totalorder %s103, %s104
    %p118 = scmp.eq.s32.totalorder %s18, 3
    %p119 = por %p117, %p118
    %p121 = scmp.ne.s32.totalorder %s104, %s120
    %p122 = scmp.eq.s32.totalorder %s18, 0
    %p123 = por %p121, %p122
    %s125 = sadd.s32 %s124, 1
    %p128 = scmp.eq.s32.totalorder %s12, 3
    %p129 = scmp.ne.s32.totalorder %s124, %s126
    %p130 = scmp.eq.s32.totalorder %s12, 0
    %p131 = por %p129, %p130
    %p132 = scmp.ne.s32.totalorder %s124, %s126
    %p133 = scmp.eq.s32.totalorder %s17, 3
    %p134 = por %p132, %p133
    %p135 = scmp.ne.s32.totalorder %s126, %s127
    %p136 = scmp.eq.s32.totalorder %s17, 0
    %p137 = por %p135, %p136
    %p138 = scmp.ne.s32.totalorder %s126, %s127
    %p139 = scmp.eq.s32.totalorder %s18, 3
    %p140 = por %p138, %p139
    %p142 = scmp.ne.s32.totalorder %s127, %s141
    %p143 = scmp.eq.s32.totalorder %s18, 0
    %p144 = por %p142, %p143
    %s146 = sadd.s32 %s145, 1
    %p149 = scmp.eq.s32.totalorder %s12, 3
    %p150 = scmp.ne.s32.totalorder %s145, %s147
    %p151 = scmp.eq.s32.totalorder %s12, 0
    %p152 = por %p150, %p151
    %p153 = scmp.ne.s32.totalorder %s145, %s147
    %p154 = scmp.eq.s32.totalorder %s17, 3
    %p155 = por %p153, %p154
    %p156 = scmp.ne.s32.totalorder %s147, %s148
    %p157 = scmp.eq.s32.totalorder %s17, 0
    %p158 = por %p156, %p157
    %p159 = scmp.ne.s32.totalorder %s147, %s148
    %p160 = scmp.eq.s32.totalorder %s18, 3
    %p161 = por %p159, %p160
    %p163 = scmp.ne.s32.totalorder %s148, %s162
    %p164 = scmp.eq.s32.totalorder %s18, 0
    %p165 = por %p163, %p164
    %s166 = ssub.s32 %s12, %s19
    %p167 = scmp.eq.s32.totalorder %s166, 0
    %s169 = sadd.s32 %s168, 1
    %s170 = scalar_select %p167, %s168, %s169
    %p173 = pneg %p167
    %p174 = scmp.eq.s32.totalorder %s12, 3
    %p175 = por %p173, %p174
    %p176 = scmp.ne.s32.totalorder %s168, %s171
    %p177 = scmp.eq.s32.totalorder %s12, 0
    %p178 = por %p176, %p177
    %p179 = scmp.ne.s32.totalorder %s168, %s171
    %p180 = scmp.eq.s32.totalorder %s17, 3
    %p181 = por %p179, %p180
    %p182 = scmp.ne.s32.totalorder %s171, %s172
    %p183 = scmp.eq.s32.totalorder %s17, 0
    %p184 = por %p182, %p183
    %p185 = scmp.ne.s32.totalorder %s171, %s172
    %p186 = scmp.eq.s32.totalorder %s18, 3
    %p187 = por %p185, %p186
    %p189 = scmp.ne.s32.totalorder %s172, %s188
    %p190 = scmp.eq.s32.totalorder %s18, 0
    %p191 = por %p189, %p190
    %p192 = scmp.le.s32.totalorder 1, %s12
    %p193 = scmp.lt.s32.totalorder %s12, 5
    %p194 = pnand %p192, %p193
    %p195 = pneg %p194
    // Predicated region
    $region9: #{net_forward.3} parent=5 // pred_check
      _
    $region10: #{net_forward.3} parent=5 // pred_check_branch
      %197 = sbr.rel (%p194) target = $region12
    $region11: #{net_forward.3} parent=5 // pred_region
      %s198 = ssub.s32 %s12, 1
      // Predicated region
      $region13: #{net_forward.3} parent=11 // pred_check
        %p199 = pneg %p137
      $region14: #{net_forward.3} parent=11 // pred_check_branch
        %201 = sbr.rel (%p199) target = $region16
      $region15: #{net_forward.3} parent=11 // pred_region
        _
      $region16: #{net_forward.3} parent=11 // pred_fallthru
        _
      // Predicated region
      $region17: #{net_forward.3} parent=11 // pred_check
        %p202 = pneg %p158
      $region18: #{net_forward.3} parent=11 // pred_check_branch
        %204 = sbr.rel (%p202) target = $region20
      $region19: #{net_forward.3} parent=11 // pred_region
        _
      $region20: #{net_forward.3} parent=11 // pred_fallthru
        _
    $region12: #{net_forward.3} parent=5 // pred_fallthru
      _
    %p205 = scmp.lt.s32.totalorder %s12, 4
    // Predicated region
    $region21: #{net_forward.3} parent=5 // pred_check
      %p206 = pneg %p205
    $region22: #{net_forward.3} parent=5 // pred_check_branch
      %208 = sbr.rel (%p206) target = $region24
    $region23: #{net_forward.3} parent=5 // pred_region
      // Predicated region
      $region25: #{net_forward.3} parent=23 // pred_check
        %p209 = pneg %p32
      $region26: #{net_forward.3} parent=23 // pred_check_branch
        %211 = sbr.rel (%p209) target = $region28
      $region27: #{net_forward.3} parent=23 // pred_region
        %s212 = smul.u32 16, %s12
        %p213 = scmp.lt.s32.totalorder %s212, 63
        %s214 = scalar_select %p213, %s212, 63
        %s215 = smul.addr %s214, 4
        %s216 = smul.addr %s215, 4
        %s217 = scalar_lea.vmem %s0, %s216
        %s218 = smul.u32 16, %s12
      $region28: #{net_forward.3} parent=23 // pred_fallthru
        _
      // Predicated region
      $region29: #{net_forward.3} parent=23 // pred_check
        %p219 = pneg %p58
      $region30: #{net_forward.3} parent=23 // pred_check_branch
        %221 = sbr.rel (%p219) target = $region32
      $region31: #{net_forward.3} parent=23 // pred_region
        %s222 = smul.u32 16, %s12
        %p223 = scmp.lt.s32.totalorder %s222, 63
        %s224 = scalar_select %p223, %s222, 63
        %s225 = smul.addr %s224, 4
        %s226 = smul.addr %s225, 4
        %s227 = scalar_lea.vmem %s1, %s226
        %s228 = smul.u32 16, %s12
      $region32: #{net_forward.3} parent=23 // pred_fallthru
        _
      // Predicated region
      $region33: #{net_forward.3} parent=23 // pred_check
        %p229 = pneg %p84
      $region34: #{net_forward.3} parent=23 // pred_check_branch
        %231 = sbr.rel (%p229) target = $region36
      $region35: #{net_forward.3} parent=23 // pred_region
        %s232 = smul.u32 16, %s12
        %p233 = scmp.lt.s32.totalorder %s232, 63
        %s234 = scalar_select %p233, %s232, 63
        %s235 = smul.addr %s234, 4
        %s236 = smul.addr %s235, 4
        %s237 = scalar_lea.vmem %s2, %s236
        %s238 = smul.u32 16, %s12
      $region36: #{net_forward.3} parent=23 // pred_fallthru
        _
      // Predicated region
      $region37: #{net_forward.3} parent=23 // pred_check
        %p239 = pneg %p110
      $region38: #{net_forward.3} parent=23 // pred_check_branch
        %241 = sbr.rel (%p239) target = $region40
      $region39: #{net_forward.3} parent=23 // pred_region
        %s242 = smul.u32 16, %s12
        %p243 = scmp.lt.s32.totalorder %s242, 63
        %s244 = scalar_select %p243, %s242, 63
        %s245 = smul.addr %s244, 4
        %s246 = smul.addr %s245, 4
        %s247 = scalar_lea.vmem %s3, %s246
        %s248 = smul.u32 16, %s12
      $region40: #{net_forward.3} parent=23 // pred_fallthru
        _
    $region24: #{net_forward.3} parent=5 // pred_fallthru
      _
    %p249 = scmp.le.s32.totalorder 1, %s12
    %p250 = scmp.lt.s32.totalorder %s12, 5
    %p251 = pnand %p249, %p250
    %p252 = pneg %p251
    // Predicated region
    $region41: #{net_forward.3} parent=5 // pred_check
      _
    $region42: #{net_forward.3} parent=5 // pred_check_branch
      %254 = sbr.rel (%p251) target = $region44
    $region43: #{net_forward.3} parent=5 // pred_region
      %s255 = ssub.s32 %s12, 1
      %s256 = smul.u32 16, %s17
      %p257 = scmp.lt.s32.totalorder %s256, 63
      %s258 = scalar_select %p257, %s256, 63
      %s259 = smul.addr %s258, 4
      %s260 = smul.addr %s259, 4
      %s261 = scalar_lea.vmem %s0, %s260
      %p262 = pneg %p38
      %p263 = pneg %p35
      %s264 = smul.u32 16, %s17
      %p265 = scmp.lt.s32.totalorder %s264, 63
      %s266 = scalar_select %p265, %s264, 63
      %s267 = smul.addr %s266, 4
      %s268 = smul.addr %s267, 4
      %s269 = scalar_lea.vmem %s1, %s268
      %p270 = pneg %p64
      %p271 = pneg %p61
      %s272 = smul.u32 16, %s17
      %p273 = scmp.lt.s32.totalorder %s272, 63
      %s274 = scalar_select %p273, %s272, 63
      %s275 = smul.addr %s274, 4
      %s276 = smul.addr %s275, 4
      %s277 = scalar_lea.vmem %s2, %s276
      %p278 = pneg %p90
      %p279 = pneg %p87
      %s280 = smul.u32 16, %s17
      %p281 = scmp.lt.s32.totalorder %s280, 63
      %s282 = scalar_select %p281, %s280, 63
      %s283 = smul.addr %s282, 4
      %s284 = smul.addr %s283, 4
      %s285 = scalar_lea.vmem %s3, %s284
      %p286 = pneg %p116
      %p287 = pneg %p113
      %p288 = pneg %p137
      %p289 = pneg %p134
      %p290 = pneg %p158
      %p291 = pneg %p155
      %p292 = pneg %p184
      %p293 = pneg %p181
      %s294 = smul.u32 16, %s17
      %p295 = scmp.lt.s32.totalorder %s294, 63
      %s296 = scalar_select %p295, %s294, 63
      %s297 = smul.addr %s296, 4
      %s298 = scalar_lea.vmem %s6, %s297
      %s299 = smul.u32 16, %s17
      %p300 = scmp.lt.s32.totalorder %s299, 63
      %s301 = scalar_select %p300, %s299, 63
      %s302 = smul.addr %s301, 4
      %s303 = smul.addr %s302, 4
      %s304 = scalar_lea.vmem %s0, %s303
      %s305 = smul.u32 16, %s17
      %s306 = smul.u32 16, %s17
      %p307 = scmp.lt.s32.totalorder %s306, 63
      %s308 = scalar_select %p307, %s306, 63
      %s309 = smul.addr %s308, 4
      %s310 = smul.addr %s309, 4
      %s311 = scalar_lea.vmem %s1, %s310
      %s312 = smul.u32 16, %s17
      %s313 = smul.u32 16, %s17
      %p314 = scmp.lt.s32.totalorder %s313, 63
      %s315 = scalar_select %p314, %s313, 63
      %s316 = smul.addr %s315, 4
      %s317 = smul.addr %s316, 4
      %s318 = scalar_lea.vmem %s2, %s317
      %s319 = smul.u32 16, %s17
      %s320 = smul.u32 16, %s17
      %p321 = scmp.lt.s32.totalorder %s320, 63
      %s322 = scalar_select %p321, %s320, 63
      %s323 = smul.addr %s322, 4
      %s324 = smul.addr %s323, 4
      %s325 = scalar_lea.vmem %s3, %s324
      %s326 = smul.u32 16, %s17
      %s327 = smul.u32 16, %s17
      %p328 = scmp.lt.s32.totalorder %s327, 63
      %s329 = scalar_select %p328, %s327, 63
      %s330 = smul.addr %s329, 4
      %s331 = scalar_lea.vmem %s6, %s330
      %s332 = smul.u32 16, %s17
      %v333 = vld [vmem:[%s4] sm:$0xf]
      %v334 = vld [vmem:[%s4 + $0x4] sm:$0xf]
      %v335 = vld [vmem:[%s4 + $0x8] sm:$0xf]
      %v336 = vld [vmem:[%s4 + $0xc] sm:$0xf]
      %v337 = vld [vmem:[%s4 + $0x10] sm:$0xf]
      %v338 = vld [vmem:[%s4 + $0x14] sm:$0xf]
      %v339 = vld [vmem:[%s4 + $0x18] sm:$0xf]
      %v340 = vld [vmem:[%s4 + $0x1c] sm:$0xf]
      %v341 = vld [vmem:[%s4 + $0x20] sm:$0xf]
      %v342 = vld [vmem:[%s4 + $0x24] sm:$0xf]
      %v343 = vld [vmem:[%s4 + $0x28] sm:$0xf]
      %v344 = vld [vmem:[%s4 + $0x2c] sm:$0xf]
      %v345 = vld [vmem:[%s4 + $0x30] sm:$0xf]
      %v346 = vld [vmem:[%s4 + $0x34] sm:$0xf]
      %v347 = vld [vmem:[%s4 + $0x38] sm:$0xf]
      %v348 = vld [vmem:[%s4 + $0x3c] sm:$0xf]
      %v349 = vld [vmem:[%s4 + $0x40] sm:$0xf]
      %v350 = vld [vmem:[%s4 + $0x44] sm:$0xf]
      %v351 = vld [vmem:[%s4 + $0x48] sm:$0xf]
      %v352 = vld [vmem:[%s4 + $0x4c] sm:$0xf]
      %v353 = vld [vmem:[%s4 + $0x50] sm:$0xf]
      %v354 = vld [vmem:[%s4 + $0x54] sm:$0xf]
      %v355 = vld [vmem:[%s4 + $0x58] sm:$0xf]
      %v356 = vld [vmem:[%s4 + $0x5c] sm:$0xf]
      %v357 = vld [vmem:[%s4 + $0x60] sm:$0xf]
      %v358 = vld [vmem:[%s4 + $0x64] sm:$0xf]
      %v359 = vld [vmem:[%s4 + $0x68] sm:$0xf]
      %v360 = vld [vmem:[%s4 + $0x6c] sm:$0xf]
      %v361 = vld [vmem:[%s4 + $0x70] sm:$0xf]
      %v362 = vld [vmem:[%s4 + $0x74] sm:$0xf]
      %v363 = vld [vmem:[%s4 + $0x78] sm:$0xf]
      %v364 = vld [vmem:[%s4 + $0x7c] sm:$0xf]
      %v365 = vld [vmem:[%s4 + $0x80] sm:$0xf]
      %v366 = vld [vmem:[%s4 + $0x84] sm:$0xf]
      %v367 = vld [vmem:[%s4 + $0x88] sm:$0xf]
      %v368 = vld [vmem:[%s4 + $0x8c] sm:$0xf]
      %v369 = vld [vmem:[%s4 + $0x90] sm:$0xf]
      %v370 = vld [vmem:[%s4 + $0x94] sm:$0xf]
      %v371 = vld [vmem:[%s4 + $0x98] sm:$0xf]
      %v372 = vld [vmem:[%s4 + $0x9c] sm:$0xf]
      %v373 = vld [vmem:[%s4 + $0xa0] sm:$0xf]
      %v374 = vld [vmem:[%s4 + $0xa4] sm:$0xf]
      %v375 = vld [vmem:[%s4 + $0xa8] sm:$0xf]
      %v376 = vld [vmem:[%s4 + $0xac] sm:$0xf]
      %v377 = vld [vmem:[%s4 + $0xb0] sm:$0xf]
      %v378 = vld [vmem:[%s4 + $0xb4] sm:$0xf]
      %v379 = vld [vmem:[%s4 + $0xb8] sm:$0xf]
      %v380 = vld [vmem:[%s4 + $0xbc] sm:$0xf]
      %v381 = vld [vmem:[%s4 + $0xc0] sm:$0xf]
      %v382 = vld [vmem:[%s4 + $0xc4] sm:$0xf]
      %v383 = vld [vmem:[%s4 + $0xc8] sm:$0xf]
      %v384 = vld [vmem:[%s4 + $0xcc] sm:$0xf]
      %v385 = vld [vmem:[%s4 + $0xd0] sm:$0xf]
      %v386 = vld [vmem:[%s4 + $0xd4] sm:$0xf]
      %v387 = vld [vmem:[%s4 + $0xd8] sm:$0xf]
      %v388 = vld [vmem:[%s4 + $0xdc] sm:$0xf]
      %v389 = vld [vmem:[%s4 + $0xe0] sm:$0xf]
      %v390 = vld [vmem:[%s4 + $0xe4] sm:$0xf]
      %v391 = vld [vmem:[%s4 + $0xe8] sm:$0xf]
      %v392 = vld [vmem:[%s4 + $0xec] sm:$0xf]
      %v393 = vld [vmem:[%s4 + $0xf0] sm:$0xf]
      %v394 = vld [vmem:[%s4 + $0xf4] sm:$0xf]
      %v395 = vld [vmem:[%s4 + $0xf8] sm:$0xf]
      %v396 = vld [vmem:[%s4 + $0xfc] sm:$0xf]
      %v397 = vld [vmem:[%s304] sm:$0xff]
      %v398 = vld [vmem:[%s304 + $0x8] sm:$0xff]
      %v399 = vld [vmem:[%s304 + $0x10] sm:$0xff]
      %v400 = vld [vmem:[%s304 + $0x18] sm:$0xff]
      %v401 = vld [vmem:[%s304 + $0x20] sm:$0xff]
      %v402 = vld [vmem:[%s304 + $0x28] sm:$0xff]
      %v403 = vld [vmem:[%s304 + $0x30] sm:$0xff]
      %v404 = vld [vmem:[%s304 + $0x38] sm:$0xff]
      %v405 = vld [vmem:[%s304 + $0x40] sm:$0xff]
      %v406 = vld [vmem:[%s304 + $0x48] sm:$0xff]
      %v407 = vld [vmem:[%s304 + $0x50] sm:$0xff]
      %v408 = vld [vmem:[%s304 + $0x58] sm:$0xff]
      %v409 = vld [vmem:[%s304 + $0x60] sm:$0xff]
      %v410 = vld [vmem:[%s304 + $0x68] sm:$0xff]
      %v411 = vld [vmem:[%s304 + $0x70] sm:$0xff]
      %v412 = vld [vmem:[%s304 + $0x78] sm:$0xff]
      %v413 = vld [vmem:[%s304 + $0x80] sm:$0xff]
      %v414 = vld [vmem:[%s304 + $0x88] sm:$0xff]
      %v415 = vld [vmem:[%s304 + $0x90] sm:$0xff]
      %v416 = vld [vmem:[%s304 + $0x98] sm:$0xff]
      %v417 = vld [vmem:[%s304 + $0xa0] sm:$0xff]
      %v418 = vld [vmem:[%s304 + $0xa8] sm:$0xff]
      %v419 = vld [vmem:[%s304 + $0xb0] sm:$0xff]
      %v420 = vld [vmem:[%s304 + $0xb8] sm:$0xff]
      %v421 = vld [vmem:[%s304 + $0xc0] sm:$0xff]
      %v422 = vld [vmem:[%s304 + $0xc8] sm:$0xff]
      %v423 = vld [vmem:[%s304 + $0xd0] sm:$0xff]
      %v424 = vld [vmem:[%s304 + $0xd8] sm:$0xff]
      %v425 = vld [vmem:[%s304 + $0xe0] sm:$0xff]
      %v426 = vld [vmem:[%s304 + $0xe8] sm:$0xff]
      %v427 = vld [vmem:[%s304 + $0xf0] sm:$0xff]
      %v428 = vld [vmem:[%s304 + $0xf8] sm:$0xff]
      %v461 = vunpack.c.l.b16 %v397
      %v462 = vunpack.c.h.b16 %v397
      %v463 = vunpack.c.l.b16 %v398
      %v464 = vunpack.c.h.b16 %v398
      %v465 = vunpack.c.l.b16 %v399
      %v466 = vunpack.c.h.b16 %v399
      %v467 = vunpack.c.l.b16 %v400
      %v468 = vunpack.c.h.b16 %v400
      %v469 = vunpack.c.l.b16 %v401
      %v470 = vunpack.c.h.b16 %v401
      %v471 = vunpack.c.l.b16 %v402
      %v472 = vunpack.c.h.b16 %v402
      %v473 = vunpack.c.l.b16 %v403
      %v474 = vunpack.c.h.b16 %v403
      %v475 = vunpack.c.l.b16 %v404
      %v476 = vunpack.c.h.b16 %v404
      %v477 = vunpack.c.l.b16 %v405
      %v478 = vunpack.c.h.b16 %v405
      %v479 = vunpack.c.l.b16 %v406
      %v480 = vunpack.c.h.b16 %v406
      %v481 = vunpack.c.l.b16 %v407
      %v482 = vunpack.c.h.b16 %v407
      %v483 = vunpack.c.l.b16 %v408
      %v484 = vunpack.c.h.b16 %v408
      %v485 = vunpack.c.l.b16 %v409
      %v486 = vunpack.c.h.b16 %v409
      %v487 = vunpack.c.l.b16 %v410
      %v488 = vunpack.c.h.b16 %v410
      %v489 = vunpack.c.l.b16 %v411
      %v490 = vunpack.c.h.b16 %v411
      %v491 = vunpack.c.l.b16 %v412
      %v492 = vunpack.c.h.b16 %v412
      %v493 = vunpack.c.l.b16 %v413
      %v494 = vunpack.c.h.b16 %v413
      %v495 = vunpack.c.l.b16 %v414
      %v496 = vunpack.c.h.b16 %v414
      %v497 = vunpack.c.l.b16 %v415
      %v498 = vunpack.c.h.b16 %v415
      %v499 = vunpack.c.l.b16 %v416
      %v500 = vunpack.c.h.b16 %v416
      %v501 = vunpack.c.l.b16 %v417
      %v502 = vunpack.c.h.b16 %v417
      %v503 = vunpack.c.l.b16 %v418
      %v504 = vunpack.c.h.b16 %v418
      %v505 = vunpack.c.l.b16 %v419
      %v506 = vunpack.c.h.b16 %v419
      %v507 = vunpack.c.l.b16 %v420
      %v508 = vunpack.c.h.b16 %v420
      %v509 = vunpack.c.l.b16 %v421
      %v510 = vunpack.c.h.b16 %v421
      %v511 = vunpack.c.l.b16 %v422
      %v512 = vunpack.c.h.b16 %v422
      %v513 = vunpack.c.l.b16 %v423
      %v514 = vunpack.c.h.b16 %v423
      %v515 = vunpack.c.l.b16 %v424
      %v516 = vunpack.c.h.b16 %v424
      %v517 = vunpack.c.l.b16 %v425
      %v518 = vunpack.c.h.b16 %v425
      %v519 = vunpack.c.l.b16 %v426
      %v520 = vunpack.c.h.b16 %v426
      %v521 = vunpack.c.l.b16 %v427
      %v522 = vunpack.c.h.b16 %v427
      %v523 = vunpack.c.l.b16 %v428
      %v524 = vunpack.c.h.b16 %v428
      %v525 = vpack.c.b16 %v465, %v461
      %v526 = vpack.c.b16 %v466, %v462
      %v527 = vpack.c.b16 %v467, %v463
      %v528 = vpack.c.b16 %v468, %v464
      %v529 = vpack.c.b16 %v473, %v469
      %v530 = vpack.c.b16 %v474, %v470
      %v531 = vpack.c.b16 %v475, %v471
      %v532 = vpack.c.b16 %v476, %v472
      %v533 = vpack.c.b16 %v481, %v477
      %v534 = vpack.c.b16 %v482, %v478
      %v535 = vpack.c.b16 %v483, %v479
      %v536 = vpack.c.b16 %v484, %v480
      %v537 = vpack.c.b16 %v489, %v485
      %v538 = vpack.c.b16 %v490, %v486
      %v539 = vpack.c.b16 %v491, %v487
      %v540 = vpack.c.b16 %v492, %v488
      %v541 = vpack.c.b16 %v497, %v493
      %v542 = vpack.c.b16 %v498, %v494
      %v543 = vpack.c.b16 %v499, %v495
      %v544 = vpack.c.b16 %v500, %v496
      %v545 = vpack.c.b16 %v505, %v501
      %v546 = vpack.c.b16 %v506, %v502
      %v547 = vpack.c.b16 %v507, %v503
      %v548 = vpack.c.b16 %v508, %v504
      %v549 = vpack.c.b16 %v513, %v509
      %v550 = vpack.c.b16 %v514, %v510
      %v551 = vpack.c.b16 %v515, %v511
      %v552 = vpack.c.b16 %v516, %v512
      %v553 = vpack.c.b16 %v521, %v517
      %v554 = vpack.c.b16 %v522, %v518
      %v555 = vpack.c.b16 %v523, %v519
      %v556 = vpack.c.b16 %v524, %v520
      %v653 = vunpack.c.l.b16 %v333
      %v654 = vunpack.c.l.b16 %v334
      %v655 = vunpack.c.l.b16 %v335
      %v656 = vunpack.c.l.b16 %v336
      %v657 = vunpack.c.l.b16 %v337
      %v658 = vunpack.c.l.b16 %v338
      %v659 = vunpack.c.l.b16 %v339
      %v660 = vunpack.c.l.b16 %v340
      %v661 = vunpack.c.l.b16 %v341
      %v662 = vunpack.c.l.b16 %v342
      %v663 = vunpack.c.l.b16 %v343
      %v664 = vunpack.c.l.b16 %v344
      %v665 = vunpack.c.l.b16 %v345
      %v666 = vunpack.c.l.b16 %v346
      %v667 = vunpack.c.l.b16 %v347
      %v668 = vunpack.c.l.b16 %v348
      %v669 = vunpack.c.l.b16 %v349
      %v670 = vunpack.c.l.b16 %v350
      %v671 = vunpack.c.l.b16 %v351
      %v672 = vunpack.c.l.b16 %v352
      %v673 = vunpack.c.l.b16 %v353
      %v674 = vunpack.c.l.b16 %v354
      %v675 = vunpack.c.l.b16 %v355
      %v676 = vunpack.c.l.b16 %v356
      %v677 = vunpack.c.l.b16 %v357
      %v678 = vunpack.c.l.b16 %v358
      %v679 = vunpack.c.l.b16 %v359
      %v680 = vunpack.c.l.b16 %v360
      %v681 = vunpack.c.l.b16 %v361
      %v682 = vunpack.c.l.b16 %v362
      %v683 = vunpack.c.l.b16 %v363
      %v684 = vunpack.c.l.b16 %v364
      %v685 = vunpack.c.l.b16 %v365
      %v686 = vunpack.c.l.b16 %v366
      %v687 = vunpack.c.l.b16 %v367
      %v688 = vunpack.c.l.b16 %v368
      %v689 = vunpack.c.l.b16 %v369
      %v690 = vunpack.c.l.b16 %v370
      %v691 = vunpack.c.l.b16 %v371
      %v692 = vunpack.c.l.b16 %v372
      %v693 = vunpack.c.l.b16 %v373
      %v694 = vunpack.c.l.b16 %v374
      %v695 = vunpack.c.l.b16 %v375
      %v696 = vunpack.c.l.b16 %v376
      %v697 = vunpack.c.l.b16 %v377
      %v698 = vunpack.c.l.b16 %v378
      %v699 = vunpack.c.l.b16 %v379
      %v700 = vunpack.c.l.b16 %v380
      %v701 = vunpack.c.l.b16 %v381
      %v702 = vunpack.c.l.b16 %v382
      %v703 = vunpack.c.l.b16 %v383
      %v704 = vunpack.c.l.b16 %v384
      %v705 = vunpack.c.l.b16 %v385
      %v706 = vunpack.c.l.b16 %v386
      %v707 = vunpack.c.l.b16 %v387
      %v708 = vunpack.c.l.b16 %v388
      %v709 = vunpack.c.l.b16 %v389
      %v710 = vunpack.c.l.b16 %v390
      %v711 = vunpack.c.l.b16 %v391
      %v712 = vunpack.c.l.b16 %v392
      %v713 = vunpack.c.l.b16 %v393
      %v714 = vunpack.c.l.b16 %v394
      %v715 = vunpack.c.l.b16 %v395
      %v716 = vunpack.c.l.b16 %v396
      %v717 = vpack.c.b16 %v654, %v653
      %v718 = vpack.c.b16 %v656, %v655
      %v719 = vpack.c.b16 %v658, %v657
      %v720 = vpack.c.b16 %v660, %v659
      %v721 = vpack.c.b16 %v662, %v661
      %v722 = vpack.c.b16 %v664, %v663
      %v723 = vpack.c.b16 %v666, %v665
      %v724 = vpack.c.b16 %v668, %v667
      %v725 = vpack.c.b16 %v670, %v669
      %v726 = vpack.c.b16 %v672, %v671
      %v727 = vpack.c.b16 %v674, %v673
      %v728 = vpack.c.b16 %v676, %v675
      %v729 = vpack.c.b16 %v678, %v677
      %v730 = vpack.c.b16 %v680, %v679
      %v731 = vpack.c.b16 %v682, %v681
      %v732 = vpack.c.b16 %v684, %v683
      %v733 = vpack.c.b16 %v686, %v685
      %v734 = vpack.c.b16 %v688, %v687
      %v735 = vpack.c.b16 %v690, %v689
      %v736 = vpack.c.b16 %v692, %v691
      %v737 = vpack.c.b16 %v694, %v693
      %v738 = vpack.c.b16 %v696, %v695
      %v739 = vpack.c.b16 %v698, %v697
      %v740 = vpack.c.b16 %v700, %v699
      %v741 = vpack.c.b16 %v702, %v701
      %v742 = vpack.c.b16 %v704, %v703
      %v743 = vpack.c.b16 %v706, %v705
      %v744 = vpack.c.b16 %v708, %v707
      %v745 = vpack.c.b16 %v710, %v709
      %v746 = vpack.c.b16 %v712, %v711
      %v747 = vpack.c.b16 %v714, %v713
      %v748 = vpack.c.b16 %v716, %v715
      %781 = vmatpush.bf16.msra.mxu0 %v724
      %782 = vmatpush.bf16.msra.mxu0 %v723
      %783 = vmatpush.bf16.msra.mxu0 %v722
      %784 = vmatpush.bf16.msra.mxu0 %v721
      %785 = vmatpush.bf16.msra.mxu0 %v720
      %786 = vmatpush.bf16.msra.mxu0 %v719
      %787 = vmatpush.bf16.msra.mxu0 %v718
      %788 = vmatpush.bf16.msra.mxu0 %v717
      %789 = vmatmul.bf16.gmra.mxu0 %v525
      %v790 = vpop.f32.mrf.mxu0
      %v791 = vadd.f32 0.0, %v790
      %v792 = vpop.f32.mrf.mxu0
      %v793 = vadd.f32 0.0, %v792
      %794 = vmatmul.bf16.gmra.mxu0 %v529
      %v795 = vpop.f32.mrf.mxu0
      %v796 = vadd.f32 0.0, %v795
      %v797 = vpop.f32.mrf.mxu0
      %v798 = vadd.f32 0.0, %v797
      %799 = vmatmul.bf16.gmra.mxu0 %v533
      %v800 = vpop.f32.mrf.mxu0
      %v801 = vadd.f32 0.0, %v800
      %v802 = vpop.f32.mrf.mxu0
      %v803 = vadd.f32 0.0, %v802
      %804 = vmatmul.bf16.gmra.mxu0 %v537
      %v805 = vpop.f32.mrf.mxu0
      %v806 = vadd.f32 0.0, %v805
      %v807 = vpop.f32.mrf.mxu0
      %v808 = vadd.f32 0.0, %v807
      %809 = vmatmul.bf16.gmra.mxu0 %v541
      %v810 = vpop.f32.mrf.mxu0
      %v811 = vadd.f32 0.0, %v810
      %v812 = vpop.f32.mrf.mxu0
      %v813 = vadd.f32 0.0, %v812
      %814 = vmatmul.bf16.gmra.mxu0 %v545
      %v815 = vpop.f32.mrf.mxu0
      %v816 = vadd.f32 0.0, %v815
      %v817 = vpop.f32.mrf.mxu0
      %v818 = vadd.f32 0.0, %v817
      %819 = vmatmul.bf16.gmra.mxu0 %v549
      %v820 = vpop.f32.mrf.mxu0
      %v821 = vadd.f32 0.0, %v820
      %v822 = vpop.f32.mrf.mxu0
      %v823 = vadd.f32 0.0, %v822
      %824 = vmatmul.bf16.gmra.mxu0 %v553
      %v825 = vpop.f32.mrf.mxu0
      %v826 = vadd.f32 0.0, %v825
      %v827 = vpop.f32.mrf.mxu0
      %v828 = vadd.f32 0.0, %v827
      %829 = vdwg.mxu0
      %830 = vmatpush.bf16.msra.mxu0 %v732
      %831 = vmatpush.bf16.msra.mxu0 %v731
      %832 = vmatpush.bf16.msra.mxu0 %v730
      %833 = vmatpush.bf16.msra.mxu0 %v729
      %834 = vmatpush.bf16.msra.mxu0 %v728
      %835 = vmatpush.bf16.msra.mxu0 %v727
      %836 = vmatpush.bf16.msra.mxu0 %v726
      %837 = vmatpush.bf16.msra.mxu0 %v725
      %838 = vmatmul.bf16.gmra.mxu0 %v526
      %v839 = vpop.f32.mrf.mxu0
      %v840 = vadd.f32 %v791, %v839
      %v841 = vpop.f32.mrf.mxu0
      %v842 = vadd.f32 %v793, %v841
      %843 = vmatmul.bf16.gmra.mxu0 %v530
      %v844 = vpop.f32.mrf.mxu0
      %v845 = vadd.f32 %v796, %v844
      %v846 = vpop.f32.mrf.mxu0
      %v847 = vadd.f32 %v798, %v846
      %848 = vmatmul.bf16.gmra.mxu0 %v534
      %v849 = vpop.f32.mrf.mxu0
      %v850 = vadd.f32 %v801, %v849
      %v851 = vpop.f32.mrf.mxu0
      %v852 = vadd.f32 %v803, %v851
      %853 = vmatmul.bf16.gmra.mxu0 %v538
      %v854 = vpop.f32.mrf.mxu0
      %v855 = vadd.f32 %v806, %v854
      %v856 = vpop.f32.mrf.mxu0
      %v857 = vadd.f32 %v808, %v856
      %858 = vmatmul.bf16.gmra.mxu0 %v542
      %v859 = vpop.f32.mrf.mxu0
      %v860 = vadd.f32 %v811, %v859
      %v861 = vpop.f32.mrf.mxu0
      %v862 = vadd.f32 %v813, %v861
      %863 = vmatmul.bf16.gmra.mxu0 %v546
      %v864 = vpop.f32.mrf.mxu0
      %v865 = vadd.f32 %v816, %v864
      %v866 = vpop.f32.mrf.mxu0
      %v867 = vadd.f32 %v818, %v866
      %868 = vmatmul.bf16.gmra.mxu0 %v550
      %v869 = vpop.f32.mrf.mxu0
      %v870 = vadd.f32 %v821, %v869
      %v871 = vpop.f32.mrf.mxu0
      %v872 = vadd.f32 %v823, %v871
      %873 = vmatmul.bf16.gmra.mxu0 %v554
      %v874 = vpop.f32.mrf.mxu0
      %v875 = vadd.f32 %v826, %v874
      %v876 = vpop.f32.mrf.mxu0
      %v877 = vadd.f32 %v828, %v876
      %878 = vdwg.mxu0
      %879 = vmatpush.bf16.msra.mxu0 %v740
      %880 = vmatpush.bf16.msra.mxu0 %v739
      %881 = vmatpush.bf16.msra.mxu0 %v738
      %882 = vmatpush.bf16.msra.mxu0 %v737
      %883 = vmatpush.bf16.msra.mxu0 %v736
      %884 = vmatpush.bf16.msra.mxu0 %v735
      %885 = vmatpush.bf16.msra.mxu0 %v734
      %886 = vmatpush.bf16.msra.mxu0 %v733
      %887 = vmatmul.bf16.gmra.mxu0 %v527
      %v888 = vpop.f32.mrf.mxu0
      %v889 = vadd.f32 %v840, %v888
      %v890 = vpop.f32.mrf.mxu0
      %v891 = vadd.f32 %v842, %v890
      %892 = vmatmul.bf16.gmra.mxu0 %v531
      %v893 = vpop.f32.mrf.mxu0
      %v894 = vadd.f32 %v845, %v893
      %v895 = vpop.f32.mrf.mxu0
      %v896 = vadd.f32 %v847, %v895
      %897 = vmatmul.bf16.gmra.mxu0 %v535
      %v898 = vpop.f32.mrf.mxu0
      %v899 = vadd.f32 %v850, %v898
      %v900 = vpop.f32.mrf.mxu0
      %v901 = vadd.f32 %v852, %v900
      %902 = vmatmul.bf16.gmra.mxu0 %v539
      %v903 = vpop.f32.mrf.mxu0
      %v904 = vadd.f32 %v855, %v903
      %v905 = vpop.f32.mrf.mxu0
      %v906 = vadd.f32 %v857, %v905
      %907 = vmatmul.bf16.gmra.mxu0 %v543
      %v908 = vpop.f32.mrf.mxu0
      %v909 = vadd.f32 %v860, %v908
      %v910 = vpop.f32.mrf.mxu0
      %v911 = vadd.f32 %v862, %v910
      %912 = vmatmul.bf16.gmra.mxu0 %v547
      %v913 = vpop.f32.mrf.mxu0
      %v914 = vadd.f32 %v865, %v913
      %v915 = vpop.f32.mrf.mxu0
      %v916 = vadd.f32 %v867, %v915
      %917 = vmatmul.bf16.gmra.mxu0 %v551
      %v918 = vpop.f32.mrf.mxu0
      %v919 = vadd.f32 %v870, %v918
      %v920 = vpop.f32.mrf.mxu0
      %v921 = vadd.f32 %v872, %v920
      %922 = vmatmul.bf16.gmra.mxu0 %v555
      %v923 = vpop.f32.mrf.mxu0
      %v924 = vadd.f32 %v875, %v923
      %v925 = vpop.f32.mrf.mxu0
      %v926 = vadd.f32 %v877, %v925
      %927 = vdwg.mxu0
      %928 = vmatpush.bf16.msra.mxu0 %v748
      %929 = vmatpush.bf16.msra.mxu0 %v747
      %930 = vmatpush.bf16.msra.mxu0 %v746
      %931 = vmatpush.bf16.msra.mxu0 %v745
      %932 = vmatpush.bf16.msra.mxu0 %v744
      %933 = vmatpush.bf16.msra.mxu0 %v743
      %934 = vmatpush.bf16.msra.mxu0 %v742
      %935 = vmatpush.bf16.msra.mxu0 %v741
      %936 = vmatmul.bf16.gmra.mxu0 %v528
      %v937 = vpop.f32.mrf.mxu0
      %v938 = vadd.f32 %v889, %v937
      %v939 = vpop.f32.mrf.mxu0
      %v940 = vadd.f32 %v891, %v939
      %941 = vmatmul.bf16.gmra.mxu0 %v532
      %v942 = vpop.f32.mrf.mxu0
      %v943 = vadd.f32 %v894, %v942
      %v944 = vpop.f32.mrf.mxu0
      %v945 = vadd.f32 %v896, %v944
      %946 = vmatmul.bf16.gmra.mxu0 %v536
      %v947 = vpop.f32.mrf.mxu0
      %v948 = vadd.f32 %v899, %v947
      %v949 = vpop.f32.mrf.mxu0
      %v950 = vadd.f32 %v901, %v949
      %951 = vmatmul.bf16.gmra.mxu0 %v540
      %v952 = vpop.f32.mrf.mxu0
      %v953 = vadd.f32 %v904, %v952
      %v954 = vpop.f32.mrf.mxu0
      %v955 = vadd.f32 %v906, %v954
      %956 = vmatmul.bf16.gmra.mxu0 %v544
      %v957 = vpop.f32.mrf.mxu0
      %v958 = vadd.f32 %v909, %v957
      %v959 = vpop.f32.mrf.mxu0
      %v960 = vadd.f32 %v911, %v959
      %961 = vmatmul.bf16.gmra.mxu0 %v548
      %v962 = vpop.f32.mrf.mxu0
      %v963 = vadd.f32 %v914, %v962
      %v964 = vpop.f32.mrf.mxu0
      %v965 = vadd.f32 %v916, %v964
      %966 = vmatmul.bf16.gmra.mxu0 %v552
      %v967 = vpop.f32.mrf.mxu0
      %v968 = vadd.f32 %v919, %v967
      %v969 = vpop.f32.mrf.mxu0
      %v970 = vadd.f32 %v921, %v969
      %971 = vmatmul.bf16.gmra.mxu0 %v556
      %v972 = vpop.f32.mrf.mxu0
      %v973 = vadd.f32 %v924, %v972
      %v974 = vpop.f32.mrf.mxu0
      %v975 = vadd.f32 %v926, %v974
      %976 = vdwg.mxu0
      %v977 = vld [vmem:[%s311] sm:$0xff]
      %v978 = vld [vmem:[%s311 + $0x8] sm:$0xff]
      %v979 = vld [vmem:[%s311 + $0x10] sm:$0xff]
      %v980 = vld [vmem:[%s311 + $0x18] sm:$0xff]
      %v981 = vld [vmem:[%s311 + $0x20] sm:$0xff]
      %v982 = vld [vmem:[%s311 + $0x28] sm:$0xff]
      %v983 = vld [vmem:[%s311 + $0x30] sm:$0xff]
      %v984 = vld [vmem:[%s311 + $0x38] sm:$0xff]
      %v985 = vld [vmem:[%s311 + $0x40] sm:$0xff]
      %v986 = vld [vmem:[%s311 + $0x48] sm:$0xff]
      %v987 = vld [vmem:[%s311 + $0x50] sm:$0xff]
      %v988 = vld [vmem:[%s311 + $0x58] sm:$0xff]
      %v989 = vld [vmem:[%s311 + $0x60] sm:$0xff]
      %v990 = vld [vmem:[%s311 + $0x68] sm:$0xff]
      %v991 = vld [vmem:[%s311 + $0x70] sm:$0xff]
      %v992 = vld [vmem:[%s311 + $0x78] sm:$0xff]
      %v993 = vld [vmem:[%s311 + $0x80] sm:$0xff]
      %v994 = vld [vmem:[%s311 + $0x88] sm:$0xff]
      %v995 = vld [vmem:[%s311 + $0x90] sm:$0xff]
      %v996 = vld [vmem:[%s311 + $0x98] sm:$0xff]
      %v997 = vld [vmem:[%s311 + $0xa0] sm:$0xff]
      %v998 = vld [vmem:[%s311 + $0xa8] sm:$0xff]
      %v999 = vld [vmem:[%s311 + $0xb0] sm:$0xff]
      %v1000 = vld [vmem:[%s311 + $0xb8] sm:$0xff]
      %v1001 = vld [vmem:[%s311 + $0xc0] sm:$0xff]
      %v1002 = vld [vmem:[%s311 + $0xc8] sm:$0xff]
      %v1003 = vld [vmem:[%s311 + $0xd0] sm:$0xff]
      %v1004 = vld [vmem:[%s311 + $0xd8] sm:$0xff]
      %v1005 = vld [vmem:[%s311 + $0xe0] sm:$0xff]
      %v1006 = vld [vmem:[%s311 + $0xe8] sm:$0xff]
      %v1007 = vld [vmem:[%s311 + $0xf0] sm:$0xff]
      %v1008 = vld [vmem:[%s311 + $0xf8] sm:$0xff]
      %v1041 = vunpack.c.l.b16 %v977
      %v1042 = vunpack.c.h.b16 %v977
      %v1043 = vunpack.c.l.b16 %v978
      %v1044 = vunpack.c.h.b16 %v978
      %v1045 = vunpack.c.l.b16 %v979
      %v1046 = vunpack.c.h.b16 %v979
      %v1047 = vunpack.c.l.b16 %v980
      %v1048 = vunpack.c.h.b16 %v980
      %v1049 = vunpack.c.l.b16 %v981
      %v1050 = vunpack.c.h.b16 %v981
      %v1051 = vunpack.c.l.b16 %v982
      %v1052 = vunpack.c.h.b16 %v982
      %v1053 = vunpack.c.l.b16 %v983
      %v1054 = vunpack.c.h.b16 %v983
      %v1055 = vunpack.c.l.b16 %v984
      %v1056 = vunpack.c.h.b16 %v984
      %v1057 = vunpack.c.l.b16 %v985
      %v1058 = vunpack.c.h.b16 %v985
      %v1059 = vunpack.c.l.b16 %v986
      %v1060 = vunpack.c.h.b16 %v986
      %v1061 = vunpack.c.l.b16 %v987
      %v1062 = vunpack.c.h.b16 %v987
      %v1063 = vunpack.c.l.b16 %v988
      %v1064 = vunpack.c.h.b16 %v988
      %v1065 = vunpack.c.l.b16 %v989
      %v1066 = vunpack.c.h.b16 %v989
      %v1067 = vunpack.c.l.b16 %v990
      %v1068 = vunpack.c.h.b16 %v990
      %v1069 = vunpack.c.l.b16 %v991
      %v1070 = vunpack.c.h.b16 %v991
      %v1071 = vunpack.c.l.b16 %v992
      %v1072 = vunpack.c.h.b16 %v992
      %v1073 = vunpack.c.l.b16 %v993
      %v1074 = vunpack.c.h.b16 %v993
      %v1075 = vunpack.c.l.b16 %v994
      %v1076 = vunpack.c.h.b16 %v994
      %v1077 = vunpack.c.l.b16 %v995
      %v1078 = vunpack.c.h.b16 %v995
      %v1079 = vunpack.c.l.b16 %v996
      %v1080 = vunpack.c.h.b16 %v996
      %v1081 = vunpack.c.l.b16 %v997
      %v1082 = vunpack.c.h.b16 %v997
      %v1083 = vunpack.c.l.b16 %v998
      %v1084 = vunpack.c.h.b16 %v998
      %v1085 = vunpack.c.l.b16 %v999
      %v1086 = vunpack.c.h.b16 %v999
      %v1087 = vunpack.c.l.b16 %v1000
      %v1088 = vunpack.c.h.b16 %v1000
      %v1089 = vunpack.c.l.b16 %v1001
      %v1090 = vunpack.c.h.b16 %v1001
      %v1091 = vunpack.c.l.b16 %v1002
      %v1092 = vunpack.c.h.b16 %v1002
      %v1093 = vunpack.c.l.b16 %v1003
      %v1094 = vunpack.c.h.b16 %v1003
      %v1095 = vunpack.c.l.b16 %v1004
      %v1096 = vunpack.c.h.b16 %v1004
      %v1097 = vunpack.c.l.b16 %v1005
      %v1098 = vunpack.c.h.b16 %v1005
      %v1099 = vunpack.c.l.b16 %v1006
      %v1100 = vunpack.c.h.b16 %v1006
      %v1101 = vunpack.c.l.b16 %v1007
      %v1102 = vunpack.c.h.b16 %v1007
      %v1103 = vunpack.c.l.b16 %v1008
      %v1104 = vunpack.c.h.b16 %v1008
      %v1105 = vpack.c.b16 %v1045, %v1041
      %v1106 = vpack.c.b16 %v1046, %v1042
      %v1107 = vpack.c.b16 %v1047, %v1043
      %v1108 = vpack.c.b16 %v1048, %v1044
      %v1109 = vpack.c.b16 %v1053, %v1049
      %v1110 = vpack.c.b16 %v1054, %v1050
      %v1111 = vpack.c.b16 %v1055, %v1051
      %v1112 = vpack.c.b16 %v1056, %v1052
      %v1113 = vpack.c.b16 %v1061, %v1057
      %v1114 = vpack.c.b16 %v1062, %v1058
      %v1115 = vpack.c.b16 %v1063, %v1059
      %v1116 = vpack.c.b16 %v1064, %v1060
      %v1117 = vpack.c.b16 %v1069, %v1065
      %v1118 = vpack.c.b16 %v1070, %v1066
      %v1119 = vpack.c.b16 %v1071, %v1067
      %v1120 = vpack.c.b16 %v1072, %v1068
      %v1121 = vpack.c.b16 %v1077, %v1073
      %v1122 = vpack.c.b16 %v1078, %v1074
      %v1123 = vpack.c.b16 %v1079, %v1075
      %v1124 = vpack.c.b16 %v1080, %v1076
      %v1125 = vpack.c.b16 %v1085, %v1081
      %v1126 = vpack.c.b16 %v1086, %v1082
      %v1127 = vpack.c.b16 %v1087, %v1083
      %v1128 = vpack.c.b16 %v1088, %v1084
      %v1129 = vpack.c.b16 %v1093, %v1089
      %v1130 = vpack.c.b16 %v1094, %v1090
      %v1131 = vpack.c.b16 %v1095, %v1091
      %v1132 = vpack.c.b16 %v1096, %v1092
      %v1133 = vpack.c.b16 %v1101, %v1097
      %v1134 = vpack.c.b16 %v1102, %v1098
      %v1135 = vpack.c.b16 %v1103, %v1099
      %v1136 = vpack.c.b16 %v1104, %v1100
      %1169 = vmatpush.bf16.msra.mxu0 %v724
      %1170 = vmatpush.bf16.msra.mxu0 %v723
      %1171 = vmatpush.bf16.msra.mxu0 %v722
      %1172 = vmatpush.bf16.msra.mxu0 %v721
      %1173 = vmatpush.bf16.msra.mxu0 %v720
      %1174 = vmatpush.bf16.msra.mxu0 %v719
      %1175 = vmatpush.bf16.msra.mxu0 %v718
      %1176 = vmatpush.bf16.msra.mxu0 %v717
      %1177 = vmatmul.bf16.gmra.mxu0 %v1105
      %v1178 = vpop.f32.mrf.mxu0
      %v1179 = vadd.f32 0.0, %v1178
      %v1180 = vpop.f32.mrf.mxu0
      %v1181 = vadd.f32 0.0, %v1180
      %1182 = vmatmul.bf16.gmra.mxu0 %v1109
      %v1183 = vpop.f32.mrf.mxu0
      %v1184 = vadd.f32 0.0, %v1183
      %v1185 = vpop.f32.mrf.mxu0
      %v1186 = vadd.f32 0.0, %v1185
      %1187 = vmatmul.bf16.gmra.mxu0 %v1113
      %v1188 = vpop.f32.mrf.mxu0
      %v1189 = vadd.f32 0.0, %v1188
      %v1190 = vpop.f32.mrf.mxu0
      %v1191 = vadd.f32 0.0, %v1190
      %1192 = vmatmul.bf16.gmra.mxu0 %v1117
      %v1193 = vpop.f32.mrf.mxu0
      %v1194 = vadd.f32 0.0, %v1193
      %v1195 = vpop.f32.mrf.mxu0
      %v1196 = vadd.f32 0.0, %v1195
      %1197 = vmatmul.bf16.gmra.mxu0 %v1121
      %v1198 = vpop.f32.mrf.mxu0
      %v1199 = vadd.f32 0.0, %v1198
      %v1200 = vpop.f32.mrf.mxu0
      %v1201 = vadd.f32 0.0, %v1200
      %1202 = vmatmul.bf16.gmra.mxu0 %v1125
      %v1203 = vpop.f32.mrf.mxu0
      %v1204 = vadd.f32 0.0, %v1203
      %v1205 = vpop.f32.mrf.mxu0
      %v1206 = vadd.f32 0.0, %v1205
      %1207 = vmatmul.bf16.gmra.mxu0 %v1129
      %v1208 = vpop.f32.mrf.mxu0
      %v1209 = vadd.f32 0.0, %v1208
      %v1210 = vpop.f32.mrf.mxu0
      %v1211 = vadd.f32 0.0, %v1210
      %1212 = vmatmul.bf16.gmra.mxu0 %v1133
      %v1213 = vpop.f32.mrf.mxu0
      %v1214 = vadd.f32 0.0, %v1213
      %v1215 = vpop.f32.mrf.mxu0
      %v1216 = vadd.f32 0.0, %v1215
      %1217 = vdwg.mxu0
      %1218 = vmatpush.bf16.msra.mxu0 %v732
      %1219 = vmatpush.bf16.msra.mxu0 %v731
      %1220 = vmatpush.bf16.msra.mxu0 %v730
      %1221 = vmatpush.bf16.msra.mxu0 %v729
      %1222 = vmatpush.bf16.msra.mxu0 %v728
      %1223 = vmatpush.bf16.msra.mxu0 %v727
      %1224 = vmatpush.bf16.msra.mxu0 %v726
      %1225 = vmatpush.bf16.msra.mxu0 %v725
      %1226 = vmatmul.bf16.gmra.mxu0 %v1106
      %v1227 = vpop.f32.mrf.mxu0
      %v1228 = vadd.f32 %v1179, %v1227
      %v1229 = vpop.f32.mrf.mxu0
      %v1230 = vadd.f32 %v1181, %v1229
      %1231 = vmatmul.bf16.gmra.mxu0 %v1110
      %v1232 = vpop.f32.mrf.mxu0
      %v1233 = vadd.f32 %v1184, %v1232
      %v1234 = vpop.f32.mrf.mxu0
      %v1235 = vadd.f32 %v1186, %v1234
      %1236 = vmatmul.bf16.gmra.mxu0 %v1114
      %v1237 = vpop.f32.mrf.mxu0
      %v1238 = vadd.f32 %v1189, %v1237
      %v1239 = vpop.f32.mrf.mxu0
      %v1240 = vadd.f32 %v1191, %v1239
      %1241 = vmatmul.bf16.gmra.mxu0 %v1118
      %v1242 = vpop.f32.mrf.mxu0
      %v1243 = vadd.f32 %v1194, %v1242
      %v1244 = vpop.f32.mrf.mxu0
      %v1245 = vadd.f32 %v1196, %v1244
      %1246 = vmatmul.bf16.gmra.mxu0 %v1122
      %v1247 = vpop.f32.mrf.mxu0
      %v1248 = vadd.f32 %v1199, %v1247
      %v1249 = vpop.f32.mrf.mxu0
      %v1250 = vadd.f32 %v1201, %v1249
      %1251 = vmatmul.bf16.gmra.mxu0 %v1126
      %v1252 = vpop.f32.mrf.mxu0
      %v1253 = vadd.f32 %v1204, %v1252
      %v1254 = vpop.f32.mrf.mxu0
      %v1255 = vadd.f32 %v1206, %v1254
      %1256 = vmatmul.bf16.gmra.mxu0 %v1130
      %v1257 = vpop.f32.mrf.mxu0
      %v1258 = vadd.f32 %v1209, %v1257
      %v1259 = vpop.f32.mrf.mxu0
      %v1260 = vadd.f32 %v1211, %v1259
      %1261 = vmatmul.bf16.gmra.mxu0 %v1134
      %v1262 = vpop.f32.mrf.mxu0
      %v1263 = vadd.f32 %v1214, %v1262
      %v1264 = vpop.f32.mrf.mxu0
      %v1265 = vadd.f32 %v1216, %v1264
      %1266 = vdwg.mxu0
      %1267 = vmatpush.bf16.msra.mxu0 %v740
      %1268 = vmatpush.bf16.msra.mxu0 %v739
      %1269 = vmatpush.bf16.msra.mxu0 %v738
      %1270 = vmatpush.bf16.msra.mxu0 %v737
      %1271 = vmatpush.bf16.msra.mxu0 %v736
      %1272 = vmatpush.bf16.msra.mxu0 %v735
      %1273 = vmatpush.bf16.msra.mxu0 %v734
      %1274 = vmatpush.bf16.msra.mxu0 %v733
      %1275 = vmatmul.bf16.gmra.mxu0 %v1107
      %v1276 = vpop.f32.mrf.mxu0
      %v1277 = vadd.f32 %v1228, %v1276
      %v1278 = vpop.f32.mrf.mxu0
      %v1279 = vadd.f32 %v1230, %v1278
      %1280 = vmatmul.bf16.gmra.mxu0 %v1111
      %v1281 = vpop.f32.mrf.mxu0
      %v1282 = vadd.f32 %v1233, %v1281
      %v1283 = vpop.f32.mrf.mxu0
      %v1284 = vadd.f32 %v1235, %v1283
      %1285 = vmatmul.bf16.gmra.mxu0 %v1115
      %v1286 = vpop.f32.mrf.mxu0
      %v1287 = vadd.f32 %v1238, %v1286
      %v1288 = vpop.f32.mrf.mxu0
      %v1289 = vadd.f32 %v1240, %v1288
      %1290 = vmatmul.bf16.gmra.mxu0 %v1119
      %v1291 = vpop.f32.mrf.mxu0
      %v1292 = vadd.f32 %v1243, %v1291
      %v1293 = vpop.f32.mrf.mxu0
      %v1294 = vadd.f32 %v1245, %v1293
      %1295 = vmatmul.bf16.gmra.mxu0 %v1123
      %v1296 = vpop.f32.mrf.mxu0
      %v1297 = vadd.f32 %v1248, %v1296
      %v1298 = vpop.f32.mrf.mxu0
      %v1299 = vadd.f32 %v1250, %v1298
      %1300 = vmatmul.bf16.gmra.mxu0 %v1127
      %v1301 = vpop.f32.mrf.mxu0
      %v1302 = vadd.f32 %v1253, %v1301
      %v1303 = vpop.f32.mrf.mxu0
      %v1304 = vadd.f32 %v1255, %v1303
      %1305 = vmatmul.bf16.gmra.mxu0 %v1131
      %v1306 = vpop.f32.mrf.mxu0
      %v1307 = vadd.f32 %v1258, %v1306
      %v1308 = vpop.f32.mrf.mxu0
      %v1309 = vadd.f32 %v1260, %v1308
      %1310 = vmatmul.bf16.gmra.mxu0 %v1135
      %v1311 = vpop.f32.mrf.mxu0
      %v1312 = vadd.f32 %v1263, %v1311
      %v1313 = vpop.f32.mrf.mxu0
      %v1314 = vadd.f32 %v1265, %v1313
      %1315 = vdwg.mxu0
      %1316 = vmatpush.bf16.msra.mxu0 %v748
      %1317 = vmatpush.bf16.msra.mxu0 %v747
      %1318 = vmatpush.bf16.msra.mxu0 %v746
      %1319 = vmatpush.bf16.msra.mxu0 %v745
      %1320 = vmatpush.bf16.msra.mxu0 %v744
      %1321 = vmatpush.bf16.msra.mxu0 %v743
      %1322 = vmatpush.bf16.msra.mxu0 %v742
      %1323 = vmatpush.bf16.msra.mxu0 %v741
      %1324 = vmatmul.bf16.gmra.mxu0 %v1108
      %v1325 = vpop.f32.mrf.mxu0
      %v1326 = vadd.f32 %v1277, %v1325
      %v1327 = vpop.f32.mrf.mxu0
      %v1328 = vadd.f32 %v1279, %v1327
      %1329 = vmatmul.bf16.gmra.mxu0 %v1112
      %v1330 = vpop.f32.mrf.mxu0
      %v1331 = vadd.f32 %v1282, %v1330
      %v1332 = vpop.f32.mrf.mxu0
      %v1333 = vadd.f32 %v1284, %v1332
      %1334 = vmatmul.bf16.gmra.mxu0 %v1116
      %v1335 = vpop.f32.mrf.mxu0
      %v1336 = vadd.f32 %v1287, %v1335
      %v1337 = vpop.f32.mrf.mxu0
      %v1338 = vadd.f32 %v1289, %v1337
      %1339 = vmatmul.bf16.gmra.mxu0 %v1120
      %v1340 = vpop.f32.mrf.mxu0
      %v1341 = vadd.f32 %v1292, %v1340
      %v1342 = vpop.f32.mrf.mxu0
      %v1343 = vadd.f32 %v1294, %v1342
      %1344 = vmatmul.bf16.gmra.mxu0 %v1124
      %v1345 = vpop.f32.mrf.mxu0
      %v1346 = vadd.f32 %v1297, %v1345
      %v1347 = vpop.f32.mrf.mxu0
      %v1348 = vadd.f32 %v1299, %v1347
      %1349 = vmatmul.bf16.gmra.mxu0 %v1128
      %v1350 = vpop.f32.mrf.mxu0
      %v1351 = vadd.f32 %v1302, %v1350
      %v1352 = vpop.f32.mrf.mxu0
      %v1353 = vadd.f32 %v1304, %v1352
      %1354 = vmatmul.bf16.gmra.mxu0 %v1132
      %v1355 = vpop.f32.mrf.mxu0
      %v1356 = vadd.f32 %v1307, %v1355
      %v1357 = vpop.f32.mrf.mxu0
      %v1358 = vadd.f32 %v1309, %v1357
      %1359 = vmatmul.bf16.gmra.mxu0 %v1136
      %v1360 = vpop.f32.mrf.mxu0
      %v1361 = vadd.f32 %v1312, %v1360
      %v1362 = vpop.f32.mrf.mxu0
      %v1363 = vadd.f32 %v1314, %v1362
      %1364 = vdwg.mxu0
      %v1365 = vmax.f32 %v938, %v1326
      %v1366 = vmax.f32 %v940, %v1328
      %v1367 = vmax.f32 %v943, %v1331
      %v1368 = vmax.f32 %v945, %v1333
      %v1369 = vmax.f32 %v948, %v1336
      %v1370 = vmax.f32 %v950, %v1338
      %v1371 = vmax.f32 %v953, %v1341
      %v1372 = vmax.f32 %v955, %v1343
      %v1373 = vmax.f32 %v958, %v1346
      %v1374 = vmax.f32 %v960, %v1348
      %v1375 = vmax.f32 %v963, %v1351
      %v1376 = vmax.f32 %v965, %v1353
      %v1377 = vmax.f32 %v968, %v1356
      %v1378 = vmax.f32 %v970, %v1358
      %v1379 = vmax.f32 %v973, %v1361
      %v1380 = vmax.f32 %v975, %v1363
      %v1381 = vld [vmem:[%s318] sm:$0xff]
      %v1382 = vld [vmem:[%s318 + $0x8] sm:$0xff]
      %v1383 = vld [vmem:[%s318 + $0x10] sm:$0xff]
      %v1384 = vld [vmem:[%s318 + $0x18] sm:$0xff]
      %v1385 = vld [vmem:[%s318 + $0x20] sm:$0xff]
      %v1386 = vld [vmem:[%s318 + $0x28] sm:$0xff]
      %v1387 = vld [vmem:[%s318 + $0x30] sm:$0xff]
      %v1388 = vld [vmem:[%s318 + $0x38] sm:$0xff]
      %v1389 = vld [vmem:[%s318 + $0x40] sm:$0xff]
      %v1390 = vld [vmem:[%s318 + $0x48] sm:$0xff]
      %v1391 = vld [vmem:[%s318 + $0x50] sm:$0xff]
      %v1392 = vld [vmem:[%s318 + $0x58] sm:$0xff]
      %v1393 = vld [vmem:[%s318 + $0x60] sm:$0xff]
      %v1394 = vld [vmem:[%s318 + $0x68] sm:$0xff]
      %v1395 = vld [vmem:[%s318 + $0x70] sm:$0xff]
      %v1396 = vld [vmem:[%s318 + $0x78] sm:$0xff]
      %v1397 = vld [vmem:[%s318 + $0x80] sm:$0xff]
      %v1398 = vld [vmem:[%s318 + $0x88] sm:$0xff]
      %v1399 = vld [vmem:[%s318 + $0x90] sm:$0xff]
      %v1400 = vld [vmem:[%s318 + $0x98] sm:$0xff]
      %v1401 = vld [vmem:[%s318 + $0xa0] sm:$0xff]
      %v1402 = vld [vmem:[%s318 + $0xa8] sm:$0xff]
      %v1403 = vld [vmem:[%s318 + $0xb0] sm:$0xff]
      %v1404 = vld [vmem:[%s318 + $0xb8] sm:$0xff]
      %v1405 = vld [vmem:[%s318 + $0xc0] sm:$0xff]
      %v1406 = vld [vmem:[%s318 + $0xc8] sm:$0xff]
      %v1407 = vld [vmem:[%s318 + $0xd0] sm:$0xff]
      %v1408 = vld [vmem:[%s318 + $0xd8] sm:$0xff]
      %v1409 = vld [vmem:[%s318 + $0xe0] sm:$0xff]
      %v1410 = vld [vmem:[%s318 + $0xe8] sm:$0xff]
      %v1411 = vld [vmem:[%s318 + $0xf0] sm:$0xff]
      %v1412 = vld [vmem:[%s318 + $0xf8] sm:$0xff]
      %v1445 = vunpack.c.l.b16 %v1381
      %v1446 = vunpack.c.h.b16 %v1381
      %v1447 = vunpack.c.l.b16 %v1382
      %v1448 = vunpack.c.h.b16 %v1382
      %v1449 = vunpack.c.l.b16 %v1383
      %v1450 = vunpack.c.h.b16 %v1383
      %v1451 = vunpack.c.l.b16 %v1384
      %v1452 = vunpack.c.h.b16 %v1384
      %v1453 = vunpack.c.l.b16 %v1385
      %v1454 = vunpack.c.h.b16 %v1385
      %v1455 = vunpack.c.l.b16 %v1386
      %v1456 = vunpack.c.h.b16 %v1386
      %v1457 = vunpack.c.l.b16 %v1387
      %v1458 = vunpack.c.h.b16 %v1387
      %v1459 = vunpack.c.l.b16 %v1388
      %v1460 = vunpack.c.h.b16 %v1388
      %v1461 = vunpack.c.l.b16 %v1389
      %v1462 = vunpack.c.h.b16 %v1389
      %v1463 = vunpack.c.l.b16 %v1390
      %v1464 = vunpack.c.h.b16 %v1390
      %v1465 = vunpack.c.l.b16 %v1391
      %v1466 = vunpack.c.h.b16 %v1391
      %v1467 = vunpack.c.l.b16 %v1392
      %v1468 = vunpack.c.h.b16 %v1392
      %v1469 = vunpack.c.l.b16 %v1393
      %v1470 = vunpack.c.h.b16 %v1393
      %v1471 = vunpack.c.l.b16 %v1394
      %v1472 = vunpack.c.h.b16 %v1394
      %v1473 = vunpack.c.l.b16 %v1395
      %v1474 = vunpack.c.h.b16 %v1395
      %v1475 = vunpack.c.l.b16 %v1396
      %v1476 = vunpack.c.h.b16 %v1396
      %v1477 = vunpack.c.l.b16 %v1397
      %v1478 = vunpack.c.h.b16 %v1397
      %v1479 = vunpack.c.l.b16 %v1398
      %v1480 = vunpack.c.h.b16 %v1398
      %v1481 = vunpack.c.l.b16 %v1399
      %v1482 = vunpack.c.h.b16 %v1399
      %v1483 = vunpack.c.l.b16 %v1400
      %v1484 = vunpack.c.h.b16 %v1400
      %v1485 = vunpack.c.l.b16 %v1401
      %v1486 = vunpack.c.h.b16 %v1401
      %v1487 = vunpack.c.l.b16 %v1402
      %v1488 = vunpack.c.h.b16 %v1402
      %v1489 = vunpack.c.l.b16 %v1403
      %v1490 = vunpack.c.h.b16 %v1403
      %v1491 = vunpack.c.l.b16 %v1404
      %v1492 = vunpack.c.h.b16 %v1404
      %v1493 = vunpack.c.l.b16 %v1405
      %v1494 = vunpack.c.h.b16 %v1405
      %v1495 = vunpack.c.l.b16 %v1406
      %v1496 = vunpack.c.h.b16 %v1406
      %v1497 = vunpack.c.l.b16 %v1407
      %v1498 = vunpack.c.h.b16 %v1407
      %v1499 = vunpack.c.l.b16 %v1408
      %v1500 = vunpack.c.h.b16 %v1408
      %v1501 = vunpack.c.l.b16 %v1409
      %v1502 = vunpack.c.h.b16 %v1409
      %v1503 = vunpack.c.l.b16 %v1410
      %v1504 = vunpack.c.h.b16 %v1410
      %v1505 = vunpack.c.l.b16 %v1411
      %v1506 = vunpack.c.h.b16 %v1411
      %v1507 = vunpack.c.l.b16 %v1412
      %v1508 = vunpack.c.h.b16 %v1412
      %v1509 = vpack.c.b16 %v1449, %v1445
      %v1510 = vpack.c.b16 %v1450, %v1446
      %v1511 = vpack.c.b16 %v1451, %v1447
      %v1512 = vpack.c.b16 %v1452, %v1448
      %v1513 = vpack.c.b16 %v1457, %v1453
      %v1514 = vpack.c.b16 %v1458, %v1454
      %v1515 = vpack.c.b16 %v1459, %v1455
      %v1516 = vpack.c.b16 %v1460, %v1456
      %v1517 = vpack.c.b16 %v1465, %v1461
      %v1518 = vpack.c.b16 %v1466, %v1462
      %v1519 = vpack.c.b16 %v1467, %v1463
      %v1520 = vpack.c.b16 %v1468, %v1464
      %v1521 = vpack.c.b16 %v1473, %v1469
      %v1522 = vpack.c.b16 %v1474, %v1470
      %v1523 = vpack.c.b16 %v1475, %v1471
      %v1524 = vpack.c.b16 %v1476, %v1472
      %v1525 = vpack.c.b16 %v1481, %v1477
      %v1526 = vpack.c.b16 %v1482, %v1478
      %v1527 = vpack.c.b16 %v1483, %v1479
      %v1528 = vpack.c.b16 %v1484, %v1480
      %v1529 = vpack.c.b16 %v1489, %v1485
      %v1530 = vpack.c.b16 %v1490, %v1486
      %v1531 = vpack.c.b16 %v1491, %v1487
      %v1532 = vpack.c.b16 %v1492, %v1488
      %v1533 = vpack.c.b16 %v1497, %v1493
      %v1534 = vpack.c.b16 %v1498, %v1494
      %v1535 = vpack.c.b16 %v1499, %v1495
      %v1536 = vpack.c.b16 %v1500, %v1496
      %v1537 = vpack.c.b16 %v1505, %v1501
      %v1538 = vpack.c.b16 %v1506, %v1502
      %v1539 = vpack.c.b16 %v1507, %v1503
      %v1540 = vpack.c.b16 %v1508, %v1504
      %1573 = vmatpush.bf16.msra.mxu0 %v724
      %1574 = vmatpush.bf16.msra.mxu0 %v723
      %1575 = vmatpush.bf16.msra.mxu0 %v722
      %1576 = vmatpush.bf16.msra.mxu0 %v721
      %1577 = vmatpush.bf16.msra.mxu0 %v720
      %1578 = vmatpush.bf16.msra.mxu0 %v719
      %1579 = vmatpush.bf16.msra.mxu0 %v718
      %1580 = vmatpush.bf16.msra.mxu0 %v717
      %1581 = vmatmul.bf16.gmra.mxu0 %v1509
      %v1582 = vpop.f32.mrf.mxu0
      %v1583 = vadd.f32 0.0, %v1582
      %v1584 = vpop.f32.mrf.mxu0
      %v1585 = vadd.f32 0.0, %v1584
      %1586 = vmatmul.bf16.gmra.mxu0 %v1513
      %v1587 = vpop.f32.mrf.mxu0
      %v1588 = vadd.f32 0.0, %v1587
      %v1589 = vpop.f32.mrf.mxu0
      %v1590 = vadd.f32 0.0, %v1589
      %1591 = vmatmul.bf16.gmra.mxu0 %v1517
      %v1592 = vpop.f32.mrf.mxu0
      %v1593 = vadd.f32 0.0, %v1592
      %v1594 = vpop.f32.mrf.mxu0
      %v1595 = vadd.f32 0.0, %v1594
      %1596 = vmatmul.bf16.gmra.mxu0 %v1521
      %v1597 = vpop.f32.mrf.mxu0
      %v1598 = vadd.f32 0.0, %v1597
      %v1599 = vpop.f32.mrf.mxu0
      %v1600 = vadd.f32 0.0, %v1599
      %1601 = vmatmul.bf16.gmra.mxu0 %v1525
      %v1602 = vpop.f32.mrf.mxu0
      %v1603 = vadd.f32 0.0, %v1602
      %v1604 = vpop.f32.mrf.mxu0
      %v1605 = vadd.f32 0.0, %v1604
      %1606 = vmatmul.bf16.gmra.mxu0 %v1529
      %v1607 = vpop.f32.mrf.mxu0
      %v1608 = vadd.f32 0.0, %v1607
      %v1609 = vpop.f32.mrf.mxu0
      %v1610 = vadd.f32 0.0, %v1609
      %1611 = vmatmul.bf16.gmra.mxu0 %v1533
      %v1612 = vpop.f32.mrf.mxu0
      %v1613 = vadd.f32 0.0, %v1612
      %v1614 = vpop.f32.mrf.mxu0
      %v1615 = vadd.f32 0.0, %v1614
      %1616 = vmatmul.bf16.gmra.mxu0 %v1537
      %v1617 = vpop.f32.mrf.mxu0
      %v1618 = vadd.f32 0.0, %v1617
      %v1619 = vpop.f32.mrf.mxu0
      %v1620 = vadd.f32 0.0, %v1619
      %1621 = vdwg.mxu0
      %1622 = vmatpush.bf16.msra.mxu0 %v732
      %1623 = vmatpush.bf16.msra.mxu0 %v731
      %1624 = vmatpush.bf16.msra.mxu0 %v730
      %1625 = vmatpush.bf16.msra.mxu0 %v729
      %1626 = vmatpush.bf16.msra.mxu0 %v728
      %1627 = vmatpush.bf16.msra.mxu0 %v727
      %1628 = vmatpush.bf16.msra.mxu0 %v726
      %1629 = vmatpush.bf16.msra.mxu0 %v725
      %1630 = vmatmul.bf16.gmra.mxu0 %v1510
      %v1631 = vpop.f32.mrf.mxu0
      %v1632 = vadd.f32 %v1583, %v1631
      %v1633 = vpop.f32.mrf.mxu0
      %v1634 = vadd.f32 %v1585, %v1633
      %1635 = vmatmul.bf16.gmra.mxu0 %v1514
      %v1636 = vpop.f32.mrf.mxu0
      %v1637 = vadd.f32 %v1588, %v1636
      %v1638 = vpop.f32.mrf.mxu0
      %v1639 = vadd.f32 %v1590, %v1638
      %1640 = vmatmul.bf16.gmra.mxu0 %v1518
      %v1641 = vpop.f32.mrf.mxu0
      %v1642 = vadd.f32 %v1593, %v1641
      %v1643 = vpop.f32.mrf.mxu0
      %v1644 = vadd.f32 %v1595, %v1643
      %1645 = vmatmul.bf16.gmra.mxu0 %v1522
      %v1646 = vpop.f32.mrf.mxu0
      %v1647 = vadd.f32 %v1598, %v1646
      %v1648 = vpop.f32.mrf.mxu0
      %v1649 = vadd.f32 %v1600, %v1648
      %1650 = vmatmul.bf16.gmra.mxu0 %v1526
      %v1651 = vpop.f32.mrf.mxu0
      %v1652 = vadd.f32 %v1603, %v1651
      %v1653 = vpop.f32.mrf.mxu0
      %v1654 = vadd.f32 %v1605, %v1653
      %1655 = vmatmul.bf16.gmra.mxu0 %v1530
      %v1656 = vpop.f32.mrf.mxu0
      %v1657 = vadd.f32 %v1608, %v1656
      %v1658 = vpop.f32.mrf.mxu0
      %v1659 = vadd.f32 %v1610, %v1658
      %1660 = vmatmul.bf16.gmra.mxu0 %v1534
      %v1661 = vpop.f32.mrf.mxu0
      %v1662 = vadd.f32 %v1613, %v1661
      %v1663 = vpop.f32.mrf.mxu0
      %v1664 = vadd.f32 %v1615, %v1663
      %1665 = vmatmul.bf16.gmra.mxu0 %v1538
      %v1666 = vpop.f32.mrf.mxu0
      %v1667 = vadd.f32 %v1618, %v1666
      %v1668 = vpop.f32.mrf.mxu0
      %v1669 = vadd.f32 %v1620, %v1668
      %1670 = vdwg.mxu0
      %1671 = vmatpush.bf16.msra.mxu0 %v740
      %1672 = vmatpush.bf16.msra.mxu0 %v739
      %1673 = vmatpush.bf16.msra.mxu0 %v738
      %1674 = vmatpush.bf16.msra.mxu0 %v737
      %1675 = vmatpush.bf16.msra.mxu0 %v736
      %1676 = vmatpush.bf16.msra.mxu0 %v735
      %1677 = vmatpush.bf16.msra.mxu0 %v734
      %1678 = vmatpush.bf16.msra.mxu0 %v733
      %1679 = vmatmul.bf16.gmra.mxu0 %v1511
      %v1680 = vpop.f32.mrf.mxu0
      %v1681 = vadd.f32 %v1632, %v1680
      %v1682 = vpop.f32.mrf.mxu0
      %v1683 = vadd.f32 %v1634, %v1682
      %1684 = vmatmul.bf16.gmra.mxu0 %v1515
      %v1685 = vpop.f32.mrf.mxu0
      %v1686 = vadd.f32 %v1637, %v1685
      %v1687 = vpop.f32.mrf.mxu0
      %v1688 = vadd.f32 %v1639, %v1687
      %1689 = vmatmul.bf16.gmra.mxu0 %v1519
      %v1690 = vpop.f32.mrf.mxu0
      %v1691 = vadd.f32 %v1642, %v1690
      %v1692 = vpop.f32.mrf.mxu0
      %v1693 = vadd.f32 %v1644, %v1692
      %1694 = vmatmul.bf16.gmra.mxu0 %v1523
      %v1695 = vpop.f32.mrf.mxu0
      %v1696 = vadd.f32 %v1647, %v1695
      %v1697 = vpop.f32.mrf.mxu0
      %v1698 = vadd.f32 %v1649, %v1697
      %1699 = vmatmul.bf16.gmra.mxu0 %v1527
      %v1700 = vpop.f32.mrf.mxu0
      %v1701 = vadd.f32 %v1652, %v1700
      %v1702 = vpop.f32.mrf.mxu0
      %v1703 = vadd.f32 %v1654, %v1702
      %1704 = vmatmul.bf16.gmra.mxu0 %v1531
      %v1705 = vpop.f32.mrf.mxu0
      %v1706 = vadd.f32 %v1657, %v1705
      %v1707 = vpop.f32.mrf.mxu0
      %v1708 = vadd.f32 %v1659, %v1707
      %1709 = vmatmul.bf16.gmra.mxu0 %v1535
      %v1710 = vpop.f32.mrf.mxu0
      %v1711 = vadd.f32 %v1662, %v1710
      %v1712 = vpop.f32.mrf.mxu0
      %v1713 = vadd.f32 %v1664, %v1712
      %1714 = vmatmul.bf16.gmra.mxu0 %v1539
      %v1715 = vpop.f32.mrf.mxu0
      %v1716 = vadd.f32 %v1667, %v1715
      %v1717 = vpop.f32.mrf.mxu0
      %v1718 = vadd.f32 %v1669, %v1717
      %1719 = vdwg.mxu0
      %1720 = vmatpush.bf16.msra.mxu0 %v748
      %1721 = vmatpush.bf16.msra.mxu0 %v747
      %1722 = vmatpush.bf16.msra.mxu0 %v746
      %1723 = vmatpush.bf16.msra.mxu0 %v745
      %1724 = vmatpush.bf16.msra.mxu0 %v744
      %1725 = vmatpush.bf16.msra.mxu0 %v743
      %1726 = vmatpush.bf16.msra.mxu0 %v742
      %1727 = vmatpush.bf16.msra.mxu0 %v741
      %1728 = vmatmul.bf16.gmra.mxu0 %v1512
      %v1729 = vpop.f32.mrf.mxu0
      %v1730 = vadd.f32 %v1681, %v1729
      %v1731 = vpop.f32.mrf.mxu0
      %v1732 = vadd.f32 %v1683, %v1731
      %1733 = vmatmul.bf16.gmra.mxu0 %v1516
      %v1734 = vpop.f32.mrf.mxu0
      %v1735 = vadd.f32 %v1686, %v1734
      %v1736 = vpop.f32.mrf.mxu0
      %v1737 = vadd.f32 %v1688, %v1736
      %1738 = vmatmul.bf16.gmra.mxu0 %v1520
      %v1739 = vpop.f32.mrf.mxu0
      %v1740 = vadd.f32 %v1691, %v1739
      %v1741 = vpop.f32.mrf.mxu0
      %v1742 = vadd.f32 %v1693, %v1741
      %1743 = vmatmul.bf16.gmra.mxu0 %v1524
      %v1744 = vpop.f32.mrf.mxu0
      %v1745 = vadd.f32 %v1696, %v1744
      %v1746 = vpop.f32.mrf.mxu0
      %v1747 = vadd.f32 %v1698, %v1746
      %1748 = vmatmul.bf16.gmra.mxu0 %v1528
      %v1749 = vpop.f32.mrf.mxu0
      %v1750 = vadd.f32 %v1701, %v1749
      %v1751 = vpop.f32.mrf.mxu0
      %v1752 = vadd.f32 %v1703, %v1751
      %1753 = vmatmul.bf16.gmra.mxu0 %v1532
      %v1754 = vpop.f32.mrf.mxu0
      %v1755 = vadd.f32 %v1706, %v1754
      %v1756 = vpop.f32.mrf.mxu0
      %v1757 = vadd.f32 %v1708, %v1756
      %1758 = vmatmul.bf16.gmra.mxu0 %v1536
      %v1759 = vpop.f32.mrf.mxu0
      %v1760 = vadd.f32 %v1711, %v1759
      %v1761 = vpop.f32.mrf.mxu0
      %v1762 = vadd.f32 %v1713, %v1761
      %1763 = vmatmul.bf16.gmra.mxu0 %v1540
      %v1764 = vpop.f32.mrf.mxu0
      %v1765 = vadd.f32 %v1716, %v1764
      %v1766 = vpop.f32.mrf.mxu0
      %v1767 = vadd.f32 %v1718, %v1766
      %1768 = vdwg.mxu0
      %v1769 = vld [vmem:[%s325] sm:$0xff]
      %v1770 = vld [vmem:[%s325 + $0x8] sm:$0xff]
      %v1771 = vld [vmem:[%s325 + $0x10] sm:$0xff]
      %v1772 = vld [vmem:[%s325 + $0x18] sm:$0xff]
      %v1773 = vld [vmem:[%s325 + $0x20] sm:$0xff]
      %v1774 = vld [vmem:[%s325 + $0x28] sm:$0xff]
      %v1775 = vld [vmem:[%s325 + $0x30] sm:$0xff]
      %v1776 = vld [vmem:[%s325 + $0x38] sm:$0xff]
      %v1777 = vld [vmem:[%s325 + $0x40] sm:$0xff]
      %v1778 = vld [vmem:[%s325 + $0x48] sm:$0xff]
      %v1779 = vld [vmem:[%s325 + $0x50] sm:$0xff]
      %v1780 = vld [vmem:[%s325 + $0x58] sm:$0xff]
      %v1781 = vld [vmem:[%s325 + $0x60] sm:$0xff]
      %v1782 = vld [vmem:[%s325 + $0x68] sm:$0xff]
      %v1783 = vld [vmem:[%s325 + $0x70] sm:$0xff]
      %v1784 = vld [vmem:[%s325 + $0x78] sm:$0xff]
      %v1785 = vld [vmem:[%s325 + $0x80] sm:$0xff]
      %v1786 = vld [vmem:[%s325 + $0x88] sm:$0xff]
      %v1787 = vld [vmem:[%s325 + $0x90] sm:$0xff]
      %v1788 = vld [vmem:[%s325 + $0x98] sm:$0xff]
      %v1789 = vld [vmem:[%s325 + $0xa0] sm:$0xff]
      %v1790 = vld [vmem:[%s325 + $0xa8] sm:$0xff]
      %v1791 = vld [vmem:[%s325 + $0xb0] sm:$0xff]
      %v1792 = vld [vmem:[%s325 + $0xb8] sm:$0xff]
      %v1793 = vld [vmem:[%s325 + $0xc0] sm:$0xff]
      %v1794 = vld [vmem:[%s325 + $0xc8] sm:$0xff]
      %v1795 = vld [vmem:[%s325 + $0xd0] sm:$0xff]
      %v1796 = vld [vmem:[%s325 + $0xd8] sm:$0xff]
      %v1797 = vld [vmem:[%s325 + $0xe0] sm:$0xff]
      %v1798 = vld [vmem:[%s325 + $0xe8] sm:$0xff]
      %v1799 = vld [vmem:[%s325 + $0xf0] sm:$0xff]
      %v1800 = vld [vmem:[%s325 + $0xf8] sm:$0xff]
      %v1833 = vunpack.c.l.b16 %v1769
      %v1834 = vunpack.c.h.b16 %v1769
      %v1835 = vunpack.c.l.b16 %v1770
      %v1836 = vunpack.c.h.b16 %v1770
      %v1837 = vunpack.c.l.b16 %v1771
      %v1838 = vunpack.c.h.b16 %v1771
      %v1839 = vunpack.c.l.b16 %v1772
      %v1840 = vunpack.c.h.b16 %v1772
      %v1841 = vunpack.c.l.b16 %v1773
      %v1842 = vunpack.c.h.b16 %v1773
      %v1843 = vunpack.c.l.b16 %v1774
      %v1844 = vunpack.c.h.b16 %v1774
      %v1845 = vunpack.c.l.b16 %v1775
      %v1846 = vunpack.c.h.b16 %v1775
      %v1847 = vunpack.c.l.b16 %v1776
      %v1848 = vunpack.c.h.b16 %v1776
      %v1849 = vunpack.c.l.b16 %v1777
      %v1850 = vunpack.c.h.b16 %v1777
      %v1851 = vunpack.c.l.b16 %v1778
      %v1852 = vunpack.c.h.b16 %v1778
      %v1853 = vunpack.c.l.b16 %v1779
      %v1854 = vunpack.c.h.b16 %v1779
      %v1855 = vunpack.c.l.b16 %v1780
      %v1856 = vunpack.c.h.b16 %v1780
      %v1857 = vunpack.c.l.b16 %v1781
      %v1858 = vunpack.c.h.b16 %v1781
      %v1859 = vunpack.c.l.b16 %v1782
      %v1860 = vunpack.c.h.b16 %v1782
      %v1861 = vunpack.c.l.b16 %v1783
      %v1862 = vunpack.c.h.b16 %v1783
      %v1863 = vunpack.c.l.b16 %v1784
      %v1864 = vunpack.c.h.b16 %v1784
      %v1865 = vunpack.c.l.b16 %v1785
      %v1866 = vunpack.c.h.b16 %v1785
      %v1867 = vunpack.c.l.b16 %v1786
      %v1868 = vunpack.c.h.b16 %v1786
      %v1869 = vunpack.c.l.b16 %v1787
      %v1870 = vunpack.c.h.b16 %v1787
      %v1871 = vunpack.c.l.b16 %v1788
      %v1872 = vunpack.c.h.b16 %v1788
      %v1873 = vunpack.c.l.b16 %v1789
      %v1874 = vunpack.c.h.b16 %v1789
      %v1875 = vunpack.c.l.b16 %v1790
      %v1876 = vunpack.c.h.b16 %v1790
      %v1877 = vunpack.c.l.b16 %v1791
      %v1878 = vunpack.c.h.b16 %v1791
      %v1879 = vunpack.c.l.b16 %v1792
      %v1880 = vunpack.c.h.b16 %v1792
      %v1881 = vunpack.c.l.b16 %v1793
      %v1882 = vunpack.c.h.b16 %v1793
      %v1883 = vunpack.c.l.b16 %v1794
      %v1884 = vunpack.c.h.b16 %v1794
      %v1885 = vunpack.c.l.b16 %v1795
      %v1886 = vunpack.c.h.b16 %v1795
      %v1887 = vunpack.c.l.b16 %v1796
      %v1888 = vunpack.c.h.b16 %v1796
      %v1889 = vunpack.c.l.b16 %v1797
      %v1890 = vunpack.c.h.b16 %v1797
      %v1891 = vunpack.c.l.b16 %v1798
      %v1892 = vunpack.c.h.b16 %v1798
      %v1893 = vunpack.c.l.b16 %v1799
      %v1894 = vunpack.c.h.b16 %v1799
      %v1895 = vunpack.c.l.b16 %v1800
      %v1896 = vunpack.c.h.b16 %v1800
      %v1897 = vpack.c.b16 %v1837, %v1833
      %v1898 = vpack.c.b16 %v1838, %v1834
      %v1899 = vpack.c.b16 %v1839, %v1835
      %v1900 = vpack.c.b16 %v1840, %v1836
      %v1901 = vpack.c.b16 %v1845, %v1841
      %v1902 = vpack.c.b16 %v1846, %v1842
      %v1903 = vpack.c.b16 %v1847, %v1843
      %v1904 = vpack.c.b16 %v1848, %v1844
      %v1905 = vpack.c.b16 %v1853, %v1849
      %v1906 = vpack.c.b16 %v1854, %v1850
      %v1907 = vpack.c.b16 %v1855, %v1851
      %v1908 = vpack.c.b16 %v1856, %v1852
      %v1909 = vpack.c.b16 %v1861, %v1857
      %v1910 = vpack.c.b16 %v1862, %v1858
      %v1911 = vpack.c.b16 %v1863, %v1859
      %v1912 = vpack.c.b16 %v1864, %v1860
      %v1913 = vpack.c.b16 %v1869, %v1865
      %v1914 = vpack.c.b16 %v1870, %v1866
      %v1915 = vpack.c.b16 %v1871, %v1867
      %v1916 = vpack.c.b16 %v1872, %v1868
      %v1917 = vpack.c.b16 %v1877, %v1873
      %v1918 = vpack.c.b16 %v1878, %v1874
      %v1919 = vpack.c.b16 %v1879, %v1875
      %v1920 = vpack.c.b16 %v1880, %v1876
      %v1921 = vpack.c.b16 %v1885, %v1881
      %v1922 = vpack.c.b16 %v1886, %v1882
      %v1923 = vpack.c.b16 %v1887, %v1883
      %v1924 = vpack.c.b16 %v1888, %v1884
      %v1925 = vpack.c.b16 %v1893, %v1889
      %v1926 = vpack.c.b16 %v1894, %v1890
      %v1927 = vpack.c.b16 %v1895, %v1891
      %v1928 = vpack.c.b16 %v1896, %v1892
      %1961 = vmatpush.bf16.msra.mxu0 %v724
      %1962 = vmatpush.bf16.msra.mxu0 %v723
      %1963 = vmatpush.bf16.msra.mxu0 %v722
      %1964 = vmatpush.bf16.msra.mxu0 %v721
      %1965 = vmatpush.bf16.msra.mxu0 %v720
      %1966 = vmatpush.bf16.msra.mxu0 %v719
      %1967 = vmatpush.bf16.msra.mxu0 %v718
      %1968 = vmatpush.bf16.msra.mxu0 %v717
      %1969 = vmatmul.bf16.gmra.mxu0 %v1897
      %v1970 = vpop.f32.mrf.mxu0
      %v1971 = vadd.f32 0.0, %v1970
      %v1972 = vpop.f32.mrf.mxu0
      %v1973 = vadd.f32 0.0, %v1972
      %1974 = vmatmul.bf16.gmra.mxu0 %v1901
      %v1975 = vpop.f32.mrf.mxu0
      %v1976 = vadd.f32 0.0, %v1975
      %v1977 = vpop.f32.mrf.mxu0
      %v1978 = vadd.f32 0.0, %v1977
      %1979 = vmatmul.bf16.gmra.mxu0 %v1905
      %v1980 = vpop.f32.mrf.mxu0
      %v1981 = vadd.f32 0.0, %v1980
      %v1982 = vpop.f32.mrf.mxu0
      %v1983 = vadd.f32 0.0, %v1982
      %1984 = vmatmul.bf16.gmra.mxu0 %v1909
      %v1985 = vpop.f32.mrf.mxu0
      %v1986 = vadd.f32 0.0, %v1985
      %v1987 = vpop.f32.mrf.mxu0
      %v1988 = vadd.f32 0.0, %v1987
      %1989 = vmatmul.bf16.gmra.mxu0 %v1913
      %v1990 = vpop.f32.mrf.mxu0
      %v1991 = vadd.f32 0.0, %v1990
      %v1992 = vpop.f32.mrf.mxu0
      %v1993 = vadd.f32 0.0, %v1992
      %1994 = vmatmul.bf16.gmra.mxu0 %v1917
      %v1995 = vpop.f32.mrf.mxu0
      %v1996 = vadd.f32 0.0, %v1995
      %v1997 = vpop.f32.mrf.mxu0
      %v1998 = vadd.f32 0.0, %v1997
      %1999 = vmatmul.bf16.gmra.mxu0 %v1921
      %v2000 = vpop.f32.mrf.mxu0
      %v2001 = vadd.f32 0.0, %v2000
      %v2002 = vpop.f32.mrf.mxu0
      %v2003 = vadd.f32 0.0, %v2002
      %2004 = vmatmul.bf16.gmra.mxu0 %v1925
      %v2005 = vpop.f32.mrf.mxu0
      %v2006 = vadd.f32 0.0, %v2005
      %v2007 = vpop.f32.mrf.mxu0
      %v2008 = vadd.f32 0.0, %v2007
      %2009 = vdwg.mxu0
      %2010 = vmatpush.bf16.msra.mxu0 %v732
      %2011 = vmatpush.bf16.msra.mxu0 %v731
      %2012 = vmatpush.bf16.msra.mxu0 %v730
      %2013 = vmatpush.bf16.msra.mxu0 %v729
      %2014 = vmatpush.bf16.msra.mxu0 %v728
      %2015 = vmatpush.bf16.msra.mxu0 %v727
      %2016 = vmatpush.bf16.msra.mxu0 %v726
      %2017 = vmatpush.bf16.msra.mxu0 %v725
      %2018 = vmatmul.bf16.gmra.mxu0 %v1898
      %v2019 = vpop.f32.mrf.mxu0
      %v2020 = vadd.f32 %v1971, %v2019
      %v2021 = vpop.f32.mrf.mxu0
      %v2022 = vadd.f32 %v1973, %v2021
      %2023 = vmatmul.bf16.gmra.mxu0 %v1902
      %v2024 = vpop.f32.mrf.mxu0
      %v2025 = vadd.f32 %v1976, %v2024
      %v2026 = vpop.f32.mrf.mxu0
      %v2027 = vadd.f32 %v1978, %v2026
      %2028 = vmatmul.bf16.gmra.mxu0 %v1906
      %v2029 = vpop.f32.mrf.mxu0
      %v2030 = vadd.f32 %v1981, %v2029
      %v2031 = vpop.f32.mrf.mxu0
      %v2032 = vadd.f32 %v1983, %v2031
      %2033 = vmatmul.bf16.gmra.mxu0 %v1910
      %v2034 = vpop.f32.mrf.mxu0
      %v2035 = vadd.f32 %v1986, %v2034
      %v2036 = vpop.f32.mrf.mxu0
      %v2037 = vadd.f32 %v1988, %v2036
      %2038 = vmatmul.bf16.gmra.mxu0 %v1914
      %v2039 = vpop.f32.mrf.mxu0
      %v2040 = vadd.f32 %v1991, %v2039
      %v2041 = vpop.f32.mrf.mxu0
      %v2042 = vadd.f32 %v1993, %v2041
      %2043 = vmatmul.bf16.gmra.mxu0 %v1918
      %v2044 = vpop.f32.mrf.mxu0
      %v2045 = vadd.f32 %v1996, %v2044
      %v2046 = vpop.f32.mrf.mxu0
      %v2047 = vadd.f32 %v1998, %v2046
      %2048 = vmatmul.bf16.gmra.mxu0 %v1922
      %v2049 = vpop.f32.mrf.mxu0
      %v2050 = vadd.f32 %v2001, %v2049
      %v2051 = vpop.f32.mrf.mxu0
      %v2052 = vadd.f32 %v2003, %v2051
      %2053 = vmatmul.bf16.gmra.mxu0 %v1926
      %v2054 = vpop.f32.mrf.mxu0
      %v2055 = vadd.f32 %v2006, %v2054
      %v2056 = vpop.f32.mrf.mxu0
      %v2057 = vadd.f32 %v2008, %v2056
      %2058 = vdwg.mxu0
      %2059 = vmatpush.bf16.msra.mxu0 %v740
      %2060 = vmatpush.bf16.msra.mxu0 %v739
      %2061 = vmatpush.bf16.msra.mxu0 %v738
      %2062 = vmatpush.bf16.msra.mxu0 %v737
      %2063 = vmatpush.bf16.msra.mxu0 %v736
      %2064 = vmatpush.bf16.msra.mxu0 %v735
      %2065 = vmatpush.bf16.msra.mxu0 %v734
      %2066 = vmatpush.bf16.msra.mxu0 %v733
      %2067 = vmatmul.bf16.gmra.mxu0 %v1899
      %v2068 = vpop.f32.mrf.mxu0
      %v2069 = vadd.f32 %v2020, %v2068
      %v2070 = vpop.f32.mrf.mxu0
      %v2071 = vadd.f32 %v2022, %v2070
      %2072 = vmatmul.bf16.gmra.mxu0 %v1903
      %v2073 = vpop.f32.mrf.mxu0
      %v2074 = vadd.f32 %v2025, %v2073
      %v2075 = vpop.f32.mrf.mxu0
      %v2076 = vadd.f32 %v2027, %v2075
      %2077 = vmatmul.bf16.gmra.mxu0 %v1907
      %v2078 = vpop.f32.mrf.mxu0
      %v2079 = vadd.f32 %v2030, %v2078
      %v2080 = vpop.f32.mrf.mxu0
      %v2081 = vadd.f32 %v2032, %v2080
      %2082 = vmatmul.bf16.gmra.mxu0 %v1911
      %v2083 = vpop.f32.mrf.mxu0
      %v2084 = vadd.f32 %v2035, %v2083
      %v2085 = vpop.f32.mrf.mxu0
      %v2086 = vadd.f32 %v2037, %v2085
      %2087 = vmatmul.bf16.gmra.mxu0 %v1915
      %v2088 = vpop.f32.mrf.mxu0
      %v2089 = vadd.f32 %v2040, %v2088
      %v2090 = vpop.f32.mrf.mxu0
      %v2091 = vadd.f32 %v2042, %v2090
      %2092 = vmatmul.bf16.gmra.mxu0 %v1919
      %v2093 = vpop.f32.mrf.mxu0
      %v2094 = vadd.f32 %v2045, %v2093
      %v2095 = vpop.f32.mrf.mxu0
      %v2096 = vadd.f32 %v2047, %v2095
      %2097 = vmatmul.bf16.gmra.mxu0 %v1923
      %v2098 = vpop.f32.mrf.mxu0
      %v2099 = vadd.f32 %v2050, %v2098
      %v2100 = vpop.f32.mrf.mxu0
      %v2101 = vadd.f32 %v2052, %v2100
      %2102 = vmatmul.bf16.gmra.mxu0 %v1927
      %v2103 = vpop.f32.mrf.mxu0
      %v2104 = vadd.f32 %v2055, %v2103
      %v2105 = vpop.f32.mrf.mxu0
      %v2106 = vadd.f32 %v2057, %v2105
      %2107 = vdwg.mxu0
      %2108 = vmatpush.bf16.msra.mxu0 %v748
      %2109 = vmatpush.bf16.msra.mxu0 %v747
      %2110 = vmatpush.bf16.msra.mxu0 %v746
      %2111 = vmatpush.bf16.msra.mxu0 %v745
      %2112 = vmatpush.bf16.msra.mxu0 %v744
      %2113 = vmatpush.bf16.msra.mxu0 %v743
      %2114 = vmatpush.bf16.msra.mxu0 %v742
      %2115 = vmatpush.bf16.msra.mxu0 %v741
      %2116 = vmatmul.bf16.gmra.mxu0 %v1900
      %v2117 = vpop.f32.mrf.mxu0
      %v2118 = vadd.f32 %v2069, %v2117
      %v2119 = vpop.f32.mrf.mxu0
      %v2120 = vadd.f32 %v2071, %v2119
      %2121 = vmatmul.bf16.gmra.mxu0 %v1904
      %v2122 = vpop.f32.mrf.mxu0
      %v2123 = vadd.f32 %v2074, %v2122
      %v2124 = vpop.f32.mrf.mxu0
      %v2125 = vadd.f32 %v2076, %v2124
      %2126 = vmatmul.bf16.gmra.mxu0 %v1908
      %v2127 = vpop.f32.mrf.mxu0
      %v2128 = vadd.f32 %v2079, %v2127
      %v2129 = vpop.f32.mrf.mxu0
      %v2130 = vadd.f32 %v2081, %v2129
      %2131 = vmatmul.bf16.gmra.mxu0 %v1912
      %v2132 = vpop.f32.mrf.mxu0
      %v2133 = vadd.f32 %v2084, %v2132
      %v2134 = vpop.f32.mrf.mxu0
      %v2135 = vadd.f32 %v2086, %v2134
      %2136 = vmatmul.bf16.gmra.mxu0 %v1916
      %v2137 = vpop.f32.mrf.mxu0
      %v2138 = vadd.f32 %v2089, %v2137
      %v2139 = vpop.f32.mrf.mxu0
      %v2140 = vadd.f32 %v2091, %v2139
      %2141 = vmatmul.bf16.gmra.mxu0 %v1920
      %v2142 = vpop.f32.mrf.mxu0
      %v2143 = vadd.f32 %v2094, %v2142
      %v2144 = vpop.f32.mrf.mxu0
      %v2145 = vadd.f32 %v2096, %v2144
      %2146 = vmatmul.bf16.gmra.mxu0 %v1924
      %v2147 = vpop.f32.mrf.mxu0
      %v2148 = vadd.f32 %v2099, %v2147
      %v2149 = vpop.f32.mrf.mxu0
      %v2150 = vadd.f32 %v2101, %v2149
      %2151 = vmatmul.bf16.gmra.mxu0 %v1928
      %v2152 = vpop.f32.mrf.mxu0
      %v2153 = vadd.f32 %v2104, %v2152
      %v2154 = vpop.f32.mrf.mxu0
      %v2155 = vadd.f32 %v2106, %v2154
      %2156 = vdwg.mxu0
      %v2157 = vmax.f32 %v1730, %v2118
      %v2158 = vmax.f32 %v1732, %v2120
      %v2159 = vmax.f32 %v1735, %v2123
      %v2160 = vmax.f32 %v1737, %v2125
      %v2161 = vmax.f32 %v1740, %v2128
      %v2162 = vmax.f32 %v1742, %v2130
      %v2163 = vmax.f32 %v1745, %v2133
      %v2164 = vmax.f32 %v1747, %v2135
      %v2165 = vmax.f32 %v1750, %v2138
      %v2166 = vmax.f32 %v1752, %v2140
      %v2167 = vmax.f32 %v1755, %v2143
      %v2168 = vmax.f32 %v1757, %v2145
      %v2169 = vmax.f32 %v1760, %v2148
      %v2170 = vmax.f32 %v1762, %v2150
      %v2171 = vmax.f32 %v1765, %v2153
      %v2172 = vmax.f32 %v1767, %v2155
      %v2173 = vmax.f32 %v1365, %v2157
      %v2174 = vmax.f32 %v1366, %v2158
      %v2175 = vmax.f32 %v1367, %v2159
      %v2176 = vmax.f32 %v1368, %v2160
      %v2177 = vmax.f32 %v1369, %v2161
      %v2178 = vmax.f32 %v1370, %v2162
      %v2179 = vmax.f32 %v1371, %v2163
      %v2180 = vmax.f32 %v1372, %v2164
      %v2181 = vmax.f32 %v1373, %v2165
      %v2182 = vmax.f32 %v1374, %v2166
      %v2183 = vmax.f32 %v1375, %v2167
      %v2184 = vmax.f32 %v1376, %v2168
      %v2185 = vmax.f32 %v1377, %v2169
      %v2186 = vmax.f32 %v1378, %v2170
      %v2187 = vmax.f32 %v1379, %v2171
      %v2188 = vmax.f32 %v1380, %v2172
      %v2189 = vld [vmem:[%s5] sm:$0x1]
      %v2191 = vperm.slane %v2189, 0
      %v2193 = vadd.f32 %v2173, %v2191
      %v2194 = vadd.f32 %v2174, %v2191
      %v2195 = vadd.f32 %v2175, %v2191
      %v2196 = vadd.f32 %v2176, %v2191
      %v2197 = vadd.f32 %v2177, %v2191
      %v2198 = vadd.f32 %v2178, %v2191
      %v2199 = vadd.f32 %v2179, %v2191
      %v2200 = vadd.f32 %v2180, %v2191
      %v2201 = vadd.f32 %v2181, %v2191
      %v2202 = vadd.f32 %v2182, %v2191
      %v2203 = vadd.f32 %v2183, %v2191
      %v2204 = vadd.f32 %v2184, %v2191
      %v2205 = vadd.f32 %v2185, %v2191
      %v2206 = vadd.f32 %v2186, %v2191
      %v2207 = vadd.f32 %v2187, %v2191
      %v2208 = vadd.f32 %v2188, %v2191
      %v2209 = vmax.f32 %v2193, 0.0
      %v2210 = vmax.f32 %v2194, 0.0
      %v2211 = vmax.f32 %v2195, 0.0
      %v2212 = vmax.f32 %v2196, 0.0
      %v2213 = vmax.f32 %v2197, 0.0
      %v2214 = vmax.f32 %v2198, 0.0
      %v2215 = vmax.f32 %v2199, 0.0
      %v2216 = vmax.f32 %v2200, 0.0
      %v2217 = vmax.f32 %v2201, 0.0
      %v2218 = vmax.f32 %v2202, 0.0
      %v2219 = vmax.f32 %v2203, 0.0
      %v2220 = vmax.f32 %v2204, 0.0
      %v2221 = vmax.f32 %v2205, 0.0
      %v2222 = vmax.f32 %v2206, 0.0
      %v2223 = vmax.f32 %v2207, 0.0
      %v2224 = vmax.f32 %v2208, 0.0
      %v2225 = vpack.c.bf16 %v2209, %v2209
      %v2226 = vpack.c.bf16 %v2210, %v2210
      %v2227 = vpack.c.bf16 %v2211, %v2211
      %v2228 = vpack.c.bf16 %v2212, %v2212
      %v2229 = vpack.c.bf16 %v2213, %v2213
      %v2230 = vpack.c.bf16 %v2214, %v2214
      %v2231 = vpack.c.bf16 %v2215, %v2215
      %v2232 = vpack.c.bf16 %v2216, %v2216
      %v2233 = vpack.c.bf16 %v2217, %v2217
      %v2234 = vpack.c.bf16 %v2218, %v2218
      %v2235 = vpack.c.bf16 %v2219, %v2219
      %v2236 = vpack.c.bf16 %v2220, %v2220
      %v2237 = vpack.c.bf16 %v2221, %v2221
      %v2238 = vpack.c.bf16 %v2222, %v2222
      %v2239 = vpack.c.bf16 %v2223, %v2223
      %v2240 = vpack.c.bf16 %v2224, %v2224
      %2241 = vst [vmem:[%s331] sm:$0xf] %v2225
      %2242 = vst [vmem:[%s331 + $0x4] sm:$0xf] %v2226
      %2243 = vst [vmem:[%s331 + $0x8] sm:$0xf] %v2227
      %2244 = vst [vmem:[%s331 + $0xc] sm:$0xf] %v2228
      %2245 = vst [vmem:[%s331 + $0x10] sm:$0xf] %v2229
      %2246 = vst [vmem:[%s331 + $0x14] sm:$0xf] %v2230
      %2247 = vst [vmem:[%s331 + $0x18] sm:$0xf] %v2231
      %2248 = vst [vmem:[%s331 + $0x1c] sm:$0xf] %v2232
      %2249 = vst [vmem:[%s331 + $0x20] sm:$0xf] %v2233
      %2250 = vst [vmem:[%s331 + $0x24] sm:$0xf] %v2234
      %2251 = vst [vmem:[%s331 + $0x28] sm:$0xf] %v2235
      %2252 = vst [vmem:[%s331 + $0x2c] sm:$0xf] %v2236
      %2253 = vst [vmem:[%s331 + $0x30] sm:$0xf] %v2237
      %2254 = vst [vmem:[%s331 + $0x34] sm:$0xf] %v2238
      %2255 = vst [vmem:[%s331 + $0x38] sm:$0xf] %v2239
      %2256 = vst [vmem:[%s331 + $0x3c] sm:$0xf] %v2240
      %s2257 = smul.u32 16, %s17
      %p2258 = scmp.lt.s32.totalorder %s2257, 63
      %s2259 = scalar_select %p2258, %s2257, 63
      %s2260 = smul.addr %s2259, 4
      %s2261 = scalar_lea.vmem %s6, %s2260
      // Predicated region
      $region45: #{net_forward.3} parent=43 // pred_check
        %p2262 = pneg %p181
      $region46: #{net_forward.3} parent=43 // pred_check_branch
        %2264 = sbr.rel (%p2262) target = $region48
      $region47: #{net_forward.3} parent=43 // pred_region
        %s2265 = smul.u32 16, %s17
      $region48: #{net_forward.3} parent=43 // pred_fallthru
        _
    $region44: #{net_forward.3} parent=5 // pred_fallthru
      _
    %p2266 = scmp.le.s32.totalorder 2, %s12
    // Predicated region
    $region49: #{net_forward.3} parent=5 // pred_check
      %p2267 = pneg %p2266
    $region50: #{net_forward.3} parent=5 // pred_check_branch
      %2269 = sbr.rel (%p2267) target = $region52
    $region51: #{net_forward.3} parent=5 // pred_region
      %s2270 = ssub.s32 %s12, 2
      // Predicated region
      $region53: #{net_forward.3} parent=51 // pred_check
        %p2271 = pneg %p187
      $region54: #{net_forward.3} parent=51 // pred_check_branch
        %2273 = sbr.rel (%p2271) target = $region56
      $region55: #{net_forward.3} parent=51 // pred_region
        %s2274 = smul.u32 16, %s18
        %p2275 = scmp.lt.s32.totalorder %s2274, 63
        %s2276 = scalar_select %p2275, %s2274, 63
        %s2277 = smul.addr %s2276, 4
        %s2278 = scalar_lea.vmem %s6, %s2277
      $region56: #{net_forward.3} parent=51 // pred_fallthru
        _
    $region52: #{net_forward.3} parent=5 // pred_fallthru
      _
  $region6: #{net_forward.3} parent=0 // loop_footer
    %s16 = sadd.s32 1, %s12
  $region7: #{net_forward.3} parent=0 // loop_footer_branch
    %11 = sbr.rel target = $region3
  $region8: #{net_forward.3} parent=0 // loop_exit
    _

// kernel: net_forward.4
$region0: #{net_forward.4}
  #allocation0 [shape = 'u32[]', space=smem, size = 0x4, offset = 0x4, fixed_abs, tag = 'smem constant byte address 0x4 - core index']
  #allocation1 [shape = 'u32[72,128]{1,0:T(1,128)}', space=vmem, size = 0x9000, scoped, tag = 'internal scratch']
  %s0 = inlined_call_operand.vmem [shape: bf16[72,256], index: 0, kind: input, shape index: {}]
  %s1 = inlined_call_operand.vmem [shape: bf16[72,256], index: 1, kind: input, shape index: {}]
  %s2 = inlined_call_operand.vmem [shape: bf16[72,256], index: 2, kind: input, shape index: {}]
  %s3 = inlined_call_operand.vmem [shape: bf16[72,256], index: 3, kind: input, shape index: {}]
  %s4 = inlined_call_operand.vmem [shape: bf16[256,128], index: 4, kind: input, shape index: {}]
  %s5 = inlined_call_operand.vmem [shape: f32[1,128], index: 5, kind: input, shape index: {}]
  %s6 = inlined_call_operand.vmem [shape: bf16[72,128], index: 6, kind: output, shape index: {}]
  %s7 = sld [smem:[#allocation0]]
  $region34: #{net_forward.4} parent=0
    _
  %s9 = ssub.s32 1, %s7
  %s10 = scalar_select 0, %s9, %s7
  // Predicated region
  $region2: #{net_forward.4} parent=0 // pred_check
    _
  $region3: #{net_forward.4} parent=0 // pred_check_branch
    %12 = sbr.rel (0) target = $region5
  $region4: #{net_forward.4} parent=0 // pred_region
    _
  $region5: #{net_forward.4} parent=0 // pred_fallthru
    _
  // Predicated region
  $region6: #{net_forward.4} parent=0 // pred_check
    _
  $region7: #{net_forward.4} parent=0 // pred_check_branch
    %14 = sbr.rel (0) target = $region9
  $region8: #{net_forward.4} parent=0 // pred_region
    _
  $region9: #{net_forward.4} parent=0 // pred_fallthru
    _
  // Predicated region
  $region10: #{net_forward.4} parent=0 // pred_check
    _
  $region11: #{net_forward.4} parent=0 // pred_check_branch
    %16 = sbr.rel (0) target = $region13
  $region12: #{net_forward.4} parent=0 // pred_region
    _
  $region13: #{net_forward.4} parent=0 // pred_fallthru
    _
  // Predicated region
  $region14: #{net_forward.4} parent=0 // pred_check
    _
  $region15: #{net_forward.4} parent=0 // pred_check_branch
    %18 = sbr.rel (0) target = $region17
  $region16: #{net_forward.4} parent=0 // pred_region
    _
  $region17: #{net_forward.4} parent=0 // pred_fallthru
    _
  // Predicated region
  $region18: #{net_forward.4} parent=0 // pred_check
    _
  $region19: #{net_forward.4} parent=0 // pred_check_branch
    %20 = sbr.rel (0) target = $region21
  $region20: #{net_forward.4} parent=0 // pred_region
    _
  $region21: #{net_forward.4} parent=0 // pred_fallthru
    _
  // Predicated region
  $region22: #{net_forward.4} parent=0 // pred_check
    _
  $region23: #{net_forward.4} parent=0 // pred_check_branch
    %22 = sbr.rel (0) target = $region25
  $region24: #{net_forward.4} parent=0 // pred_region
    _
  $region25: #{net_forward.4} parent=0 // pred_fallthru
    _
  %v23 = vld [vmem:[%s4] sm:$0xf]
  %v24 = vld [vmem:[%s4 + $0x4] sm:$0xf]
  %v25 = vld [vmem:[%s4 + $0x8] sm:$0xf]
  %v26 = vld [vmem:[%s4 + $0xc] sm:$0xf]
  %v27 = vld [vmem:[%s4 + $0x10] sm:$0xf]
  %v28 = vld [vmem:[%s4 + $0x14] sm:$0xf]
  %v29 = vld [vmem:[%s4 + $0x18] sm:$0xf]
  %v30 = vld [vmem:[%s4 + $0x1c] sm:$0xf]
  %v31 = vld [vmem:[%s4 + $0x20] sm:$0xf]
  %v32 = vld [vmem:[%s4 + $0x24] sm:$0xf]
  %v33 = vld [vmem:[%s4 + $0x28] sm:$0xf]
  %v34 = vld [vmem:[%s4 + $0x2c] sm:$0xf]
  %v35 = vld [vmem:[%s4 + $0x30] sm:$0xf]
  %v36 = vld [vmem:[%s4 + $0x34] sm:$0xf]
  %v37 = vld [vmem:[%s4 + $0x38] sm:$0xf]
  %v38 = vld [vmem:[%s4 + $0x3c] sm:$0xf]
  %v39 = vld [vmem:[%s4 + $0x40] sm:$0xf]
  %v40 = vld [vmem:[%s4 + $0x44] sm:$0xf]
  %v41 = vld [vmem:[%s4 + $0x48] sm:$0xf]
  %v42 = vld [vmem:[%s4 + $0x4c] sm:$0xf]
  %v43 = vld [vmem:[%s4 + $0x50] sm:$0xf]
  %v44 = vld [vmem:[%s4 + $0x54] sm:$0xf]
  %v45 = vld [vmem:[%s4 + $0x58] sm:$0xf]
  %v46 = vld [vmem:[%s4 + $0x5c] sm:$0xf]
  %v47 = vld [vmem:[%s4 + $0x60] sm:$0xf]
  %v48 = vld [vmem:[%s4 + $0x64] sm:$0xf]
  %v49 = vld [vmem:[%s4 + $0x68] sm:$0xf]
  %v50 = vld [vmem:[%s4 + $0x6c] sm:$0xf]
  %v51 = vld [vmem:[%s4 + $0x70] sm:$0xf]
  %v52 = vld [vmem:[%s4 + $0x74] sm:$0xf]
  %v53 = vld [vmem:[%s4 + $0x78] sm:$0xf]
  %v54 = vld [vmem:[%s4 + $0x7c] sm:$0xf]
  %v55 = vld [vmem:[%s0] sm:$0xff]
  %v56 = vld [vmem:[%s0 + $0x8] sm:$0xff]
  %v57 = vld [vmem:[%s0 + $0x10] sm:$0xff]
  %v58 = vld [vmem:[%s0 + $0x18] sm:$0xff]
  %v59 = vld [vmem:[%s0 + $0x20] sm:$0xff]
  %v60 = vld [vmem:[%s0 + $0x28] sm:$0xff]
  %v61 = vld [vmem:[%s0 + $0x30] sm:$0xff]
  %v62 = vld [vmem:[%s0 + $0x38] sm:$0xff]
  %v63 = vld [vmem:[%s0 + $0x40] sm:$0xff]
  %v73 = vunpack.c.l.b16 %v55
  %v74 = vunpack.c.h.b16 %v55
  %v75 = vunpack.c.l.b16 %v56
  %v76 = vunpack.c.h.b16 %v56
  %v77 = vunpack.c.l.b16 %v57
  %v78 = vunpack.c.h.b16 %v57
  %v79 = vunpack.c.l.b16 %v58
  %v80 = vunpack.c.h.b16 %v58
  %v81 = vunpack.c.l.b16 %v59
  %v82 = vunpack.c.h.b16 %v59
  %v83 = vunpack.c.l.b16 %v60
  %v84 = vunpack.c.h.b16 %v60
  %v85 = vunpack.c.l.b16 %v61
  %v86 = vunpack.c.h.b16 %v61
  %v87 = vunpack.c.l.b16 %v62
  %v88 = vunpack.c.h.b16 %v62
  %v89 = vunpack.c.l.b16 %v63
  %v90 = vunpack.c.h.b16 %v63
  %v91 = vpack.c.b16 %v75, %v73
  %v92 = vpack.c.b16 %v76, %v74
  %v93 = vpack.c.b16 %v79, %v77
  %v94 = vpack.c.b16 %v80, %v78
  %v95 = vpack.c.b16 %v83, %v81
  %v96 = vpack.c.b16 %v84, %v82
  %v97 = vpack.c.b16 %v87, %v85
  %v98 = vpack.c.b16 %v88, %v86
  %v99 = vpack.c.b16 %v89, %v89
  %v100 = vpack.c.b16 %v90, %v90
  %v143 = vunpack.c.l.b16 %v23
  %v144 = vunpack.c.l.b16 %v24
  %v145 = vunpack.c.l.b16 %v25
  %v146 = vunpack.c.l.b16 %v26
  %v147 = vunpack.c.l.b16 %v27
  %v148 = vunpack.c.l.b16 %v28
  %v149 = vunpack.c.l.b16 %v29
  %v150 = vunpack.c.l.b16 %v30
  %v151 = vunpack.c.l.b16 %v31
  %v152 = vunpack.c.l.b16 %v32
  %v153 = vunpack.c.l.b16 %v33
  %v154 = vunpack.c.l.b16 %v34
  %v155 = vunpack.c.l.b16 %v35
  %v156 = vunpack.c.l.b16 %v36
  %v157 = vunpack.c.l.b16 %v37
  %v158 = vunpack.c.l.b16 %v38
  %v159 = vunpack.c.l.b16 %v39
  %v160 = vunpack.c.l.b16 %v40
  %v161 = vunpack.c.l.b16 %v41
  %v162 = vunpack.c.l.b16 %v42
  %v163 = vunpack.c.l.b16 %v43
  %v164 = vunpack.c.l.b16 %v44
  %v165 = vunpack.c.l.b16 %v45
  %v166 = vunpack.c.l.b16 %v46
  %v167 = vunpack.c.l.b16 %v47
  %v168 = vunpack.c.l.b16 %v48
  %v169 = vunpack.c.l.b16 %v49
  %v170 = vunpack.c.l.b16 %v50
  %v171 = vunpack.c.l.b16 %v51
  %v172 = vunpack.c.l.b16 %v52
  %v173 = vunpack.c.l.b16 %v53
  %v174 = vunpack.c.l.b16 %v54
  %v175 = vpack.c.b16 %v144, %v143
  %v176 = vpack.c.b16 %v146, %v145
  %v177 = vpack.c.b16 %v148, %v147
  %v178 = vpack.c.b16 %v150, %v149
  %v179 = vpack.c.b16 %v152, %v151
  %v180 = vpack.c.b16 %v154, %v153
  %v181 = vpack.c.b16 %v156, %v155
  %v182 = vpack.c.b16 %v158, %v157
  %v183 = vpack.c.b16 %v160, %v159
  %v184 = vpack.c.b16 %v162, %v161
  %v185 = vpack.c.b16 %v164, %v163
  %v186 = vpack.c.b16 %v166, %v165
  %v187 = vpack.c.b16 %v168, %v167
  %v188 = vpack.c.b16 %v170, %v169
  %v189 = vpack.c.b16 %v172, %v171
  %v190 = vpack.c.b16 %v174, %v173
  %207 = vmatpush.bf16.msra.mxu0 %v182
  %208 = vmatpush.bf16.msra.mxu0 %v181
  %209 = vmatpush.bf16.msra.mxu0 %v180
  %210 = vmatpush.bf16.msra.mxu0 %v179
  %211 = vmatpush.bf16.msra.mxu0 %v178
  %212 = vmatpush.bf16.msra.mxu0 %v177
  %213 = vmatpush.bf16.msra.mxu0 %v176
  %214 = vmatpush.bf16.msra.mxu0 %v175
  %215 = vmatmul.bf16.gmra.mxu0 %v91
  %v216 = vpop.f32.mrf.mxu0
  %v217 = vadd.f32 0.0, %v216
  %v218 = vpop.f32.mrf.mxu0
  %v219 = vadd.f32 0.0, %v218
  %220 = vmatmul.bf16.gmra.mxu0 %v93
  %v221 = vpop.f32.mrf.mxu0
  %v222 = vadd.f32 0.0, %v221
  %v223 = vpop.f32.mrf.mxu0
  %v224 = vadd.f32 0.0, %v223
  %225 = vmatmul.bf16.gmra.mxu0 %v95
  %v226 = vpop.f32.mrf.mxu0
  %v227 = vadd.f32 0.0, %v226
  %v228 = vpop.f32.mrf.mxu0
  %v229 = vadd.f32 0.0, %v228
  %230 = vmatmul.bf16.gmra.mxu0 %v97
  %v231 = vpop.f32.mrf.mxu0
  %v232 = vadd.f32 0.0, %v231
  %v233 = vpop.f32.mrf.mxu0
  %v234 = vadd.f32 0.0, %v233
  %235 = vmatmul.bf16.gmra.mxu0 %v99
  %v236 = vpop.f32.mrf.mxu0
  %v237 = vadd.f32 0.0, %v236
  %v238 = vpop.f32.mrf.mxu0
  %239 = vdwg.mxu0
  %240 = vmatpush.bf16.msra.mxu0 %v190
  %241 = vmatpush.bf16.msra.mxu0 %v189
  %242 = vmatpush.bf16.msra.mxu0 %v188
  %243 = vmatpush.bf16.msra.mxu0 %v187
  %244 = vmatpush.bf16.msra.mxu0 %v186
  %245 = vmatpush.bf16.msra.mxu0 %v185
  %246 = vmatpush.bf16.msra.mxu0 %v184
  %247 = vmatpush.bf16.msra.mxu0 %v183
  %248 = vmatmul.bf16.gmra.mxu0 %v92
  %v249 = vpop.f32.mrf.mxu0
  %v250 = vadd.f32 %v217, %v249
  %v251 = vpop.f32.mrf.mxu0
  %v252 = vadd.f32 %v219, %v251
  %253 = vmatmul.bf16.gmra.mxu0 %v94
  %v254 = vpop.f32.mrf.mxu0
  %v255 = vadd.f32 %v222, %v254
  %v256 = vpop.f32.mrf.mxu0
  %v257 = vadd.f32 %v224, %v256
  %258 = vmatmul.bf16.gmra.mxu0 %v96
  %v259 = vpop.f32.mrf.mxu0
  %v260 = vadd.f32 %v227, %v259
  %v261 = vpop.f32.mrf.mxu0
  %v262 = vadd.f32 %v229, %v261
  %263 = vmatmul.bf16.gmra.mxu0 %v98
  %v264 = vpop.f32.mrf.mxu0
  %v265 = vadd.f32 %v232, %v264
  %v266 = vpop.f32.mrf.mxu0
  %v267 = vadd.f32 %v234, %v266
  %268 = vmatmul.bf16.gmra.mxu0 %v100
  %v269 = vpop.f32.mrf.mxu0
  %v270 = vadd.f32 %v237, %v269
  %v271 = vpop.f32.mrf.mxu0
  %272 = vdwg.mxu0
  %v273 = vld [vmem:[%s1] sm:$0xff]
  %v274 = vld [vmem:[%s1 + $0x8] sm:$0xff]
  %v275 = vld [vmem:[%s1 + $0x10] sm:$0xff]
  %v276 = vld [vmem:[%s1 + $0x18] sm:$0xff]
  %v277 = vld [vmem:[%s1 + $0x20] sm:$0xff]
  %v278 = vld [vmem:[%s1 + $0x28] sm:$0xff]
  %v279 = vld [vmem:[%s1 + $0x30] sm:$0xff]
  %v280 = vld [vmem:[%s1 + $0x38] sm:$0xff]
  %v281 = vld [vmem:[%s1 + $0x40] sm:$0xff]
  %v291 = vunpack.c.l.b16 %v273
  %v292 = vunpack.c.h.b16 %v273
  %v293 = vunpack.c.l.b16 %v274
  %v294 = vunpack.c.h.b16 %v274
  %v295 = vunpack.c.l.b16 %v275
  %v296 = vunpack.c.h.b16 %v275
  %v297 = vunpack.c.l.b16 %v276
  %v298 = vunpack.c.h.b16 %v276
  %v299 = vunpack.c.l.b16 %v277
  %v300 = vunpack.c.h.b16 %v277
  %v301 = vunpack.c.l.b16 %v278
  %v302 = vunpack.c.h.b16 %v278
  %v303 = vunpack.c.l.b16 %v279
  %v304 = vunpack.c.h.b16 %v279
  %v305 = vunpack.c.l.b16 %v280
  %v306 = vunpack.c.h.b16 %v280
  %v307 = vunpack.c.l.b16 %v281
  %v308 = vunpack.c.h.b16 %v281
  %v309 = vpack.c.b16 %v293, %v291
  %v310 = vpack.c.b16 %v294, %v292
  %v311 = vpack.c.b16 %v297, %v295
  %v312 = vpack.c.b16 %v298, %v296
  %v313 = vpack.c.b16 %v301, %v299
  %v314 = vpack.c.b16 %v302, %v300
  %v315 = vpack.c.b16 %v305, %v303
  %v316 = vpack.c.b16 %v306, %v304
  %v317 = vpack.c.b16 %v307, %v307
  %v318 = vpack.c.b16 %v308, %v308
  %329 = vmatpush.bf16.msra.mxu0 %v182
  %330 = vmatpush.bf16.msra.mxu0 %v181
  %331 = vmatpush.bf16.msra.mxu0 %v180
  %332 = vmatpush.bf16.msra.mxu0 %v179
  %333 = vmatpush.bf16.msra.mxu0 %v178
  %334 = vmatpush.bf16.msra.mxu0 %v177
  %335 = vmatpush.bf16.msra.mxu0 %v176
  %336 = vmatpush.bf16.msra.mxu0 %v175
  %337 = vmatmul.bf16.gmra.mxu0 %v309
  %v338 = vpop.f32.mrf.mxu0
  %v339 = vadd.f32 0.0, %v338
  %v340 = vpop.f32.mrf.mxu0
  %v341 = vadd.f32 0.0, %v340
  %342 = vmatmul.bf16.gmra.mxu0 %v311
  %v343 = vpop.f32.mrf.mxu0
  %v344 = vadd.f32 0.0, %v343
  %v345 = vpop.f32.mrf.mxu0
  %v346 = vadd.f32 0.0, %v345
  %347 = vmatmul.bf16.gmra.mxu0 %v313
  %v348 = vpop.f32.mrf.mxu0
  %v349 = vadd.f32 0.0, %v348
  %v350 = vpop.f32.mrf.mxu0
  %v351 = vadd.f32 0.0, %v350
  %352 = vmatmul.bf16.gmra.mxu0 %v315
  %v353 = vpop.f32.mrf.mxu0
  %v354 = vadd.f32 0.0, %v353
  %v355 = vpop.f32.mrf.mxu0
  %v356 = vadd.f32 0.0, %v355
  %357 = vmatmul.bf16.gmra.mxu0 %v317
  %v358 = vpop.f32.mrf.mxu0
  %v359 = vadd.f32 0.0, %v358
  %v360 = vpop.f32.mrf.mxu0
  %361 = vdwg.mxu0
  %362 = vmatpush.bf16.msra.mxu0 %v190
  %363 = vmatpush.bf16.msra.mxu0 %v189
  %364 = vmatpush.bf16.msra.mxu0 %v188
  %365 = vmatpush.bf16.msra.mxu0 %v187
  %366 = vmatpush.bf16.msra.mxu0 %v186
  %367 = vmatpush.bf16.msra.mxu0 %v185
  %368 = vmatpush.bf16.msra.mxu0 %v184
  %369 = vmatpush.bf16.msra.mxu0 %v183
  %370 = vmatmul.bf16.gmra.mxu0 %v310
  %v371 = vpop.f32.mrf.mxu0
  %v372 = vadd.f32 %v339, %v371
  %v373 = vpop.f32.mrf.mxu0
  %v374 = vadd.f32 %v341, %v373
  %375 = vmatmul.bf16.gmra.mxu0 %v312
  %v376 = vpop.f32.mrf.mxu0
  %v377 = vadd.f32 %v344, %v376
  %v378 = vpop.f32.mrf.mxu0
  %v379 = vadd.f32 %v346, %v378
  %380 = vmatmul.bf16.gmra.mxu0 %v314
  %v381 = vpop.f32.mrf.mxu0
  %v382 = vadd.f32 %v349, %v381
  %v383 = vpop.f32.mrf.mxu0
  %v384 = vadd.f32 %v351, %v383
  %385 = vmatmul.bf16.gmra.mxu0 %v316
  %v386 = vpop.f32.mrf.mxu0
  %v387 = vadd.f32 %v354, %v386
  %v388 = vpop.f32.mrf.mxu0
  %v389 = vadd.f32 %v356, %v388
  %390 = vmatmul.bf16.gmra.mxu0 %v318
  %v391 = vpop.f32.mrf.mxu0
  %v392 = vadd.f32 %v359, %v391
  %v393 = vpop.f32.mrf.mxu0
  %394 = vdwg.mxu0
  %v395 = vmax.f32 %v250, %v372
  %v396 = vmax.f32 %v252, %v374
  %v397 = vmax.f32 %v255, %v377
  %v398 = vmax.f32 %v257, %v379
  %v399 = vmax.f32 %v260, %v382
  %v400 = vmax.f32 %v262, %v384
  %v401 = vmax.f32 %v265, %v387
  %v402 = vmax.f32 %v267, %v389
  %v403 = vmax.f32 %v270, %v392
  %v404 = vld [vmem:[%s2] sm:$0xff]
  %v405 = vld [vmem:[%s2 + $0x8] sm:$0xff]
  %v406 = vld [vmem:[%s2 + $0x10] sm:$0xff]
  %v407 = vld [vmem:[%s2 + $0x18] sm:$0xff]
  %v408 = vld [vmem:[%s2 + $0x20] sm:$0xff]
  %v409 = vld [vmem:[%s2 + $0x28] sm:$0xff]
  %v410 = vld [vmem:[%s2 + $0x30] sm:$0xff]
  %v411 = vld [vmem:[%s2 + $0x38] sm:$0xff]
  %v412 = vld [vmem:[%s2 + $0x40] sm:$0xff]
  %v422 = vunpack.c.l.b16 %v404
  %v423 = vunpack.c.h.b16 %v404
  %v424 = vunpack.c.l.b16 %v405
  %v425 = vunpack.c.h.b16 %v405
  %v426 = vunpack.c.l.b16 %v406
  %v427 = vunpack.c.h.b16 %v406
  %v428 = vunpack.c.l.b16 %v407
  %v429 = vunpack.c.h.b16 %v407
  %v430 = vunpack.c.l.b16 %v408
  %v431 = vunpack.c.h.b16 %v408
  %v432 = vunpack.c.l.b16 %v409
  %v433 = vunpack.c.h.b16 %v409
  %v434 = vunpack.c.l.b16 %v410
  %v435 = vunpack.c.h.b16 %v410
  %v436 = vunpack.c.l.b16 %v411
  %v437 = vunpack.c.h.b16 %v411
  %v438 = vunpack.c.l.b16 %v412
  %v439 = vunpack.c.h.b16 %v412
  %v440 = vpack.c.b16 %v424, %v422
  %v441 = vpack.c.b16 %v425, %v423
  %v442 = vpack.c.b16 %v428, %v426
  %v443 = vpack.c.b16 %v429, %v427
  %v444 = vpack.c.b16 %v432, %v430
  %v445 = vpack.c.b16 %v433, %v431
  %v446 = vpack.c.b16 %v436, %v434
  %v447 = vpack.c.b16 %v437, %v435
  %v448 = vpack.c.b16 %v438, %v438
  %v449 = vpack.c.b16 %v439, %v439
  %460 = vmatpush.bf16.msra.mxu0 %v182
  %461 = vmatpush.bf16.msra.mxu0 %v181
  %462 = vmatpush.bf16.msra.mxu0 %v180
  %463 = vmatpush.bf16.msra.mxu0 %v179
  %464 = vmatpush.bf16.msra.mxu0 %v178
  %465 = vmatpush.bf16.msra.mxu0 %v177
  %466 = vmatpush.bf16.msra.mxu0 %v176
  %467 = vmatpush.bf16.msra.mxu0 %v175
  %468 = vmatmul.bf16.gmra.mxu0 %v440
  %v469 = vpop.f32.mrf.mxu0
  %v470 = vadd.f32 0.0, %v469
  %v471 = vpop.f32.mrf.mxu0
  %v472 = vadd.f32 0.0, %v471
  %473 = vmatmul.bf16.gmra.mxu0 %v442
  %v474 = vpop.f32.mrf.mxu0
  %v475 = vadd.f32 0.0, %v474
  %v476 = vpop.f32.mrf.mxu0
  %v477 = vadd.f32 0.0, %v476
  %478 = vmatmul.bf16.gmra.mxu0 %v444
  %v479 = vpop.f32.mrf.mxu0
  %v480 = vadd.f32 0.0, %v479
  %v481 = vpop.f32.mrf.mxu0
  %v482 = vadd.f32 0.0, %v481
  %483 = vmatmul.bf16.gmra.mxu0 %v446
  %v484 = vpop.f32.mrf.mxu0
  %v485 = vadd.f32 0.0, %v484
  %v486 = vpop.f32.mrf.mxu0
  %v487 = vadd.f32 0.0, %v486
  %488 = vmatmul.bf16.gmra.mxu0 %v448
  %v489 = vpop.f32.mrf.mxu0
  %v490 = vadd.f32 0.0, %v489
  %v491 = vpop.f32.mrf.mxu0
  %492 = vdwg.mxu0
  %493 = vmatpush.bf16.msra.mxu0 %v190
  %494 = vmatpush.bf16.msra.mxu0 %v189
  %495 = vmatpush.bf16.msra.mxu0 %v188
  %496 = vmatpush.bf16.msra.mxu0 %v187
  %497 = vmatpush.bf16.msra.mxu0 %v186
  %498 = vmatpush.bf16.msra.mxu0 %v185
  %499 = vmatpush.bf16.msra.mxu0 %v184
  %500 = vmatpush.bf16.msra.mxu0 %v183
  %501 = vmatmul.bf16.gmra.mxu0 %v441
  %v502 = vpop.f32.mrf.mxu0
  %v503 = vadd.f32 %v470, %v502
  %v504 = vpop.f32.mrf.mxu0
  %v505 = vadd.f32 %v472, %v504
  %506 = vmatmul.bf16.gmra.mxu0 %v443
  %v507 = vpop.f32.mrf.mxu0
  %v508 = vadd.f32 %v475, %v507
  %v509 = vpop.f32.mrf.mxu0
  %v510 = vadd.f32 %v477, %v509
  %511 = vmatmul.bf16.gmra.mxu0 %v445
  %v512 = vpop.f32.mrf.mxu0
  %v513 = vadd.f32 %v480, %v512
  %v514 = vpop.f32.mrf.mxu0
  %v515 = vadd.f32 %v482, %v514
  %516 = vmatmul.bf16.gmra.mxu0 %v447
  %v517 = vpop.f32.mrf.mxu0
  %v518 = vadd.f32 %v485, %v517
  %v519 = vpop.f32.mrf.mxu0
  %v520 = vadd.f32 %v487, %v519
  %521 = vmatmul.bf16.gmra.mxu0 %v449
  %v522 = vpop.f32.mrf.mxu0
  %v523 = vadd.f32 %v490, %v522
  %v524 = vpop.f32.mrf.mxu0
  %525 = vdwg.mxu0
  %v526 = vld [vmem:[%s3] sm:$0xff]
  %v527 = vld [vmem:[%s3 + $0x8] sm:$0xff]
  %v528 = vld [vmem:[%s3 + $0x10] sm:$0xff]
  %v529 = vld [vmem:[%s3 + $0x18] sm:$0xff]
  %v530 = vld [vmem:[%s3 + $0x20] sm:$0xff]
  %v531 = vld [vmem:[%s3 + $0x28] sm:$0xff]
  %v532 = vld [vmem:[%s3 + $0x30] sm:$0xff]
  %v533 = vld [vmem:[%s3 + $0x38] sm:$0xff]
  %v534 = vld [vmem:[%s3 + $0x40] sm:$0xff]
  %v544 = vunpack.c.l.b16 %v526
  %v545 = vunpack.c.h.b16 %v526
  %v546 = vunpack.c.l.b16 %v527
  %v547 = vunpack.c.h.b16 %v527
  %v548 = vunpack.c.l.b16 %v528
  %v549 = vunpack.c.h.b16 %v528
  %v550 = vunpack.c.l.b16 %v529
  %v551 = vunpack.c.h.b16 %v529
  %v552 = vunpack.c.l.b16 %v530
  %v553 = vunpack.c.h.b16 %v530
  %v554 = vunpack.c.l.b16 %v531
  %v555 = vunpack.c.h.b16 %v531
  %v556 = vunpack.c.l.b16 %v532
  %v557 = vunpack.c.h.b16 %v532
  %v558 = vunpack.c.l.b16 %v533
  %v559 = vunpack.c.h.b16 %v533
  %v560 = vunpack.c.l.b16 %v534
  %v561 = vunpack.c.h.b16 %v534
  %v562 = vpack.c.b16 %v546, %v544
  %v563 = vpack.c.b16 %v547, %v545
  %v564 = vpack.c.b16 %v550, %v548
  %v565 = vpack.c.b16 %v551, %v549
  %v566 = vpack.c.b16 %v554, %v552
  %v567 = vpack.c.b16 %v555, %v553
  %v568 = vpack.c.b16 %v558, %v556
  %v569 = vpack.c.b16 %v559, %v557
  %v570 = vpack.c.b16 %v560, %v560
  %v571 = vpack.c.b16 %v561, %v561
  %582 = vmatpush.bf16.msra.mxu0 %v182
  %583 = vmatpush.bf16.msra.mxu0 %v181
  %584 = vmatpush.bf16.msra.mxu0 %v180
  %585 = vmatpush.bf16.msra.mxu0 %v179
  %586 = vmatpush.bf16.msra.mxu0 %v178
  %587 = vmatpush.bf16.msra.mxu0 %v177
  %588 = vmatpush.bf16.msra.mxu0 %v176
  %589 = vmatpush.bf16.msra.mxu0 %v175
  %590 = vmatmul.bf16.gmra.mxu0 %v562
  %v591 = vpop.f32.mrf.mxu0
  %v592 = vadd.f32 0.0, %v591
  %v593 = vpop.f32.mrf.mxu0
  %v594 = vadd.f32 0.0, %v593
  %595 = vmatmul.bf16.gmra.mxu0 %v564
  %v596 = vpop.f32.mrf.mxu0
  %v597 = vadd.f32 0.0, %v596
  %v598 = vpop.f32.mrf.mxu0
  %v599 = vadd.f32 0.0, %v598
  %600 = vmatmul.bf16.gmra.mxu0 %v566
  %v601 = vpop.f32.mrf.mxu0
  %v602 = vadd.f32 0.0, %v601
  %v603 = vpop.f32.mrf.mxu0
  %v604 = vadd.f32 0.0, %v603
  %605 = vmatmul.bf16.gmra.mxu0 %v568
  %v606 = vpop.f32.mrf.mxu0
  %v607 = vadd.f32 0.0, %v606
  %v608 = vpop.f32.mrf.mxu0
  %v609 = vadd.f32 0.0, %v608
  %610 = vmatmul.bf16.gmra.mxu0 %v570
  %v611 = vpop.f32.mrf.mxu0
  %v612 = vadd.f32 0.0, %v611
  %v613 = vpop.f32.mrf.mxu0
  %614 = vdwg.mxu0
  %615 = vmatpush.bf16.msra.mxu0 %v190
  %616 = vmatpush.bf16.msra.mxu0 %v189
  %617 = vmatpush.bf16.msra.mxu0 %v188
  %618 = vmatpush.bf16.msra.mxu0 %v187
  %619 = vmatpush.bf16.msra.mxu0 %v186
  %620 = vmatpush.bf16.msra.mxu0 %v185
  %621 = vmatpush.bf16.msra.mxu0 %v184
  %622 = vmatpush.bf16.msra.mxu0 %v183
  %623 = vmatmul.bf16.gmra.mxu0 %v563
  %v624 = vpop.f32.mrf.mxu0
  %v625 = vadd.f32 %v592, %v624
  %v626 = vpop.f32.mrf.mxu0
  %v627 = vadd.f32 %v594, %v626
  %628 = vmatmul.bf16.gmra.mxu0 %v565
  %v629 = vpop.f32.mrf.mxu0
  %v630 = vadd.f32 %v597, %v629
  %v631 = vpop.f32.mrf.mxu0
  %v632 = vadd.f32 %v599, %v631
  %633 = vmatmul.bf16.gmra.mxu0 %v567
  %v634 = vpop.f32.mrf.mxu0
  %v635 = vadd.f32 %v602, %v634
  %v636 = vpop.f32.mrf.mxu0
  %v637 = vadd.f32 %v604, %v636
  %638 = vmatmul.bf16.gmra.mxu0 %v569
  %v639 = vpop.f32.mrf.mxu0
  %v640 = vadd.f32 %v607, %v639
  %v641 = vpop.f32.mrf.mxu0
  %v642 = vadd.f32 %v609, %v641
  %643 = vmatmul.bf16.gmra.mxu0 %v571
  %v644 = vpop.f32.mrf.mxu0
  %v645 = vadd.f32 %v612, %v644
  %v646 = vpop.f32.mrf.mxu0
  %647 = vdwg.mxu0
  %v648 = vmax.f32 %v503, %v625
  %v649 = vmax.f32 %v505, %v627
  %v650 = vmax.f32 %v508, %v630
  %v651 = vmax.f32 %v510, %v632
  %v652 = vmax.f32 %v513, %v635
  %v653 = vmax.f32 %v515, %v637
  %v654 = vmax.f32 %v518, %v640
  %v655 = vmax.f32 %v520, %v642
  %v656 = vmax.f32 %v523, %v645
  %v657 = vmax.f32 %v395, %v648
  %v658 = vmax.f32 %v396, %v649
  %v659 = vmax.f32 %v397, %v650
  %v660 = vmax.f32 %v398, %v651
  %v661 = vmax.f32 %v399, %v652
  %v662 = vmax.f32 %v400, %v653
  %v663 = vmax.f32 %v401, %v654
  %v664 = vmax.f32 %v402, %v655
  %v665 = vmax.f32 %v403, %v656
  %v666 = vld [vmem:[%s5] sm:$0x1]
  %v668 = vperm.slane %v666, 0
  %v670 = vadd.f32 %v657, %v668
  %v671 = vadd.f32 %v658, %v668
  %v672 = vadd.f32 %v659, %v668
  %v673 = vadd.f32 %v660, %v668
  %v674 = vadd.f32 %v661, %v668
  %v675 = vadd.f32 %v662, %v668
  %v676 = vadd.f32 %v663, %v668
  %v677 = vadd.f32 %v664, %v668
  %v678 = vadd.f32 %v665, %v668
  %v679 = vmax.f32 %v670, 0.0
  %v680 = vmax.f32 %v671, 0.0
  %v681 = vmax.f32 %v672, 0.0
  %v682 = vmax.f32 %v673, 0.0
  %v683 = vmax.f32 %v674, 0.0
  %v684 = vmax.f32 %v675, 0.0
  %v685 = vmax.f32 %v676, 0.0
  %v686 = vmax.f32 %v677, 0.0
  %v687 = vmax.f32 %v678, 0.0
  %v688 = vpack.c.bf16 %v679, %v679
  %v689 = vpack.c.bf16 %v680, %v680
  %v690 = vpack.c.bf16 %v681, %v681
  %v691 = vpack.c.bf16 %v682, %v682
  %v692 = vpack.c.bf16 %v683, %v683
  %v693 = vpack.c.bf16 %v684, %v684
  %v694 = vpack.c.bf16 %v685, %v685
  %v695 = vpack.c.bf16 %v686, %v686
  %v696 = vpack.c.bf16 %v687, %v687
  %697 = vst [vmem:[%s6] sm:$0xf] %v688
  %698 = vst [vmem:[%s6 + $0x4] sm:$0xf] %v689
  %699 = vst [vmem:[%s6 + $0x8] sm:$0xf] %v690
  %700 = vst [vmem:[%s6 + $0xc] sm:$0xf] %v691
  %701 = vst [vmem:[%s6 + $0x10] sm:$0xf] %v692
  %702 = vst [vmem:[%s6 + $0x14] sm:$0xf] %v693
  %703 = vst [vmem:[%s6 + $0x18] sm:$0xf] %v694
  %704 = vst [vmem:[%s6 + $0x1c] sm:$0xf] %v695
  %705 = vst [vmem:[%s6 + $0x20] sm:$0xf] %v696
  // Predicated region
  $region26: #{net_forward.4} parent=0 // pred_check
    _
  $region27: #{net_forward.4} parent=0 // pred_check_branch
    %707 = sbr.rel (0) target = $region29
  $region28: #{net_forward.4} parent=0 // pred_region
    _
  $region29: #{net_forward.4} parent=0 // pred_fallthru
    _
  // Predicated region
  $region30: #{net_forward.4} parent=0 // pred_check
    _
  $region31: #{net_forward.4} parent=0 // pred_check_branch
    %709 = sbr.rel (0) target = $region33
  $region32: #{net_forward.4} parent=0 // pred_region
    _
  $region33: #{net_forward.4} parent=0 // pred_fallthru
    _

// kernel: net_forward.5
$region0: #{net_forward.5}
  #allocation0 [shape = 'u32[]', space=smem, size = 0x4, offset = 0x4, fixed_abs, tag = 'smem constant byte address 0x4 - core index']
  #allocation1 [shape = 'u32[72,128]{1,0:T(1,128)}', space=vmem, size = 0x9000, scoped, tag = 'internal scratch']
  %s0 = inlined_call_operand.vmem [shape: bf16[2,4608], index: 0, kind: input, shape index: {}]
  %s1 = inlined_call_operand.vmem [shape: bf16[4608,128], index: 1, kind: input, shape index: {}]
  %s2 = inlined_call_operand.vmem [shape: f32[1,128], index: 2, kind: input, shape index: {}]
  %s3 = inlined_call_operand.vmem [shape: bf16[128,128], index: 3, kind: input, shape index: {}]
  %s4 = inlined_call_operand.vmem [shape: f32[1,128], index: 4, kind: input, shape index: {}]
  %s5 = inlined_call_operand.vmem [shape: bf16[128,128], index: 5, kind: input, shape index: {}]
  %s6 = inlined_call_operand.vmem [shape: f32[1,128], index: 6, kind: input, shape index: {}]
  %s7 = inlined_call_operand.hbm [shape: f32[2,128], index: 7, kind: output, shape index: {}]
  %s8 = sld [smem:[#allocation0]]
  $region38: #{net_forward.5} parent=0
    _
  %s10 = ssub.s32 1, %s8
  %s11 = scalar_select 0, %s10, %s8
  $region1: #{net_forward.5} parent=0
    #allocation2 [shape = 'u8[1024]{0}', space=vmem, size = 0x400, scoped, tag = 'output window, operand 0, single buffered']
    #allocation3 [shape = 's32[1]{0}', space=sflag, size = 0x4, scoped, tag = 'scoped memory for net_forward.5']
    %12 = vsyncpa [#allocation3], 0
    // Predicated region
    $region2: #{net_forward.5} parent=1 // pred_check
      _
    $region3: #{net_forward.5} parent=1 // pred_check_branch
      %14 = sbr.rel (0) target = $region5
    $region4: #{net_forward.5} parent=1 // pred_region
      _
    $region5: #{net_forward.5} parent=1 // pred_fallthru
      _
    // Predicated region
    $region6: #{net_forward.5} parent=1 // pred_check
      _
    $region7: #{net_forward.5} parent=1 // pred_check_branch
      %16 = sbr.rel (0) target = $region9
    $region8: #{net_forward.5} parent=1 // pred_region
      _
    $region9: #{net_forward.5} parent=1 // pred_fallthru
      _
    // Predicated region
    $region10: #{net_forward.5} parent=1 // pred_check
      _
    $region11: #{net_forward.5} parent=1 // pred_check_branch
      %18 = sbr.rel (0) target = $region13
    $region12: #{net_forward.5} parent=1 // pred_region
      _
    $region13: #{net_forward.5} parent=1 // pred_fallthru
      _
    // Predicated region
    $region14: #{net_forward.5} parent=1 // pred_check
      _
    $region15: #{net_forward.5} parent=1 // pred_check_branch
      %20 = sbr.rel (0) target = $region17
    $region16: #{net_forward.5} parent=1 // pred_region
      _
    $region17: #{net_forward.5} parent=1 // pred_fallthru
      _
    // Predicated region
    $region18: #{net_forward.5} parent=1 // pred_check
      _
    $region19: #{net_forward.5} parent=1 // pred_check_branch
      %22 = sbr.rel (0) target = $region21
    $region20: #{net_forward.5} parent=1 // pred_region
      _
    $region21: #{net_forward.5} parent=1 // pred_fallthru
      _
    // Predicated region
    $region22: #{net_forward.5} parent=1 // pred_check
      _
    $region23: #{net_forward.5} parent=1 // pred_check_branch
      %24 = sbr.rel (0) target = $region25
    $region24: #{net_forward.5} parent=1 // pred_region
      _
    $region25: #{net_forward.5} parent=1 // pred_fallthru
      _
    // Predicated region
    $region26: #{net_forward.5} parent=1 // pred_check
      _
    $region27: #{net_forward.5} parent=1 // pred_check_branch
      %26 = sbr.rel (0) target = $region29
    $region28: #{net_forward.5} parent=1 // pred_region
      _
    $region29: #{net_forward.5} parent=1 // pred_fallthru
      _
    %v27 = vld [vmem:[%s0] sm:$0xff]
    %v28 = vld [vmem:[%s0 + $0x8] sm:$0xff]
    %v29 = vld [vmem:[%s0 + $0x10] sm:$0xff]
    %v30 = vld [vmem:[%s0 + $0x18] sm:$0xff]
    %v31 = vld [vmem:[%s0 + $0x20] sm:$0xf]
    %v32 = vld [vmem:[%s1] sm:$0xf]
    %v33 = vld [vmem:[%s1 + $0x4] sm:$0xf]
    %v34 = vld [vmem:[%s1 + $0x8] sm:$0xf]
    %v35 = vld [vmem:[%s1 + $0xc] sm:$0xf]
    %v36 = vld [vmem:[%s1 + $0x10] sm:$0xf]
    %v37 = vld [vmem:[%s1 + $0x14] sm:$0xf]
    %v38 = vld [vmem:[%s1 + $0x18] sm:$0xf]
    %v39 = vld [vmem:[%s1 + $0x1c] sm:$0xf]
    %v40 = vld [vmem:[%s1 + $0x20] sm:$0xf]
    %v41 = vld [vmem:[%s1 + $0x24] sm:$0xf]
    %v42 = vld [vmem:[%s1 + $0x28] sm:$0xf]
    %v43 = vld [vmem:[%s1 + $0x2c] sm:$0xf]
    %v44 = vld [vmem:[%s1 + $0x30] sm:$0xf]
    %v45 = vld [vmem:[%s1 + $0x34] sm:$0xf]
    %v46 = vld [vmem:[%s1 + $0x38] sm:$0xf]
    %v47 = vld [vmem:[%s1 + $0x3c] sm:$0xf]
    %v48 = vld [vmem:[%s1 + $0x40] sm:$0xf]
    %v49 = vld [vmem:[%s1 + $0x44] sm:$0xf]
    %v50 = vld [vmem:[%s1 + $0x48] sm:$0xf]
    %v51 = vld [vmem:[%s1 + $0x4c] sm:$0xf]
    %v52 = vld [vmem:[%s1 + $0x50] sm:$0xf]
    %v53 = vld [vmem:[%s1 + $0x54] sm:$0xf]
    %v54 = vld [vmem:[%s1 + $0x58] sm:$0xf]
    %v55 = vld [vmem:[%s1 + $0x5c] sm:$0xf]
    %v56 = vld [vmem:[%s1 + $0x60] sm:$0xf]
    %v57 = vld [vmem:[%s1 + $0x64] sm:$0xf]
    %v58 = vld [vmem:[%s1 + $0x68] sm:$0xf]
    %v59 = vld [vmem:[%s1 + $0x6c] sm:$0xf]
    %v60 = vld [vmem:[%s1 + $0x70] sm:$0xf]
    %v61 = vld [vmem:[%s1 + $0x74] sm:$0xf]
    %v62 = vld [vmem:[%s1 + $0x78] sm:$0xf]
    %v63 = vld [vmem:[%s1 + $0x7c] sm:$0xf]
    %v64 = vld [vmem:[%s1 + $0x80] sm:$0xf]
    %v65 = vld [vmem:[%s1 + $0x84] sm:$0xf]
    %v66 = vld [vmem:[%s1 + $0x88] sm:$0xf]
    %v67 = vld [vmem:[%s1 + $0x8c] sm:$0xf]
    %v68 = vld [vmem:[%s1 + $0x90] sm:$0xf]
    %v69 = vld [vmem:[%s1 + $0x94] sm:$0xf]
    %v70 = vld [vmem:[%s1 + $0x98] sm:$0xf]
    %v71 = vld [vmem:[%s1 + $0x9c] sm:$0xf]
    %v72 = vld [vmem:[%s1 + $0xa0] sm:$0xf]
    %v73 = vld [vmem:[%s1 + $0xa4] sm:$0xf]
    %v74 = vld [vmem:[%s1 + $0xa8] sm:$0xf]
    %v75 = vld [vmem:[%s1 + $0xac] sm:$0xf]
    %v76 = vld [vmem:[%s1 + $0xb0] sm:$0xf]
    %v77 = vld [vmem:[%s1 + $0xb4] sm:$0xf]
    %v78 = vld [vmem:[%s1 + $0xb8] sm:$0xf]
    %v79 = vld [vmem:[%s1 + $0xbc] sm:$0xf]
    %v80 = vld [vmem:[%s1 + $0xc0] sm:$0xf]
    %v81 = vld [vmem:[%s1 + $0xc4] sm:$0xf]
    %v82 = vld [vmem:[%s1 + $0xc8] sm:$0xf]
    %v83 = vld [vmem:[%s1 + $0xcc] sm:$0xf]
    %v84 = vld [vmem:[%s1 + $0xd0] sm:$0xf]
    %v85 = vld [vmem:[%s1 + $0xd4] sm:$0xf]
    %v86 = vld [vmem:[%s1 + $0xd8] sm:$0xf]
    %v87 = vld [vmem:[%s1 + $0xdc] sm:$0xf]
    %v88 = vld [vmem:[%s1 + $0xe0] sm:$0xf]
    %v89 = vld [vmem:[%s1 + $0xe4] sm:$0xf]
    %v90 = vld [vmem:[%s1 + $0xe8] sm:$0xf]
    %v91 = vld [vmem:[%s1 + $0xec] sm:$0xf]
    %v92 = vld [vmem:[%s1 + $0xf0] sm:$0xf]
    %v93 = vld [vmem:[%s1 + $0xf4] sm:$0xf]
    %v94 = vld [vmem:[%s1 + $0xf8] sm:$0xf]
    %v95 = vld [vmem:[%s1 + $0xfc] sm:$0xf]
    %v96 = vld [vmem:[%s1 + $0x100] sm:$0xf]
    %v97 = vld [vmem:[%s1 + $0x104] sm:$0xf]
    %v98 = vld [vmem:[%s1 + $0x108] sm:$0xf]
    %v99 = vld [vmem:[%s1 + $0x10c] sm:$0xf]
    %v100 = vld [vmem:[%s1 + $0x110] sm:$0xf]
    %v101 = vld [vmem:[%s1 + $0x114] sm:$0xf]
    %v102 = vld [vmem:[%s1 + $0x118] sm:$0xf]
    %v103 = vld [vmem:[%s1 + $0x11c] sm:$0xf]
    %v104 = vld [vmem:[%s1 + $0x120] sm:$0xf]
    %v105 = vld [vmem:[%s1 + $0x124] sm:$0xf]
    %v106 = vld [vmem:[%s1 + $0x128] sm:$0xf]
    %v107 = vld [vmem:[%s1 + $0x12c] sm:$0xf]
    %v108 = vld [vmem:[%s1 + $0x130] sm:$0xf]
    %v109 = vld [vmem:[%s1 + $0x134] sm:$0xf]
    %v110 = vld [vmem:[%s1 + $0x138] sm:$0xf]
    %v111 = vld [vmem:[%s1 + $0x13c] sm:$0xf]
    %v112 = vld [vmem:[%s1 + $0x140] sm:$0xf]
    %v113 = vld [vmem:[%s1 + $0x144] sm:$0xf]
    %v114 = vld [vmem:[%s1 + $0x148] sm:$0xf]
    %v115 = vld [vmem:[%s1 + $0x14c] sm:$0xf]
    %v116 = vld [vmem:[%s1 + $0x150] sm:$0xf]
    %v117 = vld [vmem:[%s1 + $0x154] sm:$0xf]
    %v118 = vld [vmem:[%s1 + $0x158] sm:$0xf]
    %v119 = vld [vmem:[%s1 + $0x15c] sm:$0xf]
    %v120 = vld [vmem:[%s1 + $0x160] sm:$0xf]
    %v121 = vld [vmem:[%s1 + $0x164] sm:$0xf]
    %v122 = vld [vmem:[%s1 + $0x168] sm:$0xf]
    %v123 = vld [vmem:[%s1 + $0x16c] sm:$0xf]
    %v124 = vld [vmem:[%s1 + $0x170] sm:$0xf]
    %v125 = vld [vmem:[%s1 + $0x174] sm:$0xf]
    %v126 = vld [vmem:[%s1 + $0x178] sm:$0xf]
    %v127 = vld [vmem:[%s1 + $0x17c] sm:$0xf]
    %v128 = vld [vmem:[%s1 + $0x180] sm:$0xf]
    %v129 = vld [vmem:[%s1 + $0x184] sm:$0xf]
    %v130 = vld [vmem:[%s1 + $0x188] sm:$0xf]
    %v131 = vld [vmem:[%s1 + $0x18c] sm:$0xf]
    %v132 = vld [vmem:[%s1 + $0x190] sm:$0xf]
    %v133 = vld [vmem:[%s1 + $0x194] sm:$0xf]
    %v134 = vld [vmem:[%s1 + $0x198] sm:$0xf]
    %v135 = vld [vmem:[%s1 + $0x19c] sm:$0xf]
    %v136 = vld [vmem:[%s1 + $0x1a0] sm:$0xf]
    %v137 = vld [vmem:[%s1 + $0x1a4] sm:$0xf]
    %v138 = vld [vmem:[%s1 + $0x1a8] sm:$0xf]
    %v139 = vld [vmem:[%s1 + $0x1ac] sm:$0xf]
    %v140 = vld [vmem:[%s1 + $0x1b0] sm:$0xf]
    %v141 = vld [vmem:[%s1 + $0x1b4] sm:$0xf]
    %v142 = vld [vmem:[%s1 + $0x1b8] sm:$0xf]
    %v143 = vld [vmem:[%s1 + $0x1bc] sm:$0xf]
    %v144 = vld [vmem:[%s1 + $0x1c0] sm:$0xf]
    %v145 = vld [vmem:[%s1 + $0x1c4] sm:$0xf]
    %v146 = vld [vmem:[%s1 + $0x1c8] sm:$0xf]
    %v147 = vld [vmem:[%s1 + $0x1cc] sm:$0xf]
    %v148 = vld [vmem:[%s1 + $0x1d0] sm:$0xf]
    %v149 = vld [vmem:[%s1 + $0x1d4] sm:$0xf]
    %v150 = vld [vmem:[%s1 + $0x1d8] sm:$0xf]
    %v151 = vld [vmem:[%s1 + $0x1dc] sm:$0xf]
    %v152 = vld [vmem:[%s1 + $0x1e0] sm:$0xf]
    %v153 = vld [vmem:[%s1 + $0x1e4] sm:$0xf]
    %v154 = vld [vmem:[%s1 + $0x1e8] sm:$0xf]
    %v155 = vld [vmem:[%s1 + $0x1ec] sm:$0xf]
    %v156 = vld [vmem:[%s1 + $0x1f0] sm:$0xf]
    %v157 = vld [vmem:[%s1 + $0x1f4] sm:$0xf]
    %v158 = vld [vmem:[%s1 + $0x1f8] sm:$0xf]
    %v159 = vld [vmem:[%s1 + $0x1fc] sm:$0xf]
    %v160 = vld [vmem:[%s1 + $0x200] sm:$0xf]
    %v161 = vld [vmem:[%s1 + $0x204] sm:$0xf]
    %v162 = vld [vmem:[%s1 + $0x208] sm:$0xf]
    %v163 = vld [vmem:[%s1 + $0x20c] sm:$0xf]
    %v164 = vld [vmem:[%s1 + $0x210] sm:$0xf]
    %v165 = vld [vmem:[%s1 + $0x214] sm:$0xf]
    %v166 = vld [vmem:[%s1 + $0x218] sm:$0xf]
    %v167 = vld [vmem:[%s1 + $0x21c] sm:$0xf]
    %v168 = vld [vmem:[%s1 + $0x220] sm:$0xf]
    %v169 = vld [vmem:[%s1 + $0x224] sm:$0xf]
    %v170 = vld [vmem:[%s1 + $0x228] sm:$0xf]
    %v171 = vld [vmem:[%s1 + $0x22c] sm:$0xf]
    %v172 = vld [vmem:[%s1 + $0x230] sm:$0xf]
    %v173 = vld [vmem:[%s1 + $0x234] sm:$0xf]
    %v174 = vld [vmem:[%s1 + $0x238] sm:$0xf]
    %v175 = vld [vmem:[%s1 + $0x23c] sm:$0xf]
    %v176 = vld [vmem:[%s1 + $0x240] sm:$0xf]
    %v177 = vld [vmem:[%s1 + $0x244] sm:$0xf]
    %v178 = vld [vmem:[%s1 + $0x248] sm:$0xf]
    %v179 = vld [vmem:[%s1 + $0x24c] sm:$0xf]
    %v180 = vld [vmem:[%s1 + $0x250] sm:$0xf]
    %v181 = vld [vmem:[%s1 + $0x254] sm:$0xf]
    %v182 = vld [vmem:[%s1 + $0x258] sm:$0xf]
    %v183 = vld [vmem:[%s1 + $0x25c] sm:$0xf]
    %v184 = vld [vmem:[%s1 + $0x260] sm:$0xf]
    %v185 = vld [vmem:[%s1 + $0x264] sm:$0xf]
    %v186 = vld [vmem:[%s1 + $0x268] sm:$0xf]
    %v187 = vld [vmem:[%s1 + $0x26c] sm:$0xf]
    %v188 = vld [vmem:[%s1 + $0x270] sm:$0xf]
    %v189 = vld [vmem:[%s1 + $0x274] sm:$0xf]
    %v190 = vld [vmem:[%s1 + $0x278] sm:$0xf]
    %v191 = vld [vmem:[%s1 + $0x27c] sm:$0xf]
    %v192 = vld [vmem:[%s1 + $0x280] sm:$0xf]
    %v193 = vld [vmem:[%s1 + $0x284] sm:$0xf]
    %v194 = vld [vmem:[%s1 + $0x288] sm:$0xf]
    %v195 = vld [vmem:[%s1 + $0x28c] sm:$0xf]
    %v196 = vld [vmem:[%s1 + $0x290] sm:$0xf]
    %v197 = vld [vmem:[%s1 + $0x294] sm:$0xf]
    %v198 = vld [vmem:[%s1 + $0x298] sm:$0xf]
    %v199 = vld [vmem:[%s1 + $0x29c] sm:$0xf]
    %v200 = vld [vmem:[%s1 + $0x2a0] sm:$0xf]
    %v201 = vld [vmem:[%s1 + $0x2a4] sm:$0xf]
    %v202 = vld [vmem:[%s1 + $0x2a8] sm:$0xf]
    %v203 = vld [vmem:[%s1 + $0x2ac] sm:$0xf]
    %v204 = vld [vmem:[%s1 + $0x2b0] sm:$0xf]
    %v205 = vld [vmem:[%s1 + $0x2b4] sm:$0xf]
    %v206 = vld [vmem:[%s1 + $0x2b8] sm:$0xf]
    %v207 = vld [vmem:[%s1 + $0x2bc] sm:$0xf]
    %v208 = vld [vmem:[%s1 + $0x2c0] sm:$0xf]
    %v209 = vld [vmem:[%s1 + $0x2c4] sm:$0xf]
    %v210 = vld [vmem:[%s1 + $0x2c8] sm:$0xf]
    %v211 = vld [vmem:[%s1 + $0x2cc] sm:$0xf]
    %v212 = vld [vmem:[%s1 + $0x2d0] sm:$0xf]
    %v213 = vld [vmem:[%s1 + $0x2d4] sm:$0xf]
    %v214 = vld [vmem:[%s1 + $0x2d8] sm:$0xf]
    %v215 = vld [vmem:[%s1 + $0x2dc] sm:$0xf]
    %v216 = vld [vmem:[%s1 + $0x2e0] sm:$0xf]
    %v217 = vld [vmem:[%s1 + $0x2e4] sm:$0xf]
    %v218 = vld [vmem:[%s1 + $0x2e8] sm:$0xf]
    %v219 = vld [vmem:[%s1 + $0x2ec] sm:$0xf]
    %v220 = vld [vmem:[%s1 + $0x2f0] sm:$0xf]
    %v221 = vld [vmem:[%s1 + $0x2f4] sm:$0xf]
    %v222 = vld [vmem:[%s1 + $0x2f8] sm:$0xf]
    %v223 = vld [vmem:[%s1 + $0x2fc] sm:$0xf]
    %v224 = vld [vmem:[%s1 + $0x300] sm:$0xf]
    %v225 = vld [vmem:[%s1 + $0x304] sm:$0xf]
    %v226 = vld [vmem:[%s1 + $0x308] sm:$0xf]
    %v227 = vld [vmem:[%s1 + $0x30c] sm:$0xf]
    %v228 = vld [vmem:[%s1 + $0x310] sm:$0xf]
    %v229 = vld [vmem:[%s1 + $0x314] sm:$0xf]
    %v230 = vld [vmem:[%s1 + $0x318] sm:$0xf]
    %v231 = vld [vmem:[%s1 + $0x31c] sm:$0xf]
    %v232 = vld [vmem:[%s1 + $0x320] sm:$0xf]
    %v233 = vld [vmem:[%s1 + $0x324] sm:$0xf]
    %v234 = vld [vmem:[%s1 + $0x328] sm:$0xf]
    %v235 = vld [vmem:[%s1 + $0x32c] sm:$0xf]
    %v236 = vld [vmem:[%s1 + $0x330] sm:$0xf]
    %v237 = vld [vmem:[%s1 + $0x334] sm:$0xf]
    %v238 = vld [vmem:[%s1 + $0x338] sm:$0xf]
    %v239 = vld [vmem:[%s1 + $0x33c] sm:$0xf]
    %v240 = vld [vmem:[%s1 + $0x340] sm:$0xf]
    %v241 = vld [vmem:[%s1 + $0x344] sm:$0xf]
    %v242 = vld [vmem:[%s1 + $0x348] sm:$0xf]
    %v243 = vld [vmem:[%s1 + $0x34c] sm:$0xf]
    %v244 = vld [vmem:[%s1 + $0x350] sm:$0xf]
    %v245 = vld [vmem:[%s1 + $0x354] sm:$0xf]
    %v246 = vld [vmem:[%s1 + $0x358] sm:$0xf]
    %v247 = vld [vmem:[%s1 + $0x35c] sm:$0xf]
    %v248 = vld [vmem:[%s1 + $0x360] sm:$0xf]
    %v249 = vld [vmem:[%s1 + $0x364] sm:$0xf]
    %v250 = vld [vmem:[%s1 + $0x368] sm:$0xf]
    %v251 = vld [vmem:[%s1 + $0x36c] sm:$0xf]
    %v252 = vld [vmem:[%s1 + $0x370] sm:$0xf]
    %v253 = vld [vmem:[%s1 + $0x374] sm:$0xf]
    %v254 = vld [vmem:[%s1 + $0x378] sm:$0xf]
    %v255 = vld [vmem:[%s1 + $0x37c] sm:$0xf]
    %v256 = vld [vmem:[%s1 + $0x380] sm:$0xf]
    %v257 = vld [vmem:[%s1 + $0x384] sm:$0xf]
    %v258 = vld [vmem:[%s1 + $0x388] sm:$0xf]
    %v259 = vld [vmem:[%s1 + $0x38c] sm:$0xf]
    %v260 = vld [vmem:[%s1 + $0x390] sm:$0xf]
    %v261 = vld [vmem:[%s1 + $0x394] sm:$0xf]
    %v262 = vld [vmem:[%s1 + $0x398] sm:$0xf]
    %v263 = vld [vmem:[%s1 + $0x39c] sm:$0xf]
    %v264 = vld [vmem:[%s1 + $0x3a0] sm:$0xf]
    %v265 = vld [vmem:[%s1 + $0x3a4] sm:$0xf]
    %v266 = vld [vmem:[%s1 + $0x3a8] sm:$0xf]
    %v267 = vld [vmem:[%s1 + $0x3ac] sm:$0xf]
    %v268 = vld [vmem:[%s1 + $0x3b0] sm:$0xf]
    %v269 = vld [vmem:[%s1 + $0x3b4] sm:$0xf]
    %v270 = vld [vmem:[%s1 + $0x3b8] sm:$0xf]
    %v271 = vld [vmem:[%s1 + $0x3bc] sm:$0xf]
    %v272 = vld [vmem:[%s1 + $0x3c0] sm:$0xf]
    %v273 = vld [vmem:[%s1 + $0x3c4] sm:$0xf]
    %v274 = vld [vmem:[%s1 + $0x3c8] sm:$0xf]
    %v275 = vld [vmem:[%s1 + $0x3cc] sm:$0xf]
    %v276 = vld [vmem:[%s1 + $0x3d0] sm:$0xf]
    %v277 = vld [vmem:[%s1 + $0x3d4] sm:$0xf]
    %v278 = vld [vmem:[%s1 + $0x3d8] sm:$0xf]
    %v279 = vld [vmem:[%s1 + $0x3dc] sm:$0xf]
    %v280 = vld [vmem:[%s1 + $0x3e0] sm:$0xf]
    %v281 = vld [vmem:[%s1 + $0x3e4] sm:$0xf]
    %v282 = vld [vmem:[%s1 + $0x3e8] sm:$0xf]
    %v283 = vld [vmem:[%s1 + $0x3ec] sm:$0xf]
    %v284 = vld [vmem:[%s1 + $0x3f0] sm:$0xf]
    %v285 = vld [vmem:[%s1 + $0x3f4] sm:$0xf]
    %v286 = vld [vmem:[%s1 + $0x3f8] sm:$0xf]
    %v287 = vld [vmem:[%s1 + $0x3fc] sm:$0xf]
    %v288 = vld [vmem:[%s1 + $0x400] sm:$0xf]
    %v289 = vld [vmem:[%s1 + $0x404] sm:$0xf]
    %v290 = vld [vmem:[%s1 + $0x408] sm:$0xf]
    %v291 = vld [vmem:[%s1 + $0x40c] sm:$0xf]
    %v292 = vld [vmem:[%s1 + $0x410] sm:$0xf]
    %v293 = vld [vmem:[%s1 + $0x414] sm:$0xf]
    %v294 = vld [vmem:[%s1 + $0x418] sm:$0xf]
    %v295 = vld [vmem:[%s1 + $0x41c] sm:$0xf]
    %v296 = vld [vmem:[%s1 + $0x420] sm:$0xf]
    %v297 = vld [vmem:[%s1 + $0x424] sm:$0xf]
    %v298 = vld [vmem:[%s1 + $0x428] sm:$0xf]
    %v299 = vld [vmem:[%s1 + $0x42c] sm:$0xf]
    %v300 = vld [vmem:[%s1 + $0x430] sm:$0xf]
    %v301 = vld [vmem:[%s1 + $0x434] sm:$0xf]
    %v302 = vld [vmem:[%s1 + $0x438] sm:$0xf]
    %v303 = vld [vmem:[%s1 + $0x43c] sm:$0xf]
    %v304 = vld [vmem:[%s1 + $0x440] sm:$0xf]
    %v305 = vld [vmem:[%s1 + $0x444] sm:$0xf]
    %v306 = vld [vmem:[%s1 + $0x448] sm:$0xf]
    %v307 = vld [vmem:[%s1 + $0x44c] sm:$0xf]
    %v308 = vld [vmem:[%s1 + $0x450] sm:$0xf]
    %v309 = vld [vmem:[%s1 + $0x454] sm:$0xf]
    %v310 = vld [vmem:[%s1 + $0x458] sm:$0xf]
    %v311 = vld [vmem:[%s1 + $0x45c] sm:$0xf]
    %v312 = vld [vmem:[%s1 + $0x460] sm:$0xf]
    %v313 = vld [vmem:[%s1 + $0x464] sm:$0xf]
    %v314 = vld [vmem:[%s1 + $0x468] sm:$0xf]
    %v315 = vld [vmem:[%s1 + $0x46c] sm:$0xf]
    %v316 = vld [vmem:[%s1 + $0x470] sm:$0xf]
    %v317 = vld [vmem:[%s1 + $0x474] sm:$0xf]
    %v318 = vld [vmem:[%s1 + $0x478] sm:$0xf]
    %v319 = vld [vmem:[%s1 + $0x47c] sm:$0xf]
    %v320 = vld [vmem:[%s1 + $0x480] sm:$0xf]
    %v321 = vld [vmem:[%s1 + $0x484] sm:$0xf]
    %v322 = vld [vmem:[%s1 + $0x488] sm:$0xf]
    %v323 = vld [vmem:[%s1 + $0x48c] sm:$0xf]
    %v324 = vld [vmem:[%s1 + $0x490] sm:$0xf]
    %v325 = vld [vmem:[%s1 + $0x494] sm:$0xf]
    %v326 = vld [vmem:[%s1 + $0x498] sm:$0xf]
    %v327 = vld [vmem:[%s1 + $0x49c] sm:$0xf]
    %v328 = vld [vmem:[%s1 + $0x4a0] sm:$0xf]
    %v329 = vld [vmem:[%s1 + $0x4a4] sm:$0xf]
    %v330 = vld [vmem:[%s1 + $0x4a8] sm:$0xf]
    %v331 = vld [vmem:[%s1 + $0x4ac] sm:$0xf]
    %v332 = vld [vmem:[%s1 + $0x4b0] sm:$0xf]
    %v333 = vld [vmem:[%s1 + $0x4b4] sm:$0xf]
    %v334 = vld [vmem:[%s1 + $0x4b8] sm:$0xf]
    %v335 = vld [vmem:[%s1 + $0x4bc] sm:$0xf]
    %v336 = vld [vmem:[%s1 + $0x4c0] sm:$0xf]
    %v337 = vld [vmem:[%s1 + $0x4c4] sm:$0xf]
    %v338 = vld [vmem:[%s1 + $0x4c8] sm:$0xf]
    %v339 = vld [vmem:[%s1 + $0x4cc] sm:$0xf]
    %v340 = vld [vmem:[%s1 + $0x4d0] sm:$0xf]
    %v341 = vld [vmem:[%s1 + $0x4d4] sm:$0xf]
    %v342 = vld [vmem:[%s1 + $0x4d8] sm:$0xf]
    %v343 = vld [vmem:[%s1 + $0x4dc] sm:$0xf]
    %v344 = vld [vmem:[%s1 + $0x4e0] sm:$0xf]
    %v345 = vld [vmem:[%s1 + $0x4e4] sm:$0xf]
    %v346 = vld [vmem:[%s1 + $0x4e8] sm:$0xf]
    %v347 = vld [vmem:[%s1 + $0x4ec] sm:$0xf]
    %v348 = vld [vmem:[%s1 + $0x4f0] sm:$0xf]
    %v349 = vld [vmem:[%s1 + $0x4f4] sm:$0xf]
    %v350 = vld [vmem:[%s1 + $0x4f8] sm:$0xf]
    %v351 = vld [vmem:[%s1 + $0x4fc] sm:$0xf]
    %v352 = vld [vmem:[%s1 + $0x500] sm:$0xf]
    %v353 = vld [vmem:[%s1 + $0x504] sm:$0xf]
    %v354 = vld [vmem:[%s1 + $0x508] sm:$0xf]
    %v355 = vld [vmem:[%s1 + $0x50c] sm:$0xf]
    %v356 = vld [vmem:[%s1 + $0x510] sm:$0xf]
    %v357 = vld [vmem:[%s1 + $0x514] sm:$0xf]
    %v358 = vld [vmem:[%s1 + $0x518] sm:$0xf]
    %v359 = vld [vmem:[%s1 + $0x51c] sm:$0xf]
    %v360 = vld [vmem:[%s1 + $0x520] sm:$0xf]
    %v361 = vld [vmem:[%s1 + $0x524] sm:$0xf]
    %v362 = vld [vmem:[%s1 + $0x528] sm:$0xf]
    %v363 = vld [vmem:[%s1 + $0x52c] sm:$0xf]
    %v364 = vld [vmem:[%s1 + $0x530] sm:$0xf]
    %v365 = vld [vmem:[%s1 + $0x534] sm:$0xf]
    %v366 = vld [vmem:[%s1 + $0x538] sm:$0xf]
    %v367 = vld [vmem:[%s1 + $0x53c] sm:$0xf]
    %v368 = vld [vmem:[%s1 + $0x540] sm:$0xf]
    %v369 = vld [vmem:[%s1 + $0x544] sm:$0xf]
    %v370 = vld [vmem:[%s1 + $0x548] sm:$0xf]
    %v371 = vld [vmem:[%s1 + $0x54c] sm:$0xf]
    %v372 = vld [vmem:[%s1 + $0x550] sm:$0xf]
    %v373 = vld [vmem:[%s1 + $0x554] sm:$0xf]
    %v374 = vld [vmem:[%s1 + $0x558] sm:$0xf]
    %v375 = vld [vmem:[%s1 + $0x55c] sm:$0xf]
    %v376 = vld [vmem:[%s1 + $0x560] sm:$0xf]
    %v377 = vld [vmem:[%s1 + $0x564] sm:$0xf]
    %v378 = vld [vmem:[%s1 + $0x568] sm:$0xf]
    %v379 = vld [vmem:[%s1 + $0x56c] sm:$0xf]
    %v380 = vld [vmem:[%s1 + $0x570] sm:$0xf]
    %v381 = vld [vmem:[%s1 + $0x574] sm:$0xf]
    %v382 = vld [vmem:[%s1 + $0x578] sm:$0xf]
    %v383 = vld [vmem:[%s1 + $0x57c] sm:$0xf]
    %v384 = vld [vmem:[%s1 + $0x580] sm:$0xf]
    %v385 = vld [vmem:[%s1 + $0x584] sm:$0xf]
    %v386 = vld [vmem:[%s1 + $0x588] sm:$0xf]
    %v387 = vld [vmem:[%s1 + $0x58c] sm:$0xf]
    %v388 = vld [vmem:[%s1 + $0x590] sm:$0xf]
    %v389 = vld [vmem:[%s1 + $0x594] sm:$0xf]
    %v390 = vld [vmem:[%s1 + $0x598] sm:$0xf]
    %v391 = vld [vmem:[%s1 + $0x59c] sm:$0xf]
    %v392 = vld [vmem:[%s1 + $0x5a0] sm:$0xf]
    %v393 = vld [vmem:[%s1 + $0x5a4] sm:$0xf]
    %v394 = vld [vmem:[%s1 + $0x5a8] sm:$0xf]
    %v395 = vld [vmem:[%s1 + $0x5ac] sm:$0xf]
    %v396 = vld [vmem:[%s1 + $0x5b0] sm:$0xf]
    %v397 = vld [vmem:[%s1 + $0x5b4] sm:$0xf]
    %v398 = vld [vmem:[%s1 + $0x5b8] sm:$0xf]
    %v399 = vld [vmem:[%s1 + $0x5bc] sm:$0xf]
    %v400 = vld [vmem:[%s1 + $0x5c0] sm:$0xf]
    %v401 = vld [vmem:[%s1 + $0x5c4] sm:$0xf]
    %v402 = vld [vmem:[%s1 + $0x5c8] sm:$0xf]
    %v403 = vld [vmem:[%s1 + $0x5cc] sm:$0xf]
    %v404 = vld [vmem:[%s1 + $0x5d0] sm:$0xf]
    %v405 = vld [vmem:[%s1 + $0x5d4] sm:$0xf]
    %v406 = vld [vmem:[%s1 + $0x5d8] sm:$0xf]
    %v407 = vld [vmem:[%s1 + $0x5dc] sm:$0xf]
    %v408 = vld [vmem:[%s1 + $0x5e0] sm:$0xf]
    %v409 = vld [vmem:[%s1 + $0x5e4] sm:$0xf]
    %v410 = vld [vmem:[%s1 + $0x5e8] sm:$0xf]
    %v411 = vld [vmem:[%s1 + $0x5ec] sm:$0xf]
    %v412 = vld [vmem:[%s1 + $0x5f0] sm:$0xf]
    %v413 = vld [vmem:[%s1 + $0x5f4] sm:$0xf]
    %v414 = vld [vmem:[%s1 + $0x5f8] sm:$0xf]
    %v415 = vld [vmem:[%s1 + $0x5fc] sm:$0xf]
    %v416 = vld [vmem:[%s1 + $0x600] sm:$0xf]
    %v417 = vld [vmem:[%s1 + $0x604] sm:$0xf]
    %v418 = vld [vmem:[%s1 + $0x608] sm:$0xf]
    %v419 = vld [vmem:[%s1 + $0x60c] sm:$0xf]
    %v420 = vld [vmem:[%s1 + $0x610] sm:$0xf]
    %v421 = vld [vmem:[%s1 + $0x614] sm:$0xf]
    %v422 = vld [vmem:[%s1 + $0x618] sm:$0xf]
    %v423 = vld [vmem:[%s1 + $0x61c] sm:$0xf]
    %v424 = vld [vmem:[%s1 + $0x620] sm:$0xf]
    %v425 = vld [vmem:[%s1 + $0x624] sm:$0xf]
    %v426 = vld [vmem:[%s1 + $0x628] sm:$0xf]
    %v427 = vld [vmem:[%s1 + $0x62c] sm:$0xf]
    %v428 = vld [vmem:[%s1 + $0x630] sm:$0xf]
    %v429 = vld [vmem:[%s1 + $0x634] sm:$0xf]
    %v430 = vld [vmem:[%s1 + $0x638] sm:$0xf]
    %v431 = vld [vmem:[%s1 + $0x63c] sm:$0xf]
    %v432 = vld [vmem:[%s1 + $0x640] sm:$0xf]
    %v433 = vld [vmem:[%s1 + $0x644] sm:$0xf]
    %v434 = vld [vmem:[%s1 + $0x648] sm:$0xf]
    %v435 = vld [vmem:[%s1 + $0x64c] sm:$0xf]
    %v436 = vld [vmem:[%s1 + $0x650] sm:$0xf]
    %v437 = vld [vmem:[%s1 + $0x654] sm:$0xf]
    %v438 = vld [vmem:[%s1 + $0x658] sm:$0xf]
    %v439 = vld [vmem:[%s1 + $0x65c] sm:$0xf]
    %v440 = vld [vmem:[%s1 + $0x660] sm:$0xf]
    %v441 = vld [vmem:[%s1 + $0x664] sm:$0xf]
    %v442 = vld [vmem:[%s1 + $0x668] sm:$0xf]
    %v443 = vld [vmem:[%s1 + $0x66c] sm:$0xf]
    %v444 = vld [vmem:[%s1 + $0x670] sm:$0xf]
    %v445 = vld [vmem:[%s1 + $0x674] sm:$0xf]
    %v446 = vld [vmem:[%s1 + $0x678] sm:$0xf]
    %v447 = vld [vmem:[%s1 + $0x67c] sm:$0xf]
    %v448 = vld [vmem:[%s1 + $0x680] sm:$0xf]
    %v449 = vld [vmem:[%s1 + $0x684] sm:$0xf]
    %v450 = vld [vmem:[%s1 + $0x688] sm:$0xf]
    %v451 = vld [vmem:[%s1 + $0x68c] sm:$0xf]
    %v452 = vld [vmem:[%s1 + $0x690] sm:$0xf]
    %v453 = vld [vmem:[%s1 + $0x694] sm:$0xf]
    %v454 = vld [vmem:[%s1 + $0x698] sm:$0xf]
    %v455 = vld [vmem:[%s1 + $0x69c] sm:$0xf]
    %v456 = vld [vmem:[%s1 + $0x6a0] sm:$0xf]
    %v457 = vld [vmem:[%s1 + $0x6a4] sm:$0xf]
    %v458 = vld [vmem:[%s1 + $0x6a8] sm:$0xf]
    %v459 = vld [vmem:[%s1 + $0x6ac] sm:$0xf]
    %v460 = vld [vmem:[%s1 + $0x6b0] sm:$0xf]
    %v461 = vld [vmem:[%s1 + $0x6b4] sm:$0xf]
    %v462 = vld [vmem:[%s1 + $0x6b8] sm:$0xf]
    %v463 = vld [vmem:[%s1 + $0x6bc] sm:$0xf]
    %v464 = vld [vmem:[%s1 + $0x6c0] sm:$0xf]
    %v465 = vld [vmem:[%s1 + $0x6c4] sm:$0xf]
    %v466 = vld [vmem:[%s1 + $0x6c8] sm:$0xf]
    %v467 = vld [vmem:[%s1 + $0x6cc] sm:$0xf]
    %v468 = vld [vmem:[%s1 + $0x6d0] sm:$0xf]
    %v469 = vld [vmem:[%s1 + $0x6d4] sm:$0xf]
    %v470 = vld [vmem:[%s1 + $0x6d8] sm:$0xf]
    %v471 = vld [vmem:[%s1 + $0x6dc] sm:$0xf]
    %v472 = vld [vmem:[%s1 + $0x6e0] sm:$0xf]
    %v473 = vld [vmem:[%s1 + $0x6e4] sm:$0xf]
    %v474 = vld [vmem:[%s1 + $0x6e8] sm:$0xf]
    %v475 = vld [vmem:[%s1 + $0x6ec] sm:$0xf]
    %v476 = vld [vmem:[%s1 + $0x6f0] sm:$0xf]
    %v477 = vld [vmem:[%s1 + $0x6f4] sm:$0xf]
    %v478 = vld [vmem:[%s1 + $0x6f8] sm:$0xf]
    %v479 = vld [vmem:[%s1 + $0x6fc] sm:$0xf]
    %v480 = vld [vmem:[%s1 + $0x700] sm:$0xf]
    %v481 = vld [vmem:[%s1 + $0x704] sm:$0xf]
    %v482 = vld [vmem:[%s1 + $0x708] sm:$0xf]
    %v483 = vld [vmem:[%s1 + $0x70c] sm:$0xf]
    %v484 = vld [vmem:[%s1 + $0x710] sm:$0xf]
    %v485 = vld [vmem:[%s1 + $0x714] sm:$0xf]
    %v486 = vld [vmem:[%s1 + $0x718] sm:$0xf]
    %v487 = vld [vmem:[%s1 + $0x71c] sm:$0xf]
    %v488 = vld [vmem:[%s1 + $0x720] sm:$0xf]
    %v489 = vld [vmem:[%s1 + $0x724] sm:$0xf]
    %v490 = vld [vmem:[%s1 + $0x728] sm:$0xf]
    %v491 = vld [vmem:[%s1 + $0x72c] sm:$0xf]
    %v492 = vld [vmem:[%s1 + $0x730] sm:$0xf]
    %v493 = vld [vmem:[%s1 + $0x734] sm:$0xf]
    %v494 = vld [vmem:[%s1 + $0x738] sm:$0xf]
    %v495 = vld [vmem:[%s1 + $0x73c] sm:$0xf]
    %v496 = vld [vmem:[%s1 + $0x740] sm:$0xf]
    %v497 = vld [vmem:[%s1 + $0x744] sm:$0xf]
    %v498 = vld [vmem:[%s1 + $0x748] sm:$0xf]
    %v499 = vld [vmem:[%s1 + $0x74c] sm:$0xf]
    %v500 = vld [vmem:[%s1 + $0x750] sm:$0xf]
    %v501 = vld [vmem:[%s1 + $0x754] sm:$0xf]
    %v502 = vld [vmem:[%s1 + $0x758] sm:$0xf]
    %v503 = vld [vmem:[%s1 + $0x75c] sm:$0xf]
    %v504 = vld [vmem:[%s1 + $0x760] sm:$0xf]
    %v505 = vld [vmem:[%s1 + $0x764] sm:$0xf]
    %v506 = vld [vmem:[%s1 + $0x768] sm:$0xf]
    %v507 = vld [vmem:[%s1 + $0x76c] sm:$0xf]
    %v508 = vld [vmem:[%s1 + $0x770] sm:$0xf]
    %v509 = vld [vmem:[%s1 + $0x774] sm:$0xf]
    %v510 = vld [vmem:[%s1 + $0x778] sm:$0xf]
    %v511 = vld [vmem:[%s1 + $0x77c] sm:$0xf]
    %v512 = vld [vmem:[%s1 + $0x780] sm:$0xf]
    %v513 = vld [vmem:[%s1 + $0x784] sm:$0xf]
    %v514 = vld [vmem:[%s1 + $0x788] sm:$0xf]
    %v515 = vld [vmem:[%s1 + $0x78c] sm:$0xf]
    %v516 = vld [vmem:[%s1 + $0x790] sm:$0xf]
    %v517 = vld [vmem:[%s1 + $0x794] sm:$0xf]
    %v518 = vld [vmem:[%s1 + $0x798] sm:$0xf]
    %v519 = vld [vmem:[%s1 + $0x79c] sm:$0xf]
    %v520 = vld [vmem:[%s1 + $0x7a0] sm:$0xf]
    %v521 = vld [vmem:[%s1 + $0x7a4] sm:$0xf]
    %v522 = vld [vmem:[%s1 + $0x7a8] sm:$0xf]
    %v523 = vld [vmem:[%s1 + $0x7ac] sm:$0xf]
    %v524 = vld [vmem:[%s1 + $0x7b0] sm:$0xf]
    %v525 = vld [vmem:[%s1 + $0x7b4] sm:$0xf]
    %v526 = vld [vmem:[%s1 + $0x7b8] sm:$0xf]
    %v527 = vld [vmem:[%s1 + $0x7bc] sm:$0xf]
    %v528 = vld [vmem:[%s1 + $0x7c0] sm:$0xf]
    %v529 = vld [vmem:[%s1 + $0x7c4] sm:$0xf]
    %v530 = vld [vmem:[%s1 + $0x7c8] sm:$0xf]
    %v531 = vld [vmem:[%s1 + $0x7cc] sm:$0xf]
    %v532 = vld [vmem:[%s1 + $0x7d0] sm:$0xf]
    %v533 = vld [vmem:[%s1 + $0x7d4] sm:$0xf]
    %v534 = vld [vmem:[%s1 + $0x7d8] sm:$0xf]
    %v535 = vld [vmem:[%s1 + $0x7dc] sm:$0xf]
    %v536 = vld [vmem:[%s1 + $0x7e0] sm:$0xf]
    %v537 = vld [vmem:[%s1 + $0x7e4] sm:$0xf]
    %v538 = vld [vmem:[%s1 + $0x7e8] sm:$0xf]
    %v539 = vld [vmem:[%s1 + $0x7ec] sm:$0xf]
    %v540 = vld [vmem:[%s1 + $0x7f0] sm:$0xf]
    %v541 = vld [vmem:[%s1 + $0x7f4] sm:$0xf]
    %v542 = vld [vmem:[%s1 + $0x7f8] sm:$0xf]
    %v543 = vld [vmem:[%s1 + $0x7fc] sm:$0xf]
    %v544 = vld [vmem:[%s1 + $0x800] sm:$0xf]
    %v545 = vld [vmem:[%s1 + $0x804] sm:$0xf]
    %v546 = vld [vmem:[%s1 + $0x808] sm:$0xf]
    %v547 = vld [vmem:[%s1 + $0x80c] sm:$0xf]
    %v548 = vld [vmem:[%s1 + $0x810] sm:$0xf]
    %v549 = vld [vmem:[%s1 + $0x814] sm:$0xf]
    %v550 = vld [vmem:[%s1 + $0x818] sm:$0xf]
    %v551 = vld [vmem:[%s1 + $0x81c] sm:$0xf]
    %v552 = vld [vmem:[%s1 + $0x820] sm:$0xf]
    %v553 = vld [vmem:[%s1 + $0x824] sm:$0xf]
    %v554 = vld [vmem:[%s1 + $0x828] sm:$0xf]
    %v555 = vld [vmem:[%s1 + $0x82c] sm:$0xf]
    %v556 = vld [vmem:[%s1 + $0x830] sm:$0xf]
    %v557 = vld [vmem:[%s1 + $0x834] sm:$0xf]
    %v558 = vld [vmem:[%s1 + $0x838] sm:$0xf]
    %v559 = vld [vmem:[%s1 + $0x83c] sm:$0xf]
    %v560 = vld [vmem:[%s1 + $0x840] sm:$0xf]
    %v561 = vld [vmem:[%s1 + $0x844] sm:$0xf]
    %v562 = vld [vmem:[%s1 + $0x848] sm:$0xf]
    %v563 = vld [vmem:[%s1 + $0x84c] sm:$0xf]
    %v564 = vld [vmem:[%s1 + $0x850] sm:$0xf]
    %v565 = vld [vmem:[%s1 + $0x854] sm:$0xf]
    %v566 = vld [vmem:[%s1 + $0x858] sm:$0xf]
    %v567 = vld [vmem:[%s1 + $0x85c] sm:$0xf]
    %v568 = vld [vmem:[%s1 + $0x860] sm:$0xf]
    %v569 = vld [vmem:[%s1 + $0x864] sm:$0xf]
    %v570 = vld [vmem:[%s1 + $0x868] sm:$0xf]
    %v571 = vld [vmem:[%s1 + $0x86c] sm:$0xf]
    %v572 = vld [vmem:[%s1 + $0x870] sm:$0xf]
    %v573 = vld [vmem:[%s1 + $0x874] sm:$0xf]
    %v574 = vld [vmem:[%s1 + $0x878] sm:$0xf]
    %v575 = vld [vmem:[%s1 + $0x87c] sm:$0xf]
    %v576 = vld [vmem:[%s1 + $0x880] sm:$0xf]
    %v577 = vld [vmem:[%s1 + $0x884] sm:$0xf]
    %v578 = vld [vmem:[%s1 + $0x888] sm:$0xf]
    %v579 = vld [vmem:[%s1 + $0x88c] sm:$0xf]
    %v580 = vld [vmem:[%s1 + $0x890] sm:$0xf]
    %v581 = vld [vmem:[%s1 + $0x894] sm:$0xf]
    %v582 = vld [vmem:[%s1 + $0x898] sm:$0xf]
    %v583 = vld [vmem:[%s1 + $0x89c] sm:$0xf]
    %v584 = vld [vmem:[%s1 + $0x8a0] sm:$0xf]
    %v585 = vld [vmem:[%s1 + $0x8a4] sm:$0xf]
    %v586 = vld [vmem:[%s1 + $0x8a8] sm:$0xf]
    %v587 = vld [vmem:[%s1 + $0x8ac] sm:$0xf]
    %v588 = vld [vmem:[%s1 + $0x8b0] sm:$0xf]
    %v589 = vld [vmem:[%s1 + $0x8b4] sm:$0xf]
    %v590 = vld [vmem:[%s1 + $0x8b8] sm:$0xf]
    %v591 = vld [vmem:[%s1 + $0x8bc] sm:$0xf]
    %v592 = vld [vmem:[%s1 + $0x8c0] sm:$0xf]
    %v593 = vld [vmem:[%s1 + $0x8c4] sm:$0xf]
    %v594 = vld [vmem:[%s1 + $0x8c8] sm:$0xf]
    %v595 = vld [vmem:[%s1 + $0x8cc] sm:$0xf]
    %v596 = vld [vmem:[%s1 + $0x8d0] sm:$0xf]
    %v597 = vld [vmem:[%s1 + $0x8d4] sm:$0xf]
    %v598 = vld [vmem:[%s1 + $0x8d8] sm:$0xf]
    %v599 = vld [vmem:[%s1 + $0x8dc] sm:$0xf]
    %v600 = vld [vmem:[%s1 + $0x8e0] sm:$0xf]
    %v601 = vld [vmem:[%s1 + $0x8e4] sm:$0xf]
    %v602 = vld [vmem:[%s1 + $0x8e8] sm:$0xf]
    %v603 = vld [vmem:[%s1 + $0x8ec] sm:$0xf]
    %v604 = vld [vmem:[%s1 + $0x8f0] sm:$0xf]
    %v605 = vld [vmem:[%s1 + $0x8f4] sm:$0xf]
    %v606 = vld [vmem:[%s1 + $0x8f8] sm:$0xf]
    %v607 = vld [vmem:[%s1 + $0x8fc] sm:$0xf]
    %v608 = vld [vmem:[%s2] sm:$0x1]
    %v610 = vperm.slane %v608, 0
    %613 = vst [vmem:[#allocation1] ss:$9 sm:$0xff] %v27
    %v614 = vld [vmem:[#allocation1] sm:$0xff]
    %v615 = vld [vmem:[#allocation1 + $0x9] sm:$0xff]
    %v616 = vld [vmem:[#allocation1 + $0x12] sm:$0xff]
    %v617 = vld [vmem:[#allocation1 + $0x1b] sm:$0xff]
    %v618 = vld [vmem:[#allocation1 + $0x24] sm:$0xff]
    %v619 = vld [vmem:[#allocation1 + $0x2d] sm:$0xff]
    %v620 = vld [vmem:[#allocation1 + $0x36] sm:$0xff]
    %v621 = vld [vmem:[#allocation1 + $0x3f] sm:$0xff]
    %623 = vst [vmem:[#allocation1] ss:$9 sm:$0xff] %v28
    %v624 = vld [vmem:[#allocation1] sm:$0xff]
    %v625 = vld [vmem:[#allocation1 + $0x9] sm:$0xff]
    %v626 = vld [vmem:[#allocation1 + $0x12] sm:$0xff]
    %v627 = vld [vmem:[#allocation1 + $0x1b] sm:$0xff]
    %v628 = vld [vmem:[#allocation1 + $0x24] sm:$0xff]
    %v629 = vld [vmem:[#allocation1 + $0x2d] sm:$0xff]
    %v630 = vld [vmem:[#allocation1 + $0x36] sm:$0xff]
    %v631 = vld [vmem:[#allocation1 + $0x3f] sm:$0xff]
    %633 = vst [vmem:[#allocation1] ss:$9 sm:$0xff] %v29
    %v634 = vld [vmem:[#allocation1] sm:$0xff]
    %v635 = vld [vmem:[#allocation1 + $0x9] sm:$0xff]
    %v636 = vld [vmem:[#allocation1 + $0x12] sm:$0xff]
    %v637 = vld [vmem:[#allocation1 + $0x1b] sm:$0xff]
    %v638 = vld [vmem:[#allocation1 + $0x24] sm:$0xff]
    %v639 = vld [vmem:[#allocation1 + $0x2d] sm:$0xff]
    %v640 = vld [vmem:[#allocation1 + $0x36] sm:$0xff]
    %v641 = vld [vmem:[#allocation1 + $0x3f] sm:$0xff]
    %643 = vst [vmem:[#allocation1] ss:$9 sm:$0xff] %v30
    %v644 = vld [vmem:[#allocation1] sm:$0xff]
    %v645 = vld [vmem:[#allocation1 + $0x9] sm:$0xff]
    %v646 = vld [vmem:[#allocation1 + $0x12] sm:$0xff]
    %v647 = vld [vmem:[#allocation1 + $0x1b] sm:$0xff]
    %v648 = vld [vmem:[#allocation1 + $0x24] sm:$0xff]
    %v649 = vld [vmem:[#allocation1 + $0x2d] sm:$0xff]
    %v650 = vld [vmem:[#allocation1 + $0x36] sm:$0xff]
    %v651 = vld [vmem:[#allocation1 + $0x3f] sm:$0xff]
    %653 = vst [vmem:[#allocation1] ss:$9 sm:$0xff] %v31
    %v654 = vld [vmem:[#allocation1] sm:$0xff]
    %v655 = vld [vmem:[#allocation1 + $0x9] sm:$0xff]
    %v656 = vld [vmem:[#allocation1 + $0x12] sm:$0xff]
    %v657 = vld [vmem:[#allocation1 + $0x1b] sm:$0xff]
    %v1270 = vunpack.c.l.b16 %v32
    %v1271 = vunpack.c.l.b16 %v33
    %v1272 = vunpack.c.l.b16 %v34
    %v1273 = vunpack.c.l.b16 %v35
    %v1274 = vunpack.c.l.b16 %v36
    %v1275 = vunpack.c.l.b16 %v37
    %v1276 = vunpack.c.l.b16 %v38
    %v1277 = vunpack.c.l.b16 %v39
    %v1278 = vunpack.c.l.b16 %v40
    %v1279 = vunpack.c.l.b16 %v41
    %v1280 = vunpack.c.l.b16 %v42
    %v1281 = vunpack.c.l.b16 %v43
    %v1282 = vunpack.c.l.b16 %v44
    %v1283 = vunpack.c.l.b16 %v45
    %v1284 = vunpack.c.l.b16 %v46
    %v1285 = vunpack.c.l.b16 %v47
    %v1286 = vunpack.c.l.b16 %v48
    %v1287 = vunpack.c.l.b16 %v49
    %v1288 = vunpack.c.l.b16 %v50
    %v1289 = vunpack.c.l.b16 %v51
    %v1290 = vunpack.c.l.b16 %v52
    %v1291 = vunpack.c.l.b16 %v53
    %v1292 = vunpack.c.l.b16 %v54
    %v1293 = vunpack.c.l.b16 %v55
    %v1294 = vunpack.c.l.b16 %v56
    %v1295 = vunpack.c.l.b16 %v57
    %v1296 = vunpack.c.l.b16 %v58
    %v1297 = vunpack.c.l.b16 %v59
    %v1298 = vunpack.c.l.b16 %v60
    %v1299 = vunpack.c.l.b16 %v61
    %v1300 = vunpack.c.l.b16 %v62
    %v1301 = vunpack.c.l.b16 %v63
    %v1302 = vunpack.c.l.b16 %v64
    %v1303 = vunpack.c.l.b16 %v65
    %v1304 = vunpack.c.l.b16 %v66
    %v1305 = vunpack.c.l.b16 %v67
    %v1306 = vunpack.c.l.b16 %v68
    %v1307 = vunpack.c.l.b16 %v69
    %v1308 = vunpack.c.l.b16 %v70
    %v1309 = vunpack.c.l.b16 %v71
    %v1310 = vunpack.c.l.b16 %v72
    %v1311 = vunpack.c.l.b16 %v73
    %v1312 = vunpack.c.l.b16 %v74
    %v1313 = vunpack.c.l.b16 %v75
    %v1314 = vunpack.c.l.b16 %v76
    %v1315 = vunpack.c.l.b16 %v77
    %v1316 = vunpack.c.l.b16 %v78
    %v1317 = vunpack.c.l.b16 %v79
    %v1318 = vunpack.c.l.b16 %v80
    %v1319 = vunpack.c.l.b16 %v81
    %v1320 = vunpack.c.l.b16 %v82
    %v1321 = vunpack.c.l.b16 %v83
    %v1322 = vunpack.c.l.b16 %v84
    %v1323 = vunpack.c.l.b16 %v85
    %v1324 = vunpack.c.l.b16 %v86
    %v1325 = vunpack.c.l.b16 %v87
    %v1326 = vunpack.c.l.b16 %v88
    %v1327 = vunpack.c.l.b16 %v89
    %v1328 = vunpack.c.l.b16 %v90
    %v1329 = vunpack.c.l.b16 %v91
    %v1330 = vunpack.c.l.b16 %v92
    %v1331 = vunpack.c.l.b16 %v93
    %v1332 = vunpack.c.l.b16 %v94
    %v1333 = vunpack.c.l.b16 %v95
    %v1334 = vunpack.c.l.b16 %v96
    %v1335 = vunpack.c.l.b16 %v97
    %v1336 = vunpack.c.l.b16 %v98
    %v1337 = vunpack.c.l.b16 %v99
    %v1338 = vunpack.c.l.b16 %v100
    %v1339 = vunpack.c.l.b16 %v101
    %v1340 = vunpack.c.l.b16 %v102
    %v1341 = vunpack.c.l.b16 %v103
    %v1342 = vunpack.c.l.b16 %v104
    %v1343 = vunpack.c.l.b16 %v105
    %v1344 = vunpack.c.l.b16 %v106
    %v1345 = vunpack.c.l.b16 %v107
    %v1346 = vunpack.c.l.b16 %v108
    %v1347 = vunpack.c.l.b16 %v109
    %v1348 = vunpack.c.l.b16 %v110
    %v1349 = vunpack.c.l.b16 %v111
    %v1350 = vunpack.c.l.b16 %v112
    %v1351 = vunpack.c.l.b16 %v113
    %v1352 = vunpack.c.l.b16 %v114
    %v1353 = vunpack.c.l.b16 %v115
    %v1354 = vunpack.c.l.b16 %v116
    %v1355 = vunpack.c.l.b16 %v117
    %v1356 = vunpack.c.l.b16 %v118
    %v1357 = vunpack.c.l.b16 %v119
    %v1358 = vunpack.c.l.b16 %v120
    %v1359 = vunpack.c.l.b16 %v121
    %v1360 = vunpack.c.l.b16 %v122
    %v1361 = vunpack.c.l.b16 %v123
    %v1362 = vunpack.c.l.b16 %v124
    %v1363 = vunpack.c.l.b16 %v125
    %v1364 = vunpack.c.l.b16 %v126
    %v1365 = vunpack.c.l.b16 %v127
    %v1366 = vunpack.c.l.b16 %v128
    %v1367 = vunpack.c.l.b16 %v129
    %v1368 = vunpack.c.l.b16 %v130
    %v1369 = vunpack.c.l.b16 %v131
    %v1370 = vunpack.c.l.b16 %v132
    %v1371 = vunpack.c.l.b16 %v133
    %v1372 = vunpack.c.l.b16 %v134
    %v1373 = vunpack.c.l.b16 %v135
    %v1374 = vunpack.c.l.b16 %v136
    %v1375 = vunpack.c.l.b16 %v137
    %v1376 = vunpack.c.l.b16 %v138
    %v1377 = vunpack.c.l.b16 %v139
    %v1378 = vunpack.c.l.b16 %v140
    %v1379 = vunpack.c.l.b16 %v141
    %v1380 = vunpack.c.l.b16 %v142
    %v1381 = vunpack.c.l.b16 %v143
    %v1382 = vunpack.c.l.b16 %v144
    %v1383 = vunpack.c.l.b16 %v145
    %v1384 = vunpack.c.l.b16 %v146
    %v1385 = vunpack.c.l.b16 %v147
    %v1386 = vunpack.c.l.b16 %v148
    %v1387 = vunpack.c.l.b16 %v149
    %v1388 = vunpack.c.l.b16 %v150
    %v1389 = vunpack.c.l.b16 %v151
    %v1390 = vunpack.c.l.b16 %v152
    %v1391 = vunpack.c.l.b16 %v153
    %v1392 = vunpack.c.l.b16 %v154
    %v1393 = vunpack.c.l.b16 %v155
    %v1394 = vunpack.c.l.b16 %v156
    %v1395 = vunpack.c.l.b16 %v157
    %v1396 = vunpack.c.l.b16 %v158
    %v1397 = vunpack.c.l.b16 %v159
    %v1398 = vunpack.c.l.b16 %v160
    %v1399 = vunpack.c.l.b16 %v161
    %v1400 = vunpack.c.l.b16 %v162
    %v1401 = vunpack.c.l.b16 %v163
    %v1402 = vunpack.c.l.b16 %v164
    %v1403 = vunpack.c.l.b16 %v165
    %v1404 = vunpack.c.l.b16 %v166
    %v1405 = vunpack.c.l.b16 %v167
    %v1406 = vunpack.c.l.b16 %v168
    %v1407 = vunpack.c.l.b16 %v169
    %v1408 = vunpack.c.l.b16 %v170
    %v1409 = vunpack.c.l.b16 %v171
    %v1410 = vunpack.c.l.b16 %v172
    %v1411 = vunpack.c.l.b16 %v173
    %v1412 = vunpack.c.l.b16 %v174
    %v1413 = vunpack.c.l.b16 %v175
    %v1414 = vunpack.c.l.b16 %v176
    %v1415 = vunpack.c.l.b16 %v177
    %v1416 = vunpack.c.l.b16 %v178
    %v1417 = vunpack.c.l.b16 %v179
    %v1418 = vunpack.c.l.b16 %v180
    %v1419 = vunpack.c.l.b16 %v181
    %v1420 = vunpack.c.l.b16 %v182
    %v1421 = vunpack.c.l.b16 %v183
    %v1422 = vunpack.c.l.b16 %v184
    %v1423 = vunpack.c.l.b16 %v185
    %v1424 = vunpack.c.l.b16 %v186
    %v1425 = vunpack.c.l.b16 %v187
    %v1426 = vunpack.c.l.b16 %v188
    %v1427 = vunpack.c.l.b16 %v189
    %v1428 = vunpack.c.l.b16 %v190
    %v1429 = vunpack.c.l.b16 %v191
    %v1430 = vunpack.c.l.b16 %v192
    %v1431 = vunpack.c.l.b16 %v193
    %v1432 = vunpack.c.l.b16 %v194
    %v1433 = vunpack.c.l.b16 %v195
    %v1434 = vunpack.c.l.b16 %v196
    %v1435 = vunpack.c.l.b16 %v197
    %v1436 = vunpack.c.l.b16 %v198
    %v1437 = vunpack.c.l.b16 %v199
    %v1438 = vunpack.c.l.b16 %v200
    %v1439 = vunpack.c.l.b16 %v201
    %v1440 = vunpack.c.l.b16 %v202
    %v1441 = vunpack.c.l.b16 %v203
    %v1442 = vunpack.c.l.b16 %v204
    %v1443 = vunpack.c.l.b16 %v205
    %v1444 = vunpack.c.l.b16 %v206
    %v1445 = vunpack.c.l.b16 %v207
    %v1446 = vunpack.c.l.b16 %v208
    %v1447 = vunpack.c.l.b16 %v209
    %v1448 = vunpack.c.l.b16 %v210
    %v1449 = vunpack.c.l.b16 %v211
    %v1450 = vunpack.c.l.b16 %v212
    %v1451 = vunpack.c.l.b16 %v213
    %v1452 = vunpack.c.l.b16 %v214
    %v1453 = vunpack.c.l.b16 %v215
    %v1454 = vunpack.c.l.b16 %v216
    %v1455 = vunpack.c.l.b16 %v217
    %v1456 = vunpack.c.l.b16 %v218
    %v1457 = vunpack.c.l.b16 %v219
    %v1458 = vunpack.c.l.b16 %v220
    %v1459 = vunpack.c.l.b16 %v221
    %v1460 = vunpack.c.l.b16 %v222
    %v1461 = vunpack.c.l.b16 %v223
    %v1462 = vunpack.c.l.b16 %v224
    %v1463 = vunpack.c.l.b16 %v225
    %v1464 = vunpack.c.l.b16 %v226
    %v1465 = vunpack.c.l.b16 %v227
    %v1466 = vunpack.c.l.b16 %v228
    %v1467 = vunpack.c.l.b16 %v229
    %v1468 = vunpack.c.l.b16 %v230
    %v1469 = vunpack.c.l.b16 %v231
    %v1470 = vunpack.c.l.b16 %v232
    %v1471 = vunpack.c.l.b16 %v233
    %v1472 = vunpack.c.l.b16 %v234
    %v1473 = vunpack.c.l.b16 %v235
    %v1474 = vunpack.c.l.b16 %v236
    %v1475 = vunpack.c.l.b16 %v237
    %v1476 = vunpack.c.l.b16 %v238
    %v1477 = vunpack.c.l.b16 %v239
    %v1478 = vunpack.c.l.b16 %v240
    %v1479 = vunpack.c.l.b16 %v241
    %v1480 = vunpack.c.l.b16 %v242
    %v1481 = vunpack.c.l.b16 %v243
    %v1482 = vunpack.c.l.b16 %v244
    %v1483 = vunpack.c.l.b16 %v245
    %v1484 = vunpack.c.l.b16 %v246
    %v1485 = vunpack.c.l.b16 %v247
    %v1486 = vunpack.c.l.b16 %v248
    %v1487 = vunpack.c.l.b16 %v249
    %v1488 = vunpack.c.l.b16 %v250
    %v1489 = vunpack.c.l.b16 %v251
    %v1490 = vunpack.c.l.b16 %v252
    %v1491 = vunpack.c.l.b16 %v253
    %v1492 = vunpack.c.l.b16 %v254
    %v1493 = vunpack.c.l.b16 %v255
    %v1494 = vunpack.c.l.b16 %v256
    %v1495 = vunpack.c.l.b16 %v257
    %v1496 = vunpack.c.l.b16 %v258
    %v1497 = vunpack.c.l.b16 %v259
    %v1498 = vunpack.c.l.b16 %v260
    %v1499 = vunpack.c.l.b16 %v261
    %v1500 = vunpack.c.l.b16 %v262
    %v1501 = vunpack.c.l.b16 %v263
    %v1502 = vunpack.c.l.b16 %v264
    %v1503 = vunpack.c.l.b16 %v265
    %v1504 = vunpack.c.l.b16 %v266
    %v1505 = vunpack.c.l.b16 %v267
    %v1506 = vunpack.c.l.b16 %v268
    %v1507 = vunpack.c.l.b16 %v269
    %v1508 = vunpack.c.l.b16 %v270
    %v1509 = vunpack.c.l.b16 %v271
    %v1510 = vunpack.c.l.b16 %v272
    %v1511 = vunpack.c.l.b16 %v273
    %v1512 = vunpack.c.l.b16 %v274
    %v1513 = vunpack.c.l.b16 %v275
    %v1514 = vunpack.c.l.b16 %v276
    %v1515 = vunpack.c.l.b16 %v277
    %v1516 = vunpack.c.l.b16 %v278
    %v1517 = vunpack.c.l.b16 %v279
    %v1518 = vunpack.c.l.b16 %v280
    %v1519 = vunpack.c.l.b16 %v281
    %v1520 = vunpack.c.l.b16 %v282
    %v1521 = vunpack.c.l.b16 %v283
    %v1522 = vunpack.c.l.b16 %v284
    %v1523 = vunpack.c.l.b16 %v285
    %v1524 = vunpack.c.l.b16 %v286
    %v1525 = vunpack.c.l.b16 %v287
    %v1526 = vunpack.c.l.b16 %v288
    %v1527 = vunpack.c.l.b16 %v289
    %v1528 = vunpack.c.l.b16 %v290
    %v1529 = vunpack.c.l.b16 %v291
    %v1530 = vunpack.c.l.b16 %v292
    %v1531 = vunpack.c.l.b16 %v293
    %v1532 = vunpack.c.l.b16 %v294
    %v1533 = vunpack.c.l.b16 %v295
    %v1534 = vunpack.c.l.b16 %v296
    %v1535 = vunpack.c.l.b16 %v297
    %v1536 = vunpack.c.l.b16 %v298
    %v1537 = vunpack.c.l.b16 %v299
    %v1538 = vunpack.c.l.b16 %v300
    %v1539 = vunpack.c.l.b16 %v301
    %v1540 = vunpack.c.l.b16 %v302
    %v1541 = vunpack.c.l.b16 %v303
    %v1542 = vunpack.c.l.b16 %v304
    %v1543 = vunpack.c.l.b16 %v305
    %v1544 = vunpack.c.l.b16 %v306
    %v1545 = vunpack.c.l.b16 %v307
    %v1546 = vunpack.c.l.b16 %v308
    %v1547 = vunpack.c.l.b16 %v309
    %v1548 = vunpack.c.l.b16 %v310
    %v1549 = vunpack.c.l.b16 %v311
    %v1550 = vunpack.c.l.b16 %v312
    %v1551 = vunpack.c.l.b16 %v313
    %v1552 = vunpack.c.l.b16 %v314
    %v1553 = vunpack.c.l.b16 %v315
    %v1554 = vunpack.c.l.b16 %v316
    %v1555 = vunpack.c.l.b16 %v317
    %v1556 = vunpack.c.l.b16 %v318
    %v1557 = vunpack.c.l.b16 %v319
    %v1558 = vunpack.c.l.b16 %v320
    %v1559 = vunpack.c.l.b16 %v321
    %v1560 = vunpack.c.l.b16 %v322
    %v1561 = vunpack.c.l.b16 %v323
    %v1562 = vunpack.c.l.b16 %v324
    %v1563 = vunpack.c.l.b16 %v325
    %v1564 = vunpack.c.l.b16 %v326
    %v1565 = vunpack.c.l.b16 %v327
    %v1566 = vunpack.c.l.b16 %v328
    %v1567 = vunpack.c.l.b16 %v329
    %v1568 = vunpack.c.l.b16 %v330
    %v1569 = vunpack.c.l.b16 %v331
    %v1570 = vunpack.c.l.b16 %v332
    %v1571 = vunpack.c.l.b16 %v333
    %v1572 = vunpack.c.l.b16 %v334
    %v1573 = vunpack.c.l.b16 %v335
    %v1574 = vunpack.c.l.b16 %v336
    %v1575 = vunpack.c.l.b16 %v337
    %v1576 = vunpack.c.l.b16 %v338
    %v1577 = vunpack.c.l.b16 %v339
    %v1578 = vunpack.c.l.b16 %v340
    %v1579 = vunpack.c.l.b16 %v341
    %v1580 = vunpack.c.l.b16 %v342
    %v1581 = vunpack.c.l.b16 %v343
    %v1582 = vunpack.c.l.b16 %v344
    %v1583 = vunpack.c.l.b16 %v345
    %v1584 = vunpack.c.l.b16 %v346
    %v1585 = vunpack.c.l.b16 %v347
    %v1586 = vunpack.c.l.b16 %v348
    %v1587 = vunpack.c.l.b16 %v349
    %v1588 = vunpack.c.l.b16 %v350
    %v1589 = vunpack.c.l.b16 %v351
    %v1590 = vunpack.c.l.b16 %v352
    %v1591 = vunpack.c.l.b16 %v353
    %v1592 = vunpack.c.l.b16 %v354
    %v1593 = vunpack.c.l.b16 %v355
    %v1594 = vunpack.c.l.b16 %v356
    %v1595 = vunpack.c.l.b16 %v357
    %v1596 = vunpack.c.l.b16 %v358
    %v1597 = vunpack.c.l.b16 %v359
    %v1598 = vunpack.c.l.b16 %v360
    %v1599 = vunpack.c.l.b16 %v361
    %v1600 = vunpack.c.l.b16 %v362
    %v1601 = vunpack.c.l.b16 %v363
    %v1602 = vunpack.c.l.b16 %v364
    %v1603 = vunpack.c.l.b16 %v365
    %v1604 = vunpack.c.l.b16 %v366
    %v1605 = vunpack.c.l.b16 %v367
    %v1606 = vunpack.c.l.b16 %v368
    %v1607 = vunpack.c.l.b16 %v369
    %v1608 = vunpack.c.l.b16 %v370
    %v1609 = vunpack.c.l.b16 %v371
    %v1610 = vunpack.c.l.b16 %v372
    %v1611 = vunpack.c.l.b16 %v373
    %v1612 = vunpack.c.l.b16 %v374
    %v1613 = vunpack.c.l.b16 %v375
    %v1614 = vunpack.c.l.b16 %v376
    %v1615 = vunpack.c.l.b16 %v377
    %v1616 = vunpack.c.l.b16 %v378
    %v1617 = vunpack.c.l.b16 %v379
    %v1618 = vunpack.c.l.b16 %v380
    %v1619 = vunpack.c.l.b16 %v381
    %v1620 = vunpack.c.l.b16 %v382
    %v1621 = vunpack.c.l.b16 %v383
    %v1622 = vunpack.c.l.b16 %v384
    %v1623 = vunpack.c.l.b16 %v385
    %v1624 = vunpack.c.l.b16 %v386
    %v1625 = vunpack.c.l.b16 %v387
    %v1626 = vunpack.c.l.b16 %v388
    %v1627 = vunpack.c.l.b16 %v389
    %v1628 = vunpack.c.l.b16 %v390
    %v1629 = vunpack.c.l.b16 %v391
    %v1630 = vunpack.c.l.b16 %v392
    %v1631 = vunpack.c.l.b16 %v393
    %v1632 = vunpack.c.l.b16 %v394
    %v1633 = vunpack.c.l.b16 %v395
    %v1634 = vunpack.c.l.b16 %v396
    %v1635 = vunpack.c.l.b16 %v397
    %v1636 = vunpack.c.l.b16 %v398
    %v1637 = vunpack.c.l.b16 %v399
    %v1638 = vunpack.c.l.b16 %v400
    %v1639 = vunpack.c.l.b16 %v401
    %v1640 = vunpack.c.l.b16 %v402
    %v1641 = vunpack.c.l.b16 %v403
    %v1642 = vunpack.c.l.b16 %v404
    %v1643 = vunpack.c.l.b16 %v405
    %v1644 = vunpack.c.l.b16 %v406
    %v1645 = vunpack.c.l.b16 %v407
    %v1646 = vunpack.c.l.b16 %v408
    %v1647 = vunpack.c.l.b16 %v409
    %v1648 = vunpack.c.l.b16 %v410
    %v1649 = vunpack.c.l.b16 %v411
    %v1650 = vunpack.c.l.b16 %v412
    %v1651 = vunpack.c.l.b16 %v413
    %v1652 = vunpack.c.l.b16 %v414
    %v1653 = vunpack.c.l.b16 %v415
    %v1654 = vunpack.c.l.b16 %v416
    %v1655 = vunpack.c.l.b16 %v417
    %v1656 = vunpack.c.l.b16 %v418
    %v1657 = vunpack.c.l.b16 %v419
    %v1658 = vunpack.c.l.b16 %v420
    %v1659 = vunpack.c.l.b16 %v421
    %v1660 = vunpack.c.l.b16 %v422
    %v1661 = vunpack.c.l.b16 %v423
    %v1662 = vunpack.c.l.b16 %v424
    %v1663 = vunpack.c.l.b16 %v425
    %v1664 = vunpack.c.l.b16 %v426
    %v1665 = vunpack.c.l.b16 %v427
    %v1666 = vunpack.c.l.b16 %v428
    %v1667 = vunpack.c.l.b16 %v429
    %v1668 = vunpack.c.l.b16 %v430
    %v1669 = vunpack.c.l.b16 %v431
    %v1670 = vunpack.c.l.b16 %v432
    %v1671 = vunpack.c.l.b16 %v433
    %v1672 = vunpack.c.l.b16 %v434
    %v1673 = vunpack.c.l.b16 %v435
    %v1674 = vunpack.c.l.b16 %v436
    %v1675 = vunpack.c.l.b16 %v437
    %v1676 = vunpack.c.l.b16 %v438
    %v1677 = vunpack.c.l.b16 %v439
    %v1678 = vunpack.c.l.b16 %v440
    %v1679 = vunpack.c.l.b16 %v441
    %v1680 = vunpack.c.l.b16 %v442
    %v1681 = vunpack.c.l.b16 %v443
    %v1682 = vunpack.c.l.b16 %v444
    %v1683 = vunpack.c.l.b16 %v445
    %v1684 = vunpack.c.l.b16 %v446
    %v1685 = vunpack.c.l.b16 %v447
    %v1686 = vunpack.c.l.b16 %v448
    %v1687 = vunpack.c.l.b16 %v449
    %v1688 = vunpack.c.l.b16 %v450
    %v1689 = vunpack.c.l.b16 %v451
    %v1690 = vunpack.c.l.b16 %v452
    %v1691 = vunpack.c.l.b16 %v453
    %v1692 = vunpack.c.l.b16 %v454
    %v1693 = vunpack.c.l.b16 %v455
    %v1694 = vunpack.c.l.b16 %v456
    %v1695 = vunpack.c.l.b16 %v457
    %v1696 = vunpack.c.l.b16 %v458
    %v1697 = vunpack.c.l.b16 %v459
    %v1698 = vunpack.c.l.b16 %v460
    %v1699 = vunpack.c.l.b16 %v461
    %v1700 = vunpack.c.l.b16 %v462
    %v1701 = vunpack.c.l.b16 %v463
    %v1702 = vunpack.c.l.b16 %v464
    %v1703 = vunpack.c.l.b16 %v465
    %v1704 = vunpack.c.l.b16 %v466
    %v1705 = vunpack.c.l.b16 %v467
    %v1706 = vunpack.c.l.b16 %v468
    %v1707 = vunpack.c.l.b16 %v469
    %v1708 = vunpack.c.l.b16 %v470
    %v1709 = vunpack.c.l.b16 %v471
    %v1710 = vunpack.c.l.b16 %v472
    %v1711 = vunpack.c.l.b16 %v473
    %v1712 = vunpack.c.l.b16 %v474
    %v1713 = vunpack.c.l.b16 %v475
    %v1714 = vunpack.c.l.b16 %v476
    %v1715 = vunpack.c.l.b16 %v477
    %v1716 = vunpack.c.l.b16 %v478
    %v1717 = vunpack.c.l.b16 %v479
    %v1718 = vunpack.c.l.b16 %v480
    %v1719 = vunpack.c.l.b16 %v481
    %v1720 = vunpack.c.l.b16 %v482
    %v1721 = vunpack.c.l.b16 %v483
    %v1722 = vunpack.c.l.b16 %v484
    %v1723 = vunpack.c.l.b16 %v485
    %v1724 = vunpack.c.l.b16 %v486
    %v1725 = vunpack.c.l.b16 %v487
    %v1726 = vunpack.c.l.b16 %v488
    %v1727 = vunpack.c.l.b16 %v489
    %v1728 = vunpack.c.l.b16 %v490
    %v1729 = vunpack.c.l.b16 %v491
    %v1730 = vunpack.c.l.b16 %v492
    %v1731 = vunpack.c.l.b16 %v493
    %v1732 = vunpack.c.l.b16 %v494
    %v1733 = vunpack.c.l.b16 %v495
    %v1734 = vunpack.c.l.b16 %v496
    %v1735 = vunpack.c.l.b16 %v497
    %v1736 = vunpack.c.l.b16 %v498
    %v1737 = vunpack.c.l.b16 %v499
    %v1738 = vunpack.c.l.b16 %v500
    %v1739 = vunpack.c.l.b16 %v501
    %v1740 = vunpack.c.l.b16 %v502
    %v1741 = vunpack.c.l.b16 %v503
    %v1742 = vunpack.c.l.b16 %v504
    %v1743 = vunpack.c.l.b16 %v505
    %v1744 = vunpack.c.l.b16 %v506
    %v1745 = vunpack.c.l.b16 %v507
    %v1746 = vunpack.c.l.b16 %v508
    %v1747 = vunpack.c.l.b16 %v509
    %v1748 = vunpack.c.l.b16 %v510
    %v1749 = vunpack.c.l.b16 %v511
    %v1750 = vunpack.c.l.b16 %v512
    %v1751 = vunpack.c.l.b16 %v513
    %v1752 = vunpack.c.l.b16 %v514
    %v1753 = vunpack.c.l.b16 %v515
    %v1754 = vunpack.c.l.b16 %v516
    %v1755 = vunpack.c.l.b16 %v517
    %v1756 = vunpack.c.l.b16 %v518
    %v1757 = vunpack.c.l.b16 %v519
    %v1758 = vunpack.c.l.b16 %v520
    %v1759 = vunpack.c.l.b16 %v521
    %v1760 = vunpack.c.l.b16 %v522
    %v1761 = vunpack.c.l.b16 %v523
    %v1762 = vunpack.c.l.b16 %v524
    %v1763 = vunpack.c.l.b16 %v525
    %v1764 = vunpack.c.l.b16 %v526
    %v1765 = vunpack.c.l.b16 %v527
    %v1766 = vunpack.c.l.b16 %v528
    %v1767 = vunpack.c.l.b16 %v529
    %v1768 = vunpack.c.l.b16 %v530
    %v1769 = vunpack.c.l.b16 %v531
    %v1770 = vunpack.c.l.b16 %v532
    %v1771 = vunpack.c.l.b16 %v533
    %v1772 = vunpack.c.l.b16 %v534
    %v1773 = vunpack.c.l.b16 %v535
    %v1774 = vunpack.c.l.b16 %v536
    %v1775 = vunpack.c.l.b16 %v537
    %v1776 = vunpack.c.l.b16 %v538
    %v1777 = vunpack.c.l.b16 %v539
    %v1778 = vunpack.c.l.b16 %v540
    %v1779 = vunpack.c.l.b16 %v541
    %v1780 = vunpack.c.l.b16 %v542
    %v1781 = vunpack.c.l.b16 %v543
    %v1782 = vunpack.c.l.b16 %v544
    %v1783 = vunpack.c.l.b16 %v545
    %v1784 = vunpack.c.l.b16 %v546
    %v1785 = vunpack.c.l.b16 %v547
    %v1786 = vunpack.c.l.b16 %v548
    %v1787 = vunpack.c.l.b16 %v549
    %v1788 = vunpack.c.l.b16 %v550
    %v1789 = vunpack.c.l.b16 %v551
    %v1790 = vunpack.c.l.b16 %v552
    %v1791 = vunpack.c.l.b16 %v553
    %v1792 = vunpack.c.l.b16 %v554
    %v1793 = vunpack.c.l.b16 %v555
    %v1794 = vunpack.c.l.b16 %v556
    %v1795 = vunpack.c.l.b16 %v557
    %v1796 = vunpack.c.l.b16 %v558
    %v1797 = vunpack.c.l.b16 %v559
    %v1798 = vunpack.c.l.b16 %v560
    %v1799 = vunpack.c.l.b16 %v561
    %v1800 = vunpack.c.l.b16 %v562
    %v1801 = vunpack.c.l.b16 %v563
    %v1802 = vunpack.c.l.b16 %v564
    %v1803 = vunpack.c.l.b16 %v565
    %v1804 = vunpack.c.l.b16 %v566
    %v1805 = vunpack.c.l.b16 %v567
    %v1806 = vunpack.c.l.b16 %v568
    %v1807 = vunpack.c.l.b16 %v569
    %v1808 = vunpack.c.l.b16 %v570
    %v1809 = vunpack.c.l.b16 %v571
    %v1810 = vunpack.c.l.b16 %v572
    %v1811 = vunpack.c.l.b16 %v573
    %v1812 = vunpack.c.l.b16 %v574
    %v1813 = vunpack.c.l.b16 %v575
    %v1814 = vunpack.c.l.b16 %v576
    %v1815 = vunpack.c.l.b16 %v577
    %v1816 = vunpack.c.l.b16 %v578
    %v1817 = vunpack.c.l.b16 %v579
    %v1818 = vunpack.c.l.b16 %v580
    %v1819 = vunpack.c.l.b16 %v581
    %v1820 = vunpack.c.l.b16 %v582
    %v1821 = vunpack.c.l.b16 %v583
    %v1822 = vunpack.c.l.b16 %v584
    %v1823 = vunpack.c.l.b16 %v585
    %v1824 = vunpack.c.l.b16 %v586
    %v1825 = vunpack.c.l.b16 %v587
    %v1826 = vunpack.c.l.b16 %v588
    %v1827 = vunpack.c.l.b16 %v589
    %v1828 = vunpack.c.l.b16 %v590
    %v1829 = vunpack.c.l.b16 %v591
    %v1830 = vunpack.c.l.b16 %v592
    %v1831 = vunpack.c.l.b16 %v593
    %v1832 = vunpack.c.l.b16 %v594
    %v1833 = vunpack.c.l.b16 %v595
    %v1834 = vunpack.c.l.b16 %v596
    %v1835 = vunpack.c.l.b16 %v597
    %v1836 = vunpack.c.l.b16 %v598
    %v1837 = vunpack.c.l.b16 %v599
    %v1838 = vunpack.c.l.b16 %v600
    %v1839 = vunpack.c.l.b16 %v601
    %v1840 = vunpack.c.l.b16 %v602
    %v1841 = vunpack.c.l.b16 %v603
    %v1842 = vunpack.c.l.b16 %v604
    %v1843 = vunpack.c.l.b16 %v605
    %v1844 = vunpack.c.l.b16 %v606
    %v1845 = vunpack.c.l.b16 %v607
    %v1846 = vpack.c.b16 %v1271, %v1270
    %v1847 = vpack.c.b16 %v1273, %v1272
    %v1848 = vpack.c.b16 %v1275, %v1274
    %v1849 = vpack.c.b16 %v1277, %v1276
    %v1850 = vpack.c.b16 %v1279, %v1278
    %v1851 = vpack.c.b16 %v1281, %v1280
    %v1852 = vpack.c.b16 %v1283, %v1282
    %v1853 = vpack.c.b16 %v1285, %v1284
    %v1854 = vpack.c.b16 %v1287, %v1286
    %v1855 = vpack.c.b16 %v1289, %v1288
    %v1856 = vpack.c.b16 %v1291, %v1290
    %v1857 = vpack.c.b16 %v1293, %v1292
    %v1858 = vpack.c.b16 %v1295, %v1294
    %v1859 = vpack.c.b16 %v1297, %v1296
    %v1860 = vpack.c.b16 %v1299, %v1298
    %v1861 = vpack.c.b16 %v1301, %v1300
    %v1862 = vpack.c.b16 %v1303, %v1302
    %v1863 = vpack.c.b16 %v1305, %v1304
    %v1864 = vpack.c.b16 %v1307, %v1306
    %v1865 = vpack.c.b16 %v1309, %v1308
    %v1866 = vpack.c.b16 %v1311, %v1310
    %v1867 = vpack.c.b16 %v1313, %v1312
    %v1868 = vpack.c.b16 %v1315, %v1314
    %v1869 = vpack.c.b16 %v1317, %v1316
    %v1870 = vpack.c.b16 %v1319, %v1318
    %v1871 = vpack.c.b16 %v1321, %v1320
    %v1872 = vpack.c.b16 %v1323, %v1322
    %v1873 = vpack.c.b16 %v1325, %v1324
    %v1874 = vpack.c.b16 %v1327, %v1326
    %v1875 = vpack.c.b16 %v1329, %v1328
    %v1876 = vpack.c.b16 %v1331, %v1330
    %v1877 = vpack.c.b16 %v1333, %v1332
    %v1878 = vpack.c.b16 %v1335, %v1334
    %v1879 = vpack.c.b16 %v1337, %v1336
    %v1880 = vpack.c.b16 %v1339, %v1338
    %v1881 = vpack.c.b16 %v1341, %v1340
    %v1882 = vpack.c.b16 %v1343, %v1342
    %v1883 = vpack.c.b16 %v1345, %v1344
    %v1884 = vpack.c.b16 %v1347, %v1346
    %v1885 = vpack.c.b16 %v1349, %v1348
    %v1886 = vpack.c.b16 %v1351, %v1350
    %v1887 = vpack.c.b16 %v1353, %v1352
    %v1888 = vpack.c.b16 %v1355, %v1354
    %v1889 = vpack.c.b16 %v1357, %v1356
    %v1890 = vpack.c.b16 %v1359, %v1358
    %v1891 = vpack.c.b16 %v1361, %v1360
    %v1892 = vpack.c.b16 %v1363, %v1362
    %v1893 = vpack.c.b16 %v1365, %v1364
    %v1894 = vpack.c.b16 %v1367, %v1366
    %v1895 = vpack.c.b16 %v1369, %v1368
    %v1896 = vpack.c.b16 %v1371, %v1370
    %v1897 = vpack.c.b16 %v1373, %v1372
    %v1898 = vpack.c.b16 %v1375, %v1374
    %v1899 = vpack.c.b16 %v1377, %v1376
    %v1900 = vpack.c.b16 %v1379, %v1378
    %v1901 = vpack.c.b16 %v1381, %v1380
    %v1902 = vpack.c.b16 %v1383, %v1382
    %v1903 = vpack.c.b16 %v1385, %v1384
    %v1904 = vpack.c.b16 %v1387, %v1386
    %v1905 = vpack.c.b16 %v1389, %v1388
    %v1906 = vpack.c.b16 %v1391, %v1390
    %v1907 = vpack.c.b16 %v1393, %v1392
    %v1908 = vpack.c.b16 %v1395, %v1394
    %v1909 = vpack.c.b16 %v1397, %v1396
    %v1910 = vpack.c.b16 %v1399, %v1398
    %v1911 = vpack.c.b16 %v1401, %v1400
    %v1912 = vpack.c.b16 %v1403, %v1402
    %v1913 = vpack.c.b16 %v1405, %v1404
    %v1914 = vpack.c.b16 %v1407, %v1406
    %v1915 = vpack.c.b16 %v1409, %v1408
    %v1916 = vpack.c.b16 %v1411, %v1410
    %v1917 = vpack.c.b16 %v1413, %v1412
    %v1918 = vpack.c.b16 %v1415, %v1414
    %v1919 = vpack.c.b16 %v1417, %v1416
    %v1920 = vpack.c.b16 %v1419, %v1418
    %v1921 = vpack.c.b16 %v1421, %v1420
    %v1922 = vpack.c.b16 %v1423, %v1422
    %v1923 = vpack.c.b16 %v1425, %v1424
    %v1924 = vpack.c.b16 %v1427, %v1426
    %v1925 = vpack.c.b16 %v1429, %v1428
    %v1926 = vpack.c.b16 %v1431, %v1430
    %v1927 = vpack.c.b16 %v1433, %v1432
    %v1928 = vpack.c.b16 %v1435, %v1434
    %v1929 = vpack.c.b16 %v1437, %v1436
    %v1930 = vpack.c.b16 %v1439, %v1438
    %v1931 = vpack.c.b16 %v1441, %v1440
    %v1932 = vpack.c.b16 %v1443, %v1442
    %v1933 = vpack.c.b16 %v1445, %v1444
    %v1934 = vpack.c.b16 %v1447, %v1446
    %v1935 = vpack.c.b16 %v1449, %v1448
    %v1936 = vpack.c.b16 %v1451, %v1450
    %v1937 = vpack.c.b16 %v1453, %v1452
    %v1938 = vpack.c.b16 %v1455, %v1454
    %v1939 = vpack.c.b16 %v1457, %v1456
    %v1940 = vpack.c.b16 %v1459, %v1458
    %v1941 = vpack.c.b16 %v1461, %v1460
    %v1942 = vpack.c.b16 %v1463, %v1462
    %v1943 = vpack.c.b16 %v1465, %v1464
    %v1944 = vpack.c.b16 %v1467, %v1466
    %v1945 = vpack.c.b16 %v1469, %v1468
    %v1946 = vpack.c.b16 %v1471, %v1470
    %v1947 = vpack.c.b16 %v1473, %v1472
    %v1948 = vpack.c.b16 %v1475, %v1474
    %v1949 = vpack.c.b16 %v1477, %v1476
    %v1950 = vpack.c.b16 %v1479, %v1478
    %v1951 = vpack.c.b16 %v1481, %v1480
    %v1952 = vpack.c.b16 %v1483, %v1482
    %v1953 = vpack.c.b16 %v1485, %v1484
    %v1954 = vpack.c.b16 %v1487, %v1486
    %v1955 = vpack.c.b16 %v1489, %v1488
    %v1956 = vpack.c.b16 %v1491, %v1490
    %v1957 = vpack.c.b16 %v1493, %v1492
    %v1958 = vpack.c.b16 %v1495, %v1494
    %v1959 = vpack.c.b16 %v1497, %v1496
    %v1960 = vpack.c.b16 %v1499, %v1498
    %v1961 = vpack.c.b16 %v1501, %v1500
    %v1962 = vpack.c.b16 %v1503, %v1502
    %v1963 = vpack.c.b16 %v1505, %v1504
    %v1964 = vpack.c.b16 %v1507, %v1506
    %v1965 = vpack.c.b16 %v1509, %v1508
    %v1966 = vpack.c.b16 %v1511, %v1510
    %v1967 = vpack.c.b16 %v1513, %v1512
    %v1968 = vpack.c.b16 %v1515, %v1514
    %v1969 = vpack.c.b16 %v1517, %v1516
    %v1970 = vpack.c.b16 %v1519, %v1518
    %v1971 = vpack.c.b16 %v1521, %v1520
    %v1972 = vpack.c.b16 %v1523, %v1522
    %v1973 = vpack.c.b16 %v1525, %v1524
    %v1974 = vpack.c.b16 %v1527, %v1526
    %v1975 = vpack.c.b16 %v1529, %v1528
    %v1976 = vpack.c.b16 %v1531, %v1530
    %v1977 = vpack.c.b16 %v1533, %v1532
    %v1978 = vpack.c.b16 %v1535, %v1534
    %v1979 = vpack.c.b16 %v1537, %v1536
    %v1980 = vpack.c.b16 %v1539, %v1538
    %v1981 = vpack.c.b16 %v1541, %v1540
    %v1982 = vpack.c.b16 %v1543, %v1542
    %v1983 = vpack.c.b16 %v1545, %v1544
    %v1984 = vpack.c.b16 %v1547, %v1546
    %v1985 = vpack.c.b16 %v1549, %v1548
    %v1986 = vpack.c.b16 %v1551, %v1550
    %v1987 = vpack.c.b16 %v1553, %v1552
    %v1988 = vpack.c.b16 %v1555, %v1554
    %v1989 = vpack.c.b16 %v1557, %v1556
    %v1990 = vpack.c.b16 %v1559, %v1558
    %v1991 = vpack.c.b16 %v1561, %v1560
    %v1992 = vpack.c.b16 %v1563, %v1562
    %v1993 = vpack.c.b16 %v1565, %v1564
    %v1994 = vpack.c.b16 %v1567, %v1566
    %v1995 = vpack.c.b16 %v1569, %v1568
    %v1996 = vpack.c.b16 %v1571, %v1570
    %v1997 = vpack.c.b16 %v1573, %v1572
    %v1998 = vpack.c.b16 %v1575, %v1574
    %v1999 = vpack.c.b16 %v1577, %v1576
    %v2000 = vpack.c.b16 %v1579, %v1578
    %v2001 = vpack.c.b16 %v1581, %v1580
    %v2002 = vpack.c.b16 %v1583, %v1582
    %v2003 = vpack.c.b16 %v1585, %v1584
    %v2004 = vpack.c.b16 %v1587, %v1586
    %v2005 = vpack.c.b16 %v1589, %v1588
    %v2006 = vpack.c.b16 %v1591, %v1590
    %v2007 = vpack.c.b16 %v1593, %v1592
    %v2008 = vpack.c.b16 %v1595, %v1594
    %v2009 = vpack.c.b16 %v1597, %v1596
    %v2010 = vpack.c.b16 %v1599, %v1598
    %v2011 = vpack.c.b16 %v1601, %v1600
    %v2012 = vpack.c.b16 %v1603, %v1602
    %v2013 = vpack.c.b16 %v1605, %v1604
    %v2014 = vpack.c.b16 %v1607, %v1606
    %v2015 = vpack.c.b16 %v1609, %v1608
    %v2016 = vpack.c.b16 %v1611, %v1610
    %v2017 = vpack.c.b16 %v1613, %v1612
    %v2018 = vpack.c.b16 %v1615, %v1614
    %v2019 = vpack.c.b16 %v1617, %v1616
    %v2020 = vpack.c.b16 %v1619, %v1618
    %v2021 = vpack.c.b16 %v1621, %v1620
    %v2022 = vpack.c.b16 %v1623, %v1622
    %v2023 = vpack.c.b16 %v1625, %v1624
    %v2024 = vpack.c.b16 %v1627, %v1626
    %v2025 = vpack.c.b16 %v1629, %v1628
    %v2026 = vpack.c.b16 %v1631, %v1630
    %v2027 = vpack.c.b16 %v1633, %v1632
    %v2028 = vpack.c.b16 %v1635, %v1634
    %v2029 = vpack.c.b16 %v1637, %v1636
    %v2030 = vpack.c.b16 %v1639, %v1638
    %v2031 = vpack.c.b16 %v1641, %v1640
    %v2032 = vpack.c.b16 %v1643, %v1642
    %v2033 = vpack.c.b16 %v1645, %v1644
    %v2034 = vpack.c.b16 %v1647, %v1646
    %v2035 = vpack.c.b16 %v1649, %v1648
    %v2036 = vpack.c.b16 %v1651, %v1650
    %v2037 = vpack.c.b16 %v1653, %v1652
    %v2038 = vpack.c.b16 %v1655, %v1654
    %v2039 = vpack.c.b16 %v1657, %v1656
    %v2040 = vpack.c.b16 %v1659, %v1658
    %v2041 = vpack.c.b16 %v1661, %v1660
    %v2042 = vpack.c.b16 %v1663, %v1662
    %v2043 = vpack.c.b16 %v1665, %v1664
    %v2044 = vpack.c.b16 %v1667, %v1666
    %v2045 = vpack.c.b16 %v1669, %v1668
    %v2046 = vpack.c.b16 %v1671, %v1670
    %v2047 = vpack.c.b16 %v1673, %v1672
    %v2048 = vpack.c.b16 %v1675, %v1674
    %v2049 = vpack.c.b16 %v1677, %v1676
    %v2050 = vpack.c.b16 %v1679, %v1678
    %v2051 = vpack.c.b16 %v1681, %v1680
    %v2052 = vpack.c.b16 %v1683, %v1682
    %v2053 = vpack.c.b16 %v1685, %v1684
    %v2054 = vpack.c.b16 %v1687, %v1686
    %v2055 = vpack.c.b16 %v1689, %v1688
    %v2056 = vpack.c.b16 %v1691, %v1690
    %v2057 = vpack.c.b16 %v1693, %v1692
    %v2058 = vpack.c.b16 %v1695, %v1694
    %v2059 = vpack.c.b16 %v1697, %v1696
    %v2060 = vpack.c.b16 %v1699, %v1698
    %v2061 = vpack.c.b16 %v1701, %v1700
    %v2062 = vpack.c.b16 %v1703, %v1702
    %v2063 = vpack.c.b16 %v1705, %v1704
    %v2064 = vpack.c.b16 %v1707, %v1706
    %v2065 = vpack.c.b16 %v1709, %v1708
    %v2066 = vpack.c.b16 %v1711, %v1710
    %v2067 = vpack.c.b16 %v1713, %v1712
    %v2068 = vpack.c.b16 %v1715, %v1714
    %v2069 = vpack.c.b16 %v1717, %v1716
    %v2070 = vpack.c.b16 %v1719, %v1718
    %v2071 = vpack.c.b16 %v1721, %v1720
    %v2072 = vpack.c.b16 %v1723, %v1722
    %v2073 = vpack.c.b16 %v1725, %v1724
    %v2074 = vpack.c.b16 %v1727, %v1726
    %v2075 = vpack.c.b16 %v1729, %v1728
    %v2076 = vpack.c.b16 %v1731, %v1730
    %v2077 = vpack.c.b16 %v1733, %v1732
    %v2078 = vpack.c.b16 %v1735, %v1734
    %v2079 = vpack.c.b16 %v1737, %v1736
    %v2080 = vpack.c.b16 %v1739, %v1738
    %v2081 = vpack.c.b16 %v1741, %v1740
    %v2082 = vpack.c.b16 %v1743, %v1742
    %v2083 = vpack.c.b16 %v1745, %v1744
    %v2084 = vpack.c.b16 %v1747, %v1746
    %v2085 = vpack.c.b16 %v1749, %v1748
    %v2086 = vpack.c.b16 %v1751, %v1750
    %v2087 = vpack.c.b16 %v1753, %v1752
    %v2088 = vpack.c.b16 %v1755, %v1754
    %v2089 = vpack.c.b16 %v1757, %v1756
    %v2090 = vpack.c.b16 %v1759, %v1758
    %v2091 = vpack.c.b16 %v1761, %v1760
    %v2092 = vpack.c.b16 %v1763, %v1762
    %v2093 = vpack.c.b16 %v1765, %v1764
    %v2094 = vpack.c.b16 %v1767, %v1766
    %v2095 = vpack.c.b16 %v1769, %v1768
    %v2096 = vpack.c.b16 %v1771, %v1770
    %v2097 = vpack.c.b16 %v1773, %v1772
    %v2098 = vpack.c.b16 %v1775, %v1774
    %v2099 = vpack.c.b16 %v1777, %v1776
    %v2100 = vpack.c.b16 %v1779, %v1778
    %v2101 = vpack.c.b16 %v1781, %v1780
    %v2102 = vpack.c.b16 %v1783, %v1782
    %v2103 = vpack.c.b16 %v1785, %v1784
    %v2104 = vpack.c.b16 %v1787, %v1786
    %v2105 = vpack.c.b16 %v1789, %v1788
    %v2106 = vpack.c.b16 %v1791, %v1790
    %v2107 = vpack.c.b16 %v1793, %v1792
    %v2108 = vpack.c.b16 %v1795, %v1794
    %v2109 = vpack.c.b16 %v1797, %v1796
    %v2110 = vpack.c.b16 %v1799, %v1798
    %v2111 = vpack.c.b16 %v1801, %v1800
    %v2112 = vpack.c.b16 %v1803, %v1802
    %v2113 = vpack.c.b16 %v1805, %v1804
    %v2114 = vpack.c.b16 %v1807, %v1806
    %v2115 = vpack.c.b16 %v1809, %v1808
    %v2116 = vpack.c.b16 %v1811, %v1810
    %v2117 = vpack.c.b16 %v1813, %v1812
    %v2118 = vpack.c.b16 %v1815, %v1814
    %v2119 = vpack.c.b16 %v1817, %v1816
    %v2120 = vpack.c.b16 %v1819, %v1818
    %v2121 = vpack.c.b16 %v1821, %v1820
    %v2122 = vpack.c.b16 %v1823, %v1822
    %v2123 = vpack.c.b16 %v1825, %v1824
    %v2124 = vpack.c.b16 %v1827, %v1826
    %v2125 = vpack.c.b16 %v1829, %v1828
    %v2126 = vpack.c.b16 %v1831, %v1830
    %v2127 = vpack.c.b16 %v1833, %v1832
    %v2128 = vpack.c.b16 %v1835, %v1834
    %v2129 = vpack.c.b16 %v1837, %v1836
    %v2130 = vpack.c.b16 %v1839, %v1838
    %v2131 = vpack.c.b16 %v1841, %v1840
    %v2132 = vpack.c.b16 %v1843, %v1842
    %v2133 = vpack.c.b16 %v1845, %v1844
    %2422 = vmatpush.bf16.msra.mxu0 %v1853
    %2423 = vmatpush.bf16.msra.mxu0 %v1852
    %2424 = vmatpush.bf16.msra.mxu0 %v1851
    %2425 = vmatpush.bf16.msra.mxu0 %v1850
    %2426 = vmatpush.bf16.msra.mxu0 %v1849
    %2427 = vmatpush.bf16.msra.mxu0 %v1848
    %2428 = vmatpush.bf16.msra.mxu0 %v1847
    %2429 = vmatpush.bf16.msra.mxu0 %v1846
    %2430 = vmatmul.bf16.gmra.mxu0 %v614
    %v2431 = vpop.f32.mrf.mxu0
    %v2432 = vadd.f32 %v610, %v2431
    %v2433 = vpop.f32.mrf.mxu0
    %2434 = vdwg.mxu0
    %2435 = vmatpush.bf16.msra.mxu0 %v1861
    %2436 = vmatpush.bf16.msra.mxu0 %v1860
    %2437 = vmatpush.bf16.msra.mxu0 %v1859
    %2438 = vmatpush.bf16.msra.mxu0 %v1858
    %2439 = vmatpush.bf16.msra.mxu0 %v1857
    %2440 = vmatpush.bf16.msra.mxu0 %v1856
    %2441 = vmatpush.bf16.msra.mxu0 %v1855
    %2442 = vmatpush.bf16.msra.mxu0 %v1854
    %2443 = vmatmul.bf16.gmra.mxu0 %v615
    %v2444 = vpop.f32.mrf.mxu0
    %v2445 = vadd.f32 %v2432, %v2444
    %v2446 = vpop.f32.mrf.mxu0
    %2447 = vdwg.mxu0
    %2448 = vmatpush.bf16.msra.mxu0 %v1869
    %2449 = vmatpush.bf16.msra.mxu0 %v1868
    %2450 = vmatpush.bf16.msra.mxu0 %v1867
    %2451 = vmatpush.bf16.msra.mxu0 %v1866
    %2452 = vmatpush.bf16.msra.mxu0 %v1865
    %2453 = vmatpush.bf16.msra.mxu0 %v1864
    %2454 = vmatpush.bf16.msra.mxu0 %v1863
    %2455 = vmatpush.bf16.msra.mxu0 %v1862
    %2456 = vmatmul.bf16.gmra.mxu0 %v616
    %v2457 = vpop.f32.mrf.mxu0
    %v2458 = vadd.f32 %v2445, %v2457
    %v2459 = vpop.f32.mrf.mxu0
    %2460 = vdwg.mxu0
    %2461 = vmatpush.bf16.msra.mxu0 %v1877
    %2462 = vmatpush.bf16.msra.mxu0 %v1876
    %2463 = vmatpush.bf16.msra.mxu0 %v1875
    %2464 = vmatpush.bf16.msra.mxu0 %v1874
    %2465 = vmatpush.bf16.msra.mxu0 %v1873
    %2466 = vmatpush.bf16.msra.mxu0 %v1872
    %2467 = vmatpush.bf16.msra.mxu0 %v1871
    %2468 = vmatpush.bf16.msra.mxu0 %v1870
    %2469 = vmatmul.bf16.gmra.mxu0 %v617
    %v2470 = vpop.f32.mrf.mxu0
    %v2471 = vadd.f32 %v2458, %v2470
    %v2472 = vpop.f32.mrf.mxu0
    %2473 = vdwg.mxu0
    %2474 = vmatpush.bf16.msra.mxu0 %v1885
    %2475 = vmatpush.bf16.msra.mxu0 %v1884
    %2476 = vmatpush.bf16.msra.mxu0 %v1883
    %2477 = vmatpush.bf16.msra.mxu0 %v1882
    %2478 = vmatpush.bf16.msra.mxu0 %v1881
    %2479 = vmatpush.bf16.msra.mxu0 %v1880
    %2480 = vmatpush.bf16.msra.mxu0 %v1879
    %2481 = vmatpush.bf16.msra.mxu0 %v1878
    %2482 = vmatmul.bf16.gmra.mxu0 %v618
    %v2483 = vpop.f32.mrf.mxu0
    %v2484 = vadd.f32 %v2471, %v2483
    %v2485 = vpop.f32.mrf.mxu0
    %2486 = vdwg.mxu0
    %2487 = vmatpush.bf16.msra.mxu0 %v1893
    %2488 = vmatpush.bf16.msra.mxu0 %v1892
    %2489 = vmatpush.bf16.msra.mxu0 %v1891
    %2490 = vmatpush.bf16.msra.mxu0 %v1890
    %2491 = vmatpush.bf16.msra.mxu0 %v1889
    %2492 = vmatpush.bf16.msra.mxu0 %v1888
    %2493 = vmatpush.bf16.msra.mxu0 %v1887
    %2494 = vmatpush.bf16.msra.mxu0 %v1886
    %2495 = vmatmul.bf16.gmra.mxu0 %v619
    %v2496 = vpop.f32.mrf.mxu0
    %v2497 = vadd.f32 %v2484, %v2496
    %v2498 = vpop.f32.mrf.mxu0
    %2499 = vdwg.mxu0
    %2500 = vmatpush.bf16.msra.mxu0 %v1901
    %2501 = vmatpush.bf16.msra.mxu0 %v1900
    %2502 = vmatpush.bf16.msra.mxu0 %v1899
    %2503 = vmatpush.bf16.msra.mxu0 %v1898
    %2504 = vmatpush.bf16.msra.mxu0 %v1897
    %2505 = vmatpush.bf16.msra.mxu0 %v1896
    %2506 = vmatpush.bf16.msra.mxu0 %v1895
    %2507 = vmatpush.bf16.msra.mxu0 %v1894
    %2508 = vmatmul.bf16.gmra.mxu0 %v620
    %v2509 = vpop.f32.mrf.mxu0
    %v2510 = vadd.f32 %v2497, %v2509
    %v2511 = vpop.f32.mrf.mxu0
    %2512 = vdwg.mxu0
    %2513 = vmatpush.bf16.msra.mxu0 %v1909
    %2514 = vmatpush.bf16.msra.mxu0 %v1908
    %2515 = vmatpush.bf16.msra.mxu0 %v1907
    %2516 = vmatpush.bf16.msra.mxu0 %v1906
    %2517 = vmatpush.bf16.msra.mxu0 %v1905
    %2518 = vmatpush.bf16.msra.mxu0 %v1904
    %2519 = vmatpush.bf16.msra.mxu0 %v1903
    %2520 = vmatpush.bf16.msra.mxu0 %v1902
    %2521 = vmatmul.bf16.gmra.mxu0 %v621
    %v2522 = vpop.f32.mrf.mxu0
    %v2523 = vadd.f32 %v2510, %v2522
    %v2524 = vpop.f32.mrf.mxu0
    %2525 = vdwg.mxu0
    %2526 = vmatpush.bf16.msra.mxu0 %v1917
    %2527 = vmatpush.bf16.msra.mxu0 %v1916
    %2528 = vmatpush.bf16.msra.mxu0 %v1915
    %2529 = vmatpush.bf16.msra.mxu0 %v1914
    %2530 = vmatpush.bf16.msra.mxu0 %v1913
    %2531 = vmatpush.bf16.msra.mxu0 %v1912
    %2532 = vmatpush.bf16.msra.mxu0 %v1911
    %2533 = vmatpush.bf16.msra.mxu0 %v1910
    %2534 = vmatmul.bf16.gmra.mxu0 %v624
    %v2535 = vpop.f32.mrf.mxu0
    %v2536 = vadd.f32 %v2523, %v2535
    %v2537 = vpop.f32.mrf.mxu0
    %2538 = vdwg.mxu0
    %2539 = vmatpush.bf16.msra.mxu0 %v1925
    %2540 = vmatpush.bf16.msra.mxu0 %v1924
    %2541 = vmatpush.bf16.msra.mxu0 %v1923
    %2542 = vmatpush.bf16.msra.mxu0 %v1922
    %2543 = vmatpush.bf16.msra.mxu0 %v1921
    %2544 = vmatpush.bf16.msra.mxu0 %v1920
    %2545 = vmatpush.bf16.msra.mxu0 %v1919
    %2546 = vmatpush.bf16.msra.mxu0 %v1918
    %2547 = vmatmul.bf16.gmra.mxu0 %v625
    %v2548 = vpop.f32.mrf.mxu0
    %v2549 = vadd.f32 %v2536, %v2548
    %v2550 = vpop.f32.mrf.mxu0
    %2551 = vdwg.mxu0
    %2552 = vmatpush.bf16.msra.mxu0 %v1933
    %2553 = vmatpush.bf16.msra.mxu0 %v1932
    %2554 = vmatpush.bf16.msra.mxu0 %v1931
    %2555 = vmatpush.bf16.msra.mxu0 %v1930
    %2556 = vmatpush.bf16.msra.mxu0 %v1929
    %2557 = vmatpush.bf16.msra.mxu0 %v1928
    %2558 = vmatpush.bf16.msra.mxu0 %v1927
    %2559 = vmatpush.bf16.msra.mxu0 %v1926
    %2560 = vmatmul.bf16.gmra.mxu0 %v626
    %v2561 = vpop.f32.mrf.mxu0
    %v2562 = vadd.f32 %v2549, %v2561
    %v2563 = vpop.f32.mrf.mxu0
    %2564 = vdwg.mxu0
    %2565 = vmatpush.bf16.msra.mxu0 %v1941
    %2566 = vmatpush.bf16.msra.mxu0 %v1940
    %2567 = vmatpush.bf16.msra.mxu0 %v1939
    %2568 = vmatpush.bf16.msra.mxu0 %v1938
    %2569 = vmatpush.bf16.msra.mxu0 %v1937
    %2570 = vmatpush.bf16.msra.mxu0 %v1936
    %2571 = vmatpush.bf16.msra.mxu0 %v1935
    %2572 = vmatpush.bf16.msra.mxu0 %v1934
    %2573 = vmatmul.bf16.gmra.mxu0 %v627
    %v2574 = vpop.f32.mrf.mxu0
    %v2575 = vadd.f32 %v2562, %v2574
    %v2576 = vpop.f32.mrf.mxu0
    %2577 = vdwg.mxu0
    %2578 = vmatpush.bf16.msra.mxu0 %v1949
    %2579 = vmatpush.bf16.msra.mxu0 %v1948
    %2580 = vmatpush.bf16.msra.mxu0 %v1947
    %2581 = vmatpush.bf16.msra.mxu0 %v1946
    %2582 = vmatpush.bf16.msra.mxu0 %v1945
    %2583 = vmatpush.bf16.msra.mxu0 %v1944
    %2584 = vmatpush.bf16.msra.mxu0 %v1943
    %2585 = vmatpush.bf16.msra.mxu0 %v1942
    %2586 = vmatmul.bf16.gmra.mxu0 %v628
    %v2587 = vpop.f32.mrf.mxu0
    %v2588 = vadd.f32 %v2575, %v2587
    %v2589 = vpop.f32.mrf.mxu0
    %2590 = vdwg.mxu0
    %2591 = vmatpush.bf16.msra.mxu0 %v1957
    %2592 = vmatpush.bf16.msra.mxu0 %v1956
    %2593 = vmatpush.bf16.msra.mxu0 %v1955
    %2594 = vmatpush.bf16.msra.mxu0 %v1954
    %2595 = vmatpush.bf16.msra.mxu0 %v1953
    %2596 = vmatpush.bf16.msra.mxu0 %v1952
    %2597 = vmatpush.bf16.msra.mxu0 %v1951
    %2598 = vmatpush.bf16.msra.mxu0 %v1950
    %2599 = vmatmul.bf16.gmra.mxu0 %v629
    %v2600 = vpop.f32.mrf.mxu0
    %v2601 = vadd.f32 %v2588, %v2600
    %v2602 = vpop.f32.mrf.mxu0
    %2603 = vdwg.mxu0
    %2604 = vmatpush.bf16.msra.mxu0 %v1965
    %2605 = vmatpush.bf16.msra.mxu0 %v1964
    %2606 = vmatpush.bf16.msra.mxu0 %v1963
    %2607 = vmatpush.bf16.msra.mxu0 %v1962
    %2608 = vmatpush.bf16.msra.mxu0 %v1961
    %2609 = vmatpush.bf16.msra.mxu0 %v1960
    %2610 = vmatpush.bf16.msra.mxu0 %v1959
    %2611 = vmatpush.bf16.msra.mxu0 %v1958
    %2612 = vmatmul.bf16.gmra.mxu0 %v630
    %v2613 = vpop.f32.mrf.mxu0
    %v2614 = vadd.f32 %v2601, %v2613
    %v2615 = vpop.f32.mrf.mxu0
    %2616 = vdwg.mxu0
    %2617 = vmatpush.bf16.msra.mxu0 %v1973
    %2618 = vmatpush.bf16.msra.mxu0 %v1972
    %2619 = vmatpush.bf16.msra.mxu0 %v1971
    %2620 = vmatpush.bf16.msra.mxu0 %v1970
    %2621 = vmatpush.bf16.msra.mxu0 %v1969
    %2622 = vmatpush.bf16.msra.mxu0 %v1968
    %2623 = vmatpush.bf16.msra.mxu0 %v1967
    %2624 = vmatpush.bf16.msra.mxu0 %v1966
    %2625 = vmatmul.bf16.gmra.mxu0 %v631
    %v2626 = vpop.f32.mrf.mxu0
    %v2627 = vadd.f32 %v2614, %v2626
    %v2628 = vpop.f32.mrf.mxu0
    %2629 = vdwg.mxu0
    %2630 = vmatpush.bf16.msra.mxu0 %v1981
    %2631 = vmatpush.bf16.msra.mxu0 %v1980
    %2632 = vmatpush.bf16.msra.mxu0 %v1979
    %2633 = vmatpush.bf16.msra.mxu0 %v1978
    %2634 = vmatpush.bf16.msra.mxu0 %v1977
    %2635 = vmatpush.bf16.msra.mxu0 %v1976
    %2636 = vmatpush.bf16.msra.mxu0 %v1975
    %2637 = vmatpush.bf16.msra.mxu0 %v1974
    %2638 = vmatmul.bf16.gmra.mxu0 %v634
    %v2639 = vpop.f32.mrf.mxu0
    %v2640 = vadd.f32 %v2627, %v2639
    %v2641 = vpop.f32.mrf.mxu0
    %2642 = vdwg.mxu0
    %2643 = vmatpush.bf16.msra.mxu0 %v1989
    %2644 = vmatpush.bf16.msra.mxu0 %v1988
    %2645 = vmatpush.bf16.msra.mxu0 %v1987
    %2646 = vmatpush.bf16.msra.mxu0 %v1986
    %2647 = vmatpush.bf16.msra.mxu0 %v1985
    %2648 = vmatpush.bf16.msra.mxu0 %v1984
    %2649 = vmatpush.bf16.msra.mxu0 %v1983
    %2650 = vmatpush.bf16.msra.mxu0 %v1982
    %2651 = vmatmul.bf16.gmra.mxu0 %v635
    %v2652 = vpop.f32.mrf.mxu0
    %v2653 = vadd.f32 %v2640, %v2652
    %v2654 = vpop.f32.mrf.mxu0
    %2655 = vdwg.mxu0
    %2656 = vmatpush.bf16.msra.mxu0 %v1997
    %2657 = vmatpush.bf16.msra.mxu0 %v1996
    %2658 = vmatpush.bf16.msra.mxu0 %v1995
    %2659 = vmatpush.bf16.msra.mxu0 %v1994
    %2660 = vmatpush.bf16.msra.mxu0 %v1993
    %2661 = vmatpush.bf16.msra.mxu0 %v1992
    %2662 = vmatpush.bf16.msra.mxu0 %v1991
    %2663 = vmatpush.bf16.msra.mxu0 %v1990
    %2664 = vmatmul.bf16.gmra.mxu0 %v636
    %v2665 = vpop.f32.mrf.mxu0
    %v2666 = vadd.f32 %v2653, %v2665
    %v2667 = vpop.f32.mrf.mxu0
    %2668 = vdwg.mxu0
    %2669 = vmatpush.bf16.msra.mxu0 %v2005
    %2670 = vmatpush.bf16.msra.mxu0 %v2004
    %2671 = vmatpush.bf16.msra.mxu0 %v2003
    %2672 = vmatpush.bf16.msra.mxu0 %v2002
    %2673 = vmatpush.bf16.msra.mxu0 %v2001
    %2674 = vmatpush.bf16.msra.mxu0 %v2000
    %2675 = vmatpush.bf16.msra.mxu0 %v1999
    %2676 = vmatpush.bf16.msra.mxu0 %v1998
    %2677 = vmatmul.bf16.gmra.mxu0 %v637
    %v2678 = vpop.f32.mrf.mxu0
    %v2679 = vadd.f32 %v2666, %v2678
    %v2680 = vpop.f32.mrf.mxu0
    %2681 = vdwg.mxu0
    %2682 = vmatpush.bf16.msra.mxu0 %v2013
    %2683 = vmatpush.bf16.msra.mxu0 %v2012
    %2684 = vmatpush.bf16.msra.mxu0 %v2011
    %2685 = vmatpush.bf16.msra.mxu0 %v2010
    %2686 = vmatpush.bf16.msra.mxu0 %v2009
    %2687 = vmatpush.bf16.msra.mxu0 %v2008
    %2688 = vmatpush.bf16.msra.mxu0 %v2007
    %2689 = vmatpush.bf16.msra.mxu0 %v2006
    %2690 = vmatmul.bf16.gmra.mxu0 %v638
    %v2691 = vpop.f32.mrf.mxu0
    %v2692 = vadd.f32 %v2679, %v2691
    %v2693 = vpop.f32.mrf.mxu0
    %2694 = vdwg.mxu0
    %2695 = vmatpush.bf16.msra.mxu0 %v2021
    %2696 = vmatpush.bf16.msra.mxu0 %v2020
    %2697 = vmatpush.bf16.msra.mxu0 %v2019
    %2698 = vmatpush.bf16.msra.mxu0 %v2018
    %2699 = vmatpush.bf16.msra.mxu0 %v2017
    %2700 = vmatpush.bf16.msra.mxu0 %v2016
    %2701 = vmatpush.bf16.msra.mxu0 %v2015
    %2702 = vmatpush.bf16.msra.mxu0 %v2014
    %2703 = vmatmul.bf16.gmra.mxu0 %v639
    %v2704 = vpop.f32.mrf.mxu0
    %v2705 = vadd.f32 %v2692, %v2704
    %v2706 = vpop.f32.mrf.mxu0
    %2707 = vdwg.mxu0
    %2708 = vmatpush.bf16.msra.mxu0 %v2029
    %2709 = vmatpush.bf16.msra.mxu0 %v2028
    %2710 = vmatpush.bf16.msra.mxu0 %v2027
    %2711 = vmatpush.bf16.msra.mxu0 %v2026
    %2712 = vmatpush.bf16.msra.mxu0 %v2025
    %2713 = vmatpush.bf16.msra.mxu0 %v2024
    %2714 = vmatpush.bf16.msra.mxu0 %v2023
    %2715 = vmatpush.bf16.msra.mxu0 %v2022
    %2716 = vmatmul.bf16.gmra.mxu0 %v640
    %v2717 = vpop.f32.mrf.mxu0
    %v2718 = vadd.f32 %v2705, %v2717
    %v2719 = vpop.f32.mrf.mxu0
    %2720 = vdwg.mxu0
    %2721 = vmatpush.bf16.msra.mxu0 %v2037
    %2722 = vmatpush.bf16.msra.mxu0 %v2036
    %2723 = vmatpush.bf16.msra.mxu0 %v2035
    %2724 = vmatpush.bf16.msra.mxu0 %v2034
    %2725 = vmatpush.bf16.msra.mxu0 %v2033
    %2726 = vmatpush.bf16.msra.mxu0 %v2032
    %2727 = vmatpush.bf16.msra.mxu0 %v2031
    %2728 = vmatpush.bf16.msra.mxu0 %v2030
    %2729 = vmatmul.bf16.gmra.mxu0 %v641
    %v2730 = vpop.f32.mrf.mxu0
    %v2731 = vadd.f32 %v2718, %v2730
    %v2732 = vpop.f32.mrf.mxu0
    %2733 = vdwg.mxu0
    %2734 = vmatpush.bf16.msra.mxu0 %v2045
    %2735 = vmatpush.bf16.msra.mxu0 %v2044
    %2736 = vmatpush.bf16.msra.mxu0 %v2043
    %2737 = vmatpush.bf16.msra.mxu0 %v2042
    %2738 = vmatpush.bf16.msra.mxu0 %v2041
    %2739 = vmatpush.bf16.msra.mxu0 %v2040
    %2740 = vmatpush.bf16.msra.mxu0 %v2039
    %2741 = vmatpush.bf16.msra.mxu0 %v2038
    %2742 = vmatmul.bf16.gmra.mxu0 %v644
    %v2743 = vpop.f32.mrf.mxu0
    %v2744 = vadd.f32 %v2731, %v2743
    %v2745 = vpop.f32.mrf.mxu0
    %2746 = vdwg.mxu0
    %2747 = vmatpush.bf16.msra.mxu0 %v2053
    %2748 = vmatpush.bf16.msra.mxu0 %v2052
    %2749 = vmatpush.bf16.msra.mxu0 %v2051
    %2750 = vmatpush.bf16.msra.mxu0 %v2050
    %2751 = vmatpush.bf16.msra.mxu0 %v2049
    %2752 = vmatpush.bf16.msra.mxu0 %v2048
    %2753 = vmatpush.bf16.msra.mxu0 %v2047
    %2754 = vmatpush.bf16.msra.mxu0 %v2046
    %2755 = vmatmul.bf16.gmra.mxu0 %v645
    %v2756 = vpop.f32.mrf.mxu0
    %v2757 = vadd.f32 %v2744, %v2756
    %v2758 = vpop.f32.mrf.mxu0
    %2759 = vdwg.mxu0
    %2760 = vmatpush.bf16.msra.mxu0 %v2061
    %2761 = vmatpush.bf16.msra.mxu0 %v2060
    %2762 = vmatpush.bf16.msra.mxu0 %v2059
    %2763 = vmatpush.bf16.msra.mxu0 %v2058
    %2764 = vmatpush.bf16.msra.mxu0 %v2057
    %2765 = vmatpush.bf16.msra.mxu0 %v2056
    %2766 = vmatpush.bf16.msra.mxu0 %v2055
    %2767 = vmatpush.bf16.msra.mxu0 %v2054
    %2768 = vmatmul.bf16.gmra.mxu0 %v646
    %v2769 = vpop.f32.mrf.mxu0
    %v2770 = vadd.f32 %v2757, %v2769
    %v2771 = vpop.f32.mrf.mxu0
    %2772 = vdwg.mxu0
    %2773 = vmatpush.bf16.msra.mxu0 %v2069
    %2774 = vmatpush.bf16.msra.mxu0 %v2068
    %2775 = vmatpush.bf16.msra.mxu0 %v2067
    %2776 = vmatpush.bf16.msra.mxu0 %v2066
    %2777 = vmatpush.bf16.msra.mxu0 %v2065
    %2778 = vmatpush.bf16.msra.mxu0 %v2064
    %2779 = vmatpush.bf16.msra.mxu0 %v2063
    %2780 = vmatpush.bf16.msra.mxu0 %v2062
    %2781 = vmatmul.bf16.gmra.mxu0 %v647
    %v2782 = vpop.f32.mrf.mxu0
    %v2783 = vadd.f32 %v2770, %v2782
    %v2784 = vpop.f32.mrf.mxu0
    %2785 = vdwg.mxu0
    %2786 = vmatpush.bf16.msra.mxu0 %v2077
    %2787 = vmatpush.bf16.msra.mxu0 %v2076
    %2788 = vmatpush.bf16.msra.mxu0 %v2075
    %2789 = vmatpush.bf16.msra.mxu0 %v2074
    %2790 = vmatpush.bf16.msra.mxu0 %v2073
    %2791 = vmatpush.bf16.msra.mxu0 %v2072
    %2792 = vmatpush.bf16.msra.mxu0 %v2071
    %2793 = vmatpush.bf16.msra.mxu0 %v2070
    %2794 = vmatmul.bf16.gmra.mxu0 %v648
    %v2795 = vpop.f32.mrf.mxu0
    %v2796 = vadd.f32 %v2783, %v2795
    %v2797 = vpop.f32.mrf.mxu0
    %2798 = vdwg.mxu0
    %2799 = vmatpush.bf16.msra.mxu0 %v2085
    %2800 = vmatpush.bf16.msra.mxu0 %v2084
    %2801 = vmatpush.bf16.msra.mxu0 %v2083
    %2802 = vmatpush.bf16.msra.mxu0 %v2082
    %2803 = vmatpush.bf16.msra.mxu0 %v2081
    %2804 = vmatpush.bf16.msra.mxu0 %v2080
    %2805 = vmatpush.bf16.msra.mxu0 %v2079
    %2806 = vmatpush.bf16.msra.mxu0 %v2078
    %2807 = vmatmul.bf16.gmra.mxu0 %v649
    %v2808 = vpop.f32.mrf.mxu0
    %v2809 = vadd.f32 %v2796, %v2808
    %v2810 = vpop.f32.mrf.mxu0
    %2811 = vdwg.mxu0
    %2812 = vmatpush.bf16.msra.mxu0 %v2093
    %2813 = vmatpush.bf16.msra.mxu0 %v2092
    %2814 = vmatpush.bf16.msra.mxu0 %v2091
    %2815 = vmatpush.bf16.msra.mxu0 %v2090
    %2816 = vmatpush.bf16.msra.mxu0 %v2089
    %2817 = vmatpush.bf16.msra.mxu0 %v2088
    %2818 = vmatpush.bf16.msra.mxu0 %v2087
    %2819 = vmatpush.bf16.msra.mxu0 %v2086
    %2820 = vmatmul.bf16.gmra.mxu0 %v650
    %v2821 = vpop.f32.mrf.mxu0
    %v2822 = vadd.f32 %v2809, %v2821
    %v2823 = vpop.f32.mrf.mxu0
    %2824 = vdwg.mxu0
    %2825 = vmatpush.bf16.msra.mxu0 %v2101
    %2826 = vmatpush.bf16.msra.mxu0 %v2100
    %2827 = vmatpush.bf16.msra.mxu0 %v2099
    %2828 = vmatpush.bf16.msra.mxu0 %v2098
    %2829 = vmatpush.bf16.msra.mxu0 %v2097
    %2830 = vmatpush.bf16.msra.mxu0 %v2096
    %2831 = vmatpush.bf16.msra.mxu0 %v2095
    %2832 = vmatpush.bf16.msra.mxu0 %v2094
    %2833 = vmatmul.bf16.gmra.mxu0 %v651
    %v2834 = vpop.f32.mrf.mxu0
    %v2835 = vadd.f32 %v2822, %v2834
    %v2836 = vpop.f32.mrf.mxu0
    %2837 = vdwg.mxu0
    %2838 = vmatpush.bf16.msra.mxu0 %v2109
    %2839 = vmatpush.bf16.msra.mxu0 %v2108
    %2840 = vmatpush.bf16.msra.mxu0 %v2107
    %2841 = vmatpush.bf16.msra.mxu0 %v2106
    %2842 = vmatpush.bf16.msra.mxu0 %v2105
    %2843 = vmatpush.bf16.msra.mxu0 %v2104
    %2844 = vmatpush.bf16.msra.mxu0 %v2103
    %2845 = vmatpush.bf16.msra.mxu0 %v2102
    %2846 = vmatmul.bf16.gmra.mxu0 %v654
    %v2847 = vpop.f32.mrf.mxu0
    %v2848 = vadd.f32 %v2835, %v2847
    %v2849 = vpop.f32.mrf.mxu0
    %2850 = vdwg.mxu0
    %2851 = vmatpush.bf16.msra.mxu0 %v2117
    %2852 = vmatpush.bf16.msra.mxu0 %v2116
    %2853 = vmatpush.bf16.msra.mxu0 %v2115
    %2854 = vmatpush.bf16.msra.mxu0 %v2114
    %2855 = vmatpush.bf16.msra.mxu0 %v2113
    %2856 = vmatpush.bf16.msra.mxu0 %v2112
    %2857 = vmatpush.bf16.msra.mxu0 %v2111
    %2858 = vmatpush.bf16.msra.mxu0 %v2110
    %2859 = vmatmul.bf16.gmra.mxu0 %v655
    %v2860 = vpop.f32.mrf.mxu0
    %v2861 = vadd.f32 %v2848, %v2860
    %v2862 = vpop.f32.mrf.mxu0
    %2863 = vdwg.mxu0
    %2864 = vmatpush.bf16.msra.mxu0 %v2125
    %2865 = vmatpush.bf16.msra.mxu0 %v2124
    %2866 = vmatpush.bf16.msra.mxu0 %v2123
    %2867 = vmatpush.bf16.msra.mxu0 %v2122
    %2868 = vmatpush.bf16.msra.mxu0 %v2121
    %2869 = vmatpush.bf16.msra.mxu0 %v2120
    %2870 = vmatpush.bf16.msra.mxu0 %v2119
    %2871 = vmatpush.bf16.msra.mxu0 %v2118
    %2872 = vmatmul.bf16.gmra.mxu0 %v656
    %v2873 = vpop.f32.mrf.mxu0
    %v2874 = vadd.f32 %v2861, %v2873
    %v2875 = vpop.f32.mrf.mxu0
    %2876 = vdwg.mxu0
    %2877 = vmatpush.bf16.msra.mxu0 %v2133
    %2878 = vmatpush.bf16.msra.mxu0 %v2132
    %2879 = vmatpush.bf16.msra.mxu0 %v2131
    %2880 = vmatpush.bf16.msra.mxu0 %v2130
    %2881 = vmatpush.bf16.msra.mxu0 %v2129
    %2882 = vmatpush.bf16.msra.mxu0 %v2128
    %2883 = vmatpush.bf16.msra.mxu0 %v2127
    %2884 = vmatpush.bf16.msra.mxu0 %v2126
    %2885 = vmatmul.bf16.gmra.mxu0 %v657
    %v2886 = vpop.f32.mrf.mxu0
    %v2887 = vadd.f32 %v2874, %v2886
    %v2888 = vpop.f32.mrf.mxu0
    %2889 = vdwg.mxu0
    %v2890 = vmax.f32 %v2887, 0.0
    %v2891 = vpack.c.bf16 %v2890, %v2890
    %v2892 = vld [vmem:[%s3] sm:$0xf]
    %v2893 = vld [vmem:[%s3 + $0x4] sm:$0xf]
    %v2894 = vld [vmem:[%s3 + $0x8] sm:$0xf]
    %v2895 = vld [vmem:[%s3 + $0xc] sm:$0xf]
    %v2896 = vld [vmem:[%s3 + $0x10] sm:$0xf]
    %v2897 = vld [vmem:[%s3 + $0x14] sm:$0xf]
    %v2898 = vld [vmem:[%s3 + $0x18] sm:$0xf]
    %v2899 = vld [vmem:[%s3 + $0x1c] sm:$0xf]
    %v2900 = vld [vmem:[%s3 + $0x20] sm:$0xf]
    %v2901 = vld [vmem:[%s3 + $0x24] sm:$0xf]
    %v2902 = vld [vmem:[%s3 + $0x28] sm:$0xf]
    %v2903 = vld [vmem:[%s3 + $0x2c] sm:$0xf]
    %v2904 = vld [vmem:[%s3 + $0x30] sm:$0xf]
    %v2905 = vld [vmem:[%s3 + $0x34] sm:$0xf]
    %v2906 = vld [vmem:[%s3 + $0x38] sm:$0xf]
    %v2907 = vld [vmem:[%s3 + $0x3c] sm:$0xf]
    %v2908 = vld [vmem:[%s4] sm:$0x1]
    %v2910 = vperm.slane %v2908, 0
    %v2928 = vunpack.c.l.b16 %v2892
    %v2929 = vunpack.c.l.b16 %v2893
    %v2930 = vunpack.c.l.b16 %v2894
    %v2931 = vunpack.c.l.b16 %v2895
    %v2932 = vunpack.c.l.b16 %v2896
    %v2933 = vunpack.c.l.b16 %v2897
    %v2934 = vunpack.c.l.b16 %v2898
    %v2935 = vunpack.c.l.b16 %v2899
    %v2936 = vunpack.c.l.b16 %v2900
    %v2937 = vunpack.c.l.b16 %v2901
    %v2938 = vunpack.c.l.b16 %v2902
    %v2939 = vunpack.c.l.b16 %v2903
    %v2940 = vunpack.c.l.b16 %v2904
    %v2941 = vunpack.c.l.b16 %v2905
    %v2942 = vunpack.c.l.b16 %v2906
    %v2943 = vunpack.c.l.b16 %v2907
    %v2944 = vpack.c.b16 %v2929, %v2928
    %v2945 = vpack.c.b16 %v2931, %v2930
    %v2946 = vpack.c.b16 %v2933, %v2932
    %v2947 = vpack.c.b16 %v2935, %v2934
    %v2948 = vpack.c.b16 %v2937, %v2936
    %v2949 = vpack.c.b16 %v2939, %v2938
    %v2950 = vpack.c.b16 %v2941, %v2940
    %v2951 = vpack.c.b16 %v2943, %v2942
    %2960 = vmatpush.bf16.msra.mxu0 %v2951
    %2961 = vmatpush.bf16.msra.mxu0 %v2950
    %2962 = vmatpush.bf16.msra.mxu0 %v2949
    %2963 = vmatpush.bf16.msra.mxu0 %v2948
    %2964 = vmatpush.bf16.msra.mxu0 %v2947
    %2965 = vmatpush.bf16.msra.mxu0 %v2946
    %2966 = vmatpush.bf16.msra.mxu0 %v2945
    %2967 = vmatpush.bf16.msra.mxu0 %v2944
    %2968 = vmatmul.bf16.gmra.mxu0 %v2891
    %v2969 = vpop.f32.mrf.mxu0
    %v2970 = vadd.f32 %v2910, %v2969
    %v2971 = vpop.f32.mrf.mxu0
    %2972 = vdwg.mxu0
    %v2973 = vmax.f32 %v2970, 0.0
    %v2974 = vpack.c.bf16 %v2973, %v2973
    %v2975 = vld [vmem:[%s5] sm:$0xf]
    %v2976 = vld [vmem:[%s5 + $0x4] sm:$0xf]
    %v2977 = vld [vmem:[%s5 + $0x8] sm:$0xf]
    %v2978 = vld [vmem:[%s5 + $0xc] sm:$0xf]
    %v2979 = vld [vmem:[%s5 + $0x10] sm:$0xf]
    %v2980 = vld [vmem:[%s5 + $0x14] sm:$0xf]
    %v2981 = vld [vmem:[%s5 + $0x18] sm:$0xf]
    %v2982 = vld [vmem:[%s5 + $0x1c] sm:$0xf]
    %v2983 = vld [vmem:[%s5 + $0x20] sm:$0xf]
    %v2984 = vld [vmem:[%s5 + $0x24] sm:$0xf]
    %v2985 = vld [vmem:[%s5 + $0x28] sm:$0xf]
    %v2986 = vld [vmem:[%s5 + $0x2c] sm:$0xf]
    %v2987 = vld [vmem:[%s5 + $0x30] sm:$0xf]
    %v2988 = vld [vmem:[%s5 + $0x34] sm:$0xf]
    %v2989 = vld [vmem:[%s5 + $0x38] sm:$0xf]
    %v2990 = vld [vmem:[%s5 + $0x3c] sm:$0xf]
    %v2991 = vld [vmem:[%s6] sm:$0x1]
    %v2993 = vperm.slane %v2991, 0
    %v3011 = vunpack.c.l.b16 %v2975
    %v3012 = vunpack.c.l.b16 %v2976
    %v3013 = vunpack.c.l.b16 %v2977
    %v3014 = vunpack.c.l.b16 %v2978
    %v3015 = vunpack.c.l.b16 %v2979
    %v3016 = vunpack.c.l.b16 %v2980
    %v3017 = vunpack.c.l.b16 %v2981
    %v3018 = vunpack.c.l.b16 %v2982
    %v3019 = vunpack.c.l.b16 %v2983
    %v3020 = vunpack.c.l.b16 %v2984
    %v3021 = vunpack.c.l.b16 %v2985
    %v3022 = vunpack.c.l.b16 %v2986
    %v3023 = vunpack.c.l.b16 %v2987
    %v3024 = vunpack.c.l.b16 %v2988
    %v3025 = vunpack.c.l.b16 %v2989
    %v3026 = vunpack.c.l.b16 %v2990
    %v3027 = vpack.c.b16 %v3012, %v3011
    %v3028 = vpack.c.b16 %v3014, %v3013
    %v3029 = vpack.c.b16 %v3016, %v3015
    %v3030 = vpack.c.b16 %v3018, %v3017
    %v3031 = vpack.c.b16 %v3020, %v3019
    %v3032 = vpack.c.b16 %v3022, %v3021
    %v3033 = vpack.c.b16 %v3024, %v3023
    %v3034 = vpack.c.b16 %v3026, %v3025
    %3043 = vmatpush.bf16.msra.mxu0 %v3034
    %3044 = vmatpush.bf16.msra.mxu0 %v3033
    %3045 = vmatpush.bf16.msra.mxu0 %v3032
    %3046 = vmatpush.bf16.msra.mxu0 %v3031
    %3047 = vmatpush.bf16.msra.mxu0 %v3030
    %3048 = vmatpush.bf16.msra.mxu0 %v3029
    %3049 = vmatpush.bf16.msra.mxu0 %v3028
    %3050 = vmatpush.bf16.msra.mxu0 %v3027
    %3051 = vmatmul.bf16.gmra.mxu0 %v2974
    %v3052 = vpop.f32.mrf.mxu0
    %v3053 = vadd.f32 %v2993, %v3052
    %v3054 = vpop.f32.mrf.mxu0
    %3055 = vdwg.mxu0
    %3056 = vst [vmem:[#allocation2] sm:$0x3] %v3053
    // Predicated region
    $region30: #{net_forward.5} parent=1 // pred_check
      _
    $region31: #{net_forward.5} parent=1 // pred_check_branch
      %3058 = sbr.rel (0) target = $region33
    $region32: #{net_forward.5} parent=1 // pred_region
      %3060 = vsyncadd [#allocation3], 0
      %s3062 = sshll.u32 [#allocation2], 4
      %s3063 = int_to_ptr.vmem [resolvable:$true] %s3062
      %s3064 = sshll.u32 %s7, 4
      %s3065 = int_to_ptr.hbm [resolvable:$true] %s3064
      %3067 = dma.vmem_to_hbm [thread:$0]  %s3063, 32, %s3065, [#allocation3]
    $region33: #{net_forward.5} parent=1 // pred_fallthru
      _
    // Predicated region
    $region34: #{net_forward.5} parent=1 // pred_check
      _
    $region35: #{net_forward.5} parent=1 // pred_check_branch
      %3069 = sbr.rel (0) target = $region37
    $region36: #{net_forward.5} parent=1 // pred_region
      %3071 = dma.done [#allocation3], 32
    $region37: #{net_forward.5} parent=1 // pred_fallthru
      _
    %3072 = vsyncpa [#allocation3], 1

</llo_original>
